<compile_context>
chip_gen: v7x
topology: tpu7x:2x2x1
jax: 0.10.0
libtpu: 0.0.40
codegen_flags: <defaults>
</compile_context>

<pallas_src>
import math
from functools import partial

import jax
import jax.numpy as jnp
from jax.experimental import pallas as pl
from jax.experimental.pallas import tpu as pltpu

F32 = jnp.float32
BF16 = jnp.bfloat16
BN_EPS = 1e-5
C = 128                                   # model width (fixed by the module)
VMEM_LIMIT = 16 * 1024 * 1024             # ~1.1 MiB of resident weights; ample headroom

# MultiStepEIFNode defaults (nn.Parameters at their __init__ values)
EIF_THRESHOLD = 1.0
EIF_REST = 0.0
EIF_TAU = 1.0
EIF_DELTA_T = 1.0
EIF_THETA_RH = 0.8


def _eif_spike(z):
    # Torch: mem = 1/tau * (x - (0 - rest) + delta_T*exp((0 - theta_rh)/delta_T));
    #        spike = (mem >= threshold).float()
    const = EIF_REST + EIF_DELTA_T * math.exp(-EIF_THETA_RH / EIF_DELTA_T)
    mem = (z + const) * (1.0 / EIF_TAU)
    return (mem >= EIF_THRESHOLD).astype(jnp.float32)


# ---------------------------------------------------------------------------
# The fused TCSN kernel (grid = batch groups, everything else in VMEM)
# ---------------------------------------------------------------------------
def _make_tcsn_kernel(bt, l2):
    L = l2

    def kernel(ext_ref, w1_ref, w2_ref, sh2_ref, ws1_ref, ss1_ref,
               ws2_ref, ss2_ref, caw1_ref, cab1_ref, caw2_ref, cab2_ref,
               saw_ref, fcw_ref, fcb_ref, gates_ref, o_ref):
        cg = gates_ref[0:1, 0:1]                      # channel_gate
        sg = gates_ref[0:1, 1:2]                      # spatial_gate
        sab = gates_ref[0:1, 2:3]                     # spatial-attention conv bias

        # ---- conv1 + BN1 + ReLU -------------------------------------------
        # Block-diagonal weight over the 4 stride phases + bias-indicator tap
        # => one f32 MXU dot per batch whose output IS the stride-4-folded
        # conv2 operand layout, with exact zeros in the halo/pad rows.
        w1 = w1_ref[...]
        h1s = []
        for b in range(bt):
            z1 = jnp.dot(ext_ref[b], w1, preferred_element_type=jnp.float32)
            h1s.append(jnp.maximum(z1, 0.0).astype(BF16))        # (Rp, 512)

        # ---- conv2 + BN2 + ReLU -------------------------------------------
        # 16 taps folded into a single 2048-deep contraction; batch packed
        # into the MXU M dimension.
        c2 = jnp.concatenate(
            [jnp.concatenate([h1[t:t + L] for t in range(4)], axis=1)
             for h1 in h1s], axis=0)                              # (bt*L, 2048)
        h2 = jnp.maximum(
            jnp.dot(c2, w2_ref[...], preferred_element_type=jnp.float32)
            + sh2_ref[...], 0.0)                                  # (bt*L, 128) = residual

        # ---- ConvSAB 3-tap conv + BN + EIF (x2) ---------------------------
        def tap3(src_f32, w_ref, s_ref):
            zrow = jnp.zeros((1, C), BF16)
            xb = src_f32.astype(BF16)
            rows = []
            for b in range(bt):
                blk = xb[b * L:(b + 1) * L]
                padded = jnp.concatenate([zrow, blk, zrow], axis=0)   # (L+2, 128)
                rows.append(jnp.concatenate(
                    [padded[t:t + L] for t in range(3)], axis=1))     # (L, 384)
            cin = jnp.concatenate(rows, axis=0)                       # (bt*L, 384)
            return jnp.dot(cin, w_ref[...],
                           preferred_element_type=jnp.float32) + s_ref[...]

        spk1 = _eif_spike(tap3(h2, ws1_ref, ss1_ref))                 # (bt*L, 128)
        out = _eif_spike(tap3(spk1, ws2_ref, ss2_ref))                # (bt*L, 128)

        # ---- channel attention (avgpool -> 1x1 conv -> ReLU -> 1x1 -> sigmoid)
        pooled = jnp.concatenate(
            [jnp.mean(out[b * L:(b + 1) * L], axis=0, keepdims=True)
             for b in range(bt)], axis=0)                             # (bt, 128)
        hca = jnp.maximum(
            jnp.dot(pooled, caw1_ref[...], preferred_element_type=jnp.float32)
            + cab1_ref[...], 0.0)
        ch = jax.nn.sigmoid(
            jnp.dot(hca, caw2_ref[...], preferred_element_type=jnp.float32)
            + cab2_ref[...])                                          # (bt, 128)

        # ---- spatial attention: 7-tap C->1 conv on the VPU.  Accumulate the
        # weighted sum in (L, C) and do ONE cross-lane reduce at the end.
        saw = saw_ref[...]
        zrow3 = jnp.zeros((3, C), jnp.float32)
        sp_rows = []
        for b in range(bt):
            padded = jnp.concatenate(
                [zrow3, out[b * L:(b + 1) * L], zrow3], axis=0)       # (L+6, 128)
            acc = padded[0:L] * saw[0:1, :]
            for k in range(1, 7):
                acc = acc + padded[k:k + L] * saw[k:k + 1, :]
            sp_rows.append(jnp.sum(acc, axis=1, keepdims=True))       # (L, 1)
        sp = jax.nn.sigmoid(jnp.concatenate(sp_rows, axis=0) + sab)   # (bt*L, 1)

        # ---- gated combine + identity residual + AdaptiveAvgPool1d(1) ------
        pooled2 = jnp.concatenate(
            [jnp.mean(out[b * L:(b + 1) * L] * ch[b:b + 1, :] * cg
                      + out[b * L:(b + 1) * L] * sp[b * L:(b + 1) * L] * sg
                      + h2[b * L:(b + 1) * L], axis=0, keepdims=True)
             for b in range(bt)], axis=0)                             # (bt, 128)

        # ---- (eval-mode dropout = identity) + fc, batch packed into M ------
        o_ref[0] = (jnp.dot(pooled2, fcw_ref[...],
                            preferred_element_type=jnp.float32) + fcb_ref[...])

    return kernel


# ---------------------------------------------------------------------------
# One-time parameter folding / stacking / casting (review: do NOT redo per call)
# ---------------------------------------------------------------------------
def fold_bn(bn, conv_bias):
    gamma, beta, mean, var = bn
    scale = gamma / jnp.sqrt(var + BN_EPS)
    shift = beta + (conv_bias - mean) * scale
    return scale, shift


def prepare_params(p, num_classes):
    assert num_classes <= C
    pp = {}

    # conv1 (1->128, k=16, s=4, p=6) + bn1: block-diagonal over the 4 stride
    # phases, BN shift folded in as a "bias tap" keyed off an indicator column.
    sc1, sh1 = fold_bn(p['bn1'], p['c1_b'])
    w1f = jnp.transpose(p['c1_w'], (2, 1, 0)).reshape(16, C) * sc1[None, :]
    w1aug = jnp.concatenate(
        [w1f, sh1.reshape(1, C), jnp.zeros((15, C), F32)], axis=0)     # (32, 128)
    w1bd = jnp.zeros((C, 4 * C), F32)
    for ph in range(4):
        w1bd = w1bd.at[ph * 32:(ph + 1) * 32, ph * C:(ph + 1) * C].set(w1aug)
    pp['w1bd'] = w1bd                                                  # f32 (signal precision)

    # conv2 (128->128, k=16, s=4, p=6) + bn2: 16 taps folded into contraction
    sc2, sh2 = fold_bn(p['bn2'], p['c2_b'])
    pp['w2s'] = (jnp.transpose(p['c2_w'], (2, 1, 0)).reshape(16 * C, C)
                 * sc2[None, :]).astype(BF16)                          # (2048, 128)
    pp['sh2'] = sh2.reshape(1, C).astype(F32)

    # ConvSAB 3-tap convs + BN
    ssc1, ssh1 = fold_bn(p['s_bn1'], p['s_b1'])
    pp['ws1'] = (jnp.transpose(p['s_w1'], (2, 1, 0)).reshape(3 * C, C)
                 * ssc1[None, :]).astype(BF16)
    pp['ss1'] = ssh1.reshape(1, C).astype(F32)
    ssc2, ssh2 = fold_bn(p['s_bn2'], p['s_b2'])
    pp['ws2'] = (jnp.transpose(p['s_w2'], (2, 1, 0)).reshape(3 * C, C)
                 * ssc2[None, :]).astype(BF16)
    pp['ss2'] = ssh2.reshape(1, C).astype(F32)

    # channel attention (1x1 convs), zero-padded to lane-friendly 128 widths
    cr = p['ca_w1'].shape[0]
    pp['caw1'] = jnp.pad(p['ca_w1'].reshape(cr, C).T,
                         ((0, 0), (0, C - cr))).astype(F32)            # (128, 128)
    pp['cab1'] = jnp.pad(p['ca_b1'].reshape(1, cr),
                         ((0, 0), (0, C - cr))).astype(F32)
    pp['caw2'] = jnp.pad(p['ca_w2'].reshape(C, cr).T,
                         ((0, C - cr), (0, 0))).astype(F32)            # (128, 128)
    pp['cab2'] = p['ca_b2'].reshape(1, C).astype(F32)

    # spatial attention (7-tap C->1), padded to 8 sublanes
    saw = jnp.transpose(p['sa_w'], (2, 1, 0)).reshape(7, C)
    pp['saw'] = jnp.pad(saw, ((0, 1), (0, 0))).astype(F32)             # (8, 128)

    # fc, output lanes padded to 128 (sliced back in the wrapper)
    nc = num_classes
    pp['fcw'] = jnp.pad(p['fc_w'].T, ((0, 0), (0, C - nc))).astype(F32)
    pp['fcb'] = jnp.pad(p['fc_b'].reshape(1, nc), ((0, 0), (0, C - nc))).astype(F32)

    # scalars: [channel_gate, spatial_gate, spatial-attention bias, 0...]
    pp['gates'] = jnp.concatenate(
        [p['channel_gate'].reshape(1), p['spatial_gate'].reshape(1),
         p['sa_b'].reshape(1), jnp.zeros((C - 3,), F32)]).reshape(1, C).astype(F32)
    return pp


# ---------------------------------------------------------------------------
# Forward: tiny wrapper-side im2col of the scalar signal + one pallas_call
# ---------------------------------------------------------------------------
def tcsn_forward(x, pp, num_classes):
    b_in, l0 = x.shape
    l1 = (l0 + 2 * 6 - 16) // 4 + 1
    l2 = (l1 + 2 * 6 - 16) // 4 + 1
    r = l2 + 3                               # stride-4-folded conv2-input rows
    rp = ((r + 7) // 8) * 8                  # sublane-aligned row count

    # conv1 im2col (16x duplication of a scalar stream -> trivially cheap),
    # directly in the phase layout, with a validity-indicator column.
    pad_r = max(0, 4 * l1 + 6 - l0)
    xp = jnp.pad(x.astype(F32), ((0, 0), (6, pad_r)))
    idx = 4 * jnp.arange(l1)[:, None] + jnp.arange(16)[None, :]
    patches = xp[:, idx]                                              # (B, L1, 16)
    aug = jnp.concatenate(
        [patches, jnp.ones((b_in, l1, 1), F32), jnp.zeros((b_in, l1, 15), F32)],
        axis=2)                                                       # (B, L1, 32)
    ext = jnp.pad(aug, ((0, 0), (6, 4 * rp - 6 - l1), (0, 0)))        # (B, 4*Rp, 32)
    ext = ext.reshape(b_in, rp, 4 * 32)                               # (B, Rp, 128)

    # Batch grouping: pack batch into the MXU M dimension but keep >=2
    # "parallel" grid steps so both v7x TensorCores get work.
    bt = max(1, min(128 // max(l2, 1), (b_in + 1) // 2, 16))
    n_groups = (b_in + bt - 1) // bt
    b_pad = n_groups * bt
    if b_pad > b_in:
        ext = jnp.pad(ext, ((0, b_pad - b_in), (0, 0), (0, 0)))

    def full(shape):
        return pl.BlockSpec(shape, lambda g: (0,) * len(shape))

    logits = pl.pallas_call(
        _make_tcsn_kernel(bt, l2),
        grid=(n_groups,),
        in_specs=[
            pl.BlockSpec((bt, rp, 128), lambda g: (g, 0, 0)),   # ext patches
            full((C, 4 * C)),                                   # w1bd
            full((16 * C, C)),                                  # w2s
            full((1, C)),                                       # sh2
            full((3 * C, C)),                                   # ws1
            full((1, C)),                                       # ss1
            full((3 * C, C)),                                   # ws2
            full((1, C)),                                       # ss2
            full((C, C)),                                       # caw1
            full((1, C)),                                       # cab1
            full((C, C)),                                       # caw2
            full((1, C)),                                       # cab2
            full((8, C)),                                       # saw
            full((C, C)),                                       # fcw (padded)
            full((1, C)),                                       # fcb (padded)
            full((1, C)),                                       # gates
        ],
        out_specs=pl.BlockSpec((1, bt, C), lambda g: (g, 0, 0)),
        out_shape=jax.ShapeDtypeStruct((n_groups, bt, C), F32),
        compiler_params=pltpu.CompilerParams(
            dimension_semantics=("parallel",),
            vmem_limit_bytes=VMEM_LIMIT),
    )(ext, pp['w1bd'], pp['w2s'], pp['sh2'], pp['ws1'], pp['ss1'],
      pp['ws2'], pp['ss2'], pp['caw1'], pp['cab1'], pp['caw2'], pp['cab2'],
      pp['saw'], pp['fcw'], pp['fcb'], pp['gates'])

    return logits.reshape(b_pad, C)[:b_in, :num_classes]


# ---------------------------------------------------------------------------
# Deterministic parameter init (shapes from the PyTorch __init__)
# ---------------------------------------------------------------------------
def bn_default(c):
    return (jnp.ones((c,), F32), jnp.zeros((c,), F32),
            jnp.zeros((c,), F32), jnp.ones((c,), F32))


def init_params(key, num_classes=14):
    ks = jax.random.split(key, 8)

    def kaiming(k, shape):
        fan_out = shape[0] * shape[2]
        return math.sqrt(2.0 / fan_out) * jax.random.normal(k, shape, dtype=F32)

    p = {}
    p['c1_w'] = kaiming(ks[0], (128, 1, 16));   p['c1_b'] = jnp.zeros((128,), F32)
    p['bn1'] = bn_default(128)
    p['c2_w'] = kaiming(ks[1], (128, 128, 16)); p['c2_b'] = jnp.zeros((128,), F32)
    p['bn2'] = bn_default(128)

    p['s_w1'] = kaiming(ks[2], (128, 128, 3));  p['s_b1'] = jnp.zeros((128,), F32)
    p['s_bn1'] = bn_default(128)
    p['s_w2'] = kaiming(ks[3], (128, 128, 3));  p['s_b2'] = jnp.zeros((128,), F32)
    p['s_bn2'] = bn_default(128)

    p['ca_w1'] = kaiming(ks[4], (8, 128, 1));   p['ca_b1'] = jnp.zeros((8,), F32)
    p['ca_w2'] = kaiming(ks[5], (128, 8, 1));   p['ca_b2'] = jnp.zeros((128,), F32)
    p['sa_w'] = kaiming(ks[6], (1, 128, 7));    p['sa_b'] = jnp.zeros((1,), F32)

    # __init__ uses torch.zeros(1) for both gates; nonzero deterministic values
    # are used here so the fused attention path is actually exercised.
    p['channel_gate'] = jnp.full((1,), 0.5, F32)
    p['spatial_gate'] = jnp.full((1,), 0.25, F32)

    p['fc_w'] = 0.05 * jax.random.normal(ks[7], (num_classes, 128), dtype=F32)
    p['fc_b'] = jnp.zeros((num_classes,), F32)
    return p


if __name__ == "__main__":
    num_classes = 14
    input_size = 128                                        # small stand-in for 300
    key = jax.random.PRNGKey(0)
    pkey, xkey = jax.random.split(key)

    raw_params = init_params(pkey, num_classes)
    prepared = prepare_params(raw_params, num_classes)      # one-time fold/stack/cast
    x = jax.random.normal(xkey, (2, input_size), dtype=F32)  # (batch, signal_len)

    fwd = jax.jit(partial(tcsn_forward, num_classes=num_classes))
    logits = fwd(x, prepared)
    jax.block_until_ready(logits)
    assert logits.shape == (2, num_classes)
    assert bool(jnp.all(jnp.isfinite(logits)))
    print("KERNEL_OK")
</pallas_src>

<mosaic_0001>
module attributes {stable_mosaic.version = 11 : i64} {
  func.func @kernel(%arg0: i32, %arg1: memref<1x16x128xf32, #tpu.memory_space<vmem>>, %arg2: memref<128x512xf32, #tpu.memory_space<vmem>>, %arg3: memref<2048x128xbf16, #tpu.memory_space<vmem>>, %arg4: memref<1x128xf32, #tpu.memory_space<vmem>>, %arg5: memref<384x128xbf16, #tpu.memory_space<vmem>>, %arg6: memref<1x128xf32, #tpu.memory_space<vmem>>, %arg7: memref<384x128xbf16, #tpu.memory_space<vmem>>, %arg8: memref<1x128xf32, #tpu.memory_space<vmem>>, %arg9: memref<128x128xf32, #tpu.memory_space<vmem>>, %arg10: memref<1x128xf32, #tpu.memory_space<vmem>>, %arg11: memref<128x128xf32, #tpu.memory_space<vmem>>, %arg12: memref<1x128xf32, #tpu.memory_space<vmem>>, %arg13: memref<8x128xf32, #tpu.memory_space<vmem>>, %arg14: memref<128x128xf32, #tpu.memory_space<vmem>>, %arg15: memref<1x128xf32, #tpu.memory_space<vmem>>, %arg16: memref<1x128xf32, #tpu.memory_space<vmem>>, %arg17: memref<1x1x128xf32, #tpu.memory_space<vmem>>) attributes {dimension_semantics = [#tpu.dimension_semantics<parallel>], iteration_bounds = array<i64: 2>, scalar_prefetch = 0 : i64, scratch_operands = 0 : i64, tpu.core_type = #tpu.core_type<tc>, window_params = [{transform_indices = @transform_0, window_bounds = array<i64: 1, 16, 128>}, {pipeline_mode = #tpu.pipeline_mode<synchronous>, transform_indices = @transform_1, window_bounds = array<i64: 128, 512>}, {pipeline_mode = #tpu.pipeline_mode<synchronous>, transform_indices = @transform_2, window_bounds = array<i64: 2048, 128>}, {pipeline_mode = #tpu.pipeline_mode<synchronous>, transform_indices = @transform_3, window_bounds = array<i64: 1, 128>}, {pipeline_mode = #tpu.pipeline_mode<synchronous>, transform_indices = @transform_4, window_bounds = array<i64: 384, 128>}, {pipeline_mode = #tpu.pipeline_mode<synchronous>, transform_indices = @transform_5, window_bounds = array<i64: 1, 128>}, {pipeline_mode = #tpu.pipeline_mode<synchronous>, transform_indices = @transform_6, window_bounds = array<i64: 384, 128>}, {pipeline_mode = #tpu.pipeline_mode<synchronous>, transform_indices = @transform_7, window_bounds = array<i64: 1, 128>}, {pipeline_mode = #tpu.pipeline_mode<synchronous>, transform_indices = @transform_8, window_bounds = array<i64: 128, 128>}, {pipeline_mode = #tpu.pipeline_mode<synchronous>, transform_indices = @transform_9, window_bounds = array<i64: 1, 128>}, {pipeline_mode = #tpu.pipeline_mode<synchronous>, transform_indices = @transform_10, window_bounds = array<i64: 128, 128>}, {pipeline_mode = #tpu.pipeline_mode<synchronous>, transform_indices = @transform_11, window_bounds = array<i64: 1, 128>}, {pipeline_mode = #tpu.pipeline_mode<synchronous>, transform_indices = @transform_12, window_bounds = array<i64: 8, 128>}, {pipeline_mode = #tpu.pipeline_mode<synchronous>, transform_indices = @transform_13, window_bounds = array<i64: 128, 128>}, {pipeline_mode = #tpu.pipeline_mode<synchronous>, transform_indices = @transform_14, window_bounds = array<i64: 1, 128>}, {pipeline_mode = #tpu.pipeline_mode<synchronous>, transform_indices = @transform_15, window_bounds = array<i64: 1, 128>}, {transform_indices = @transform_16, window_bounds = array<i64: 1, 1, 128>}]} {
    %c0 = arith.constant 0 : index
    %c0_0 = arith.constant 0 : index
    %0 = vector.load %arg16[%c0, %c0_0] : memref<1x128xf32, #tpu.memory_space<vmem>>, vector<1x1xf32>
    %c0_1 = arith.constant 0 : index
    %c1 = arith.constant 1 : index
    %1 = vector.load %arg16[%c0_1, %c1] : memref<1x128xf32, #tpu.memory_space<vmem>>, vector<1x1xf32>
    %c0_2 = arith.constant 0 : index
    %c2 = arith.constant 2 : index
    %2 = vector.load %arg16[%c0_2, %c2] : memref<1x128xf32, #tpu.memory_space<vmem>>, vector<1x1xf32>
    %c0_3 = arith.constant 0 : index
    %c0_4 = arith.constant 0 : index
    %3 = vector.load %arg2[%c0_3, %c0_4] : memref<128x512xf32, #tpu.memory_space<vmem>>, vector<128x512xf32>
    %c0_5 = arith.constant 0 : index
    %c0_6 = arith.constant 0 : index
    %c0_7 = arith.constant 0 : index
    %4 = vector.load %arg1[%c0_5, %c0_6, %c0_7] : memref<1x16x128xf32, #tpu.memory_space<vmem>>, vector<1x16x128xf32>
    %5 = vector.shape_cast %4 : vector<1x16x128xf32> to vector<16x128xf32>
    %cst = arith.constant dense<0.000000e+00> : vector<16x512xf32>
    %6 = tpu.matmul %5, %3, %cst {dimension_numbers = #tpu.dot_dimension_numbers<[1], [0], [0], [1], [0, 0, 1, 1], [], []>} : vector<16x128xf32>, vector<128x512xf32>, vector<16x512xf32> -> vector<16x512xf32>
    %cst_8 = arith.constant 0.000000e+00 : f32
    %7 = vector.broadcast %cst_8 : f32 to vector<16x512xf32>
    %8 = arith.maximumf %6, %7 : vector<16x512xf32>
    %9 = arith.truncf %8 : vector<16x512xf32> to vector<16x512xbf16>
    %10 = vector.extract_strided_slice %9 {offsets = [0, 0], sizes = [8, 512], strides = [1, 1]} : vector<16x512xbf16> to vector<8x512xbf16>
    %11 = vector.extract_strided_slice %9 {offsets = [1, 0], sizes = [8, 512], strides = [1, 1]} : vector<16x512xbf16> to vector<8x512xbf16>
    %12 = vector.extract_strided_slice %9 {offsets = [2, 0], sizes = [8, 512], strides = [1, 1]} : vector<16x512xbf16> to vector<8x512xbf16>
    %13 = vector.extract_strided_slice %9 {offsets = [3, 0], sizes = [8, 512], strides = [1, 1]} : vector<16x512xbf16> to vector<8x512xbf16>
    %14 = tpu.concatenate %10, %11, %12, %13 in 1 : vector<8x512xbf16>, vector<8x512xbf16>, vector<8x512xbf16>, vector<8x512xbf16> -> vector<8x2048xbf16>
    %c0_9 = arith.constant 0 : index
    %c0_10 = arith.constant 0 : index
    %15 = vector.load %arg3[%c0_9, %c0_10] : memref<2048x128xbf16, #tpu.memory_space<vmem>>, vector<2048x128xbf16>
    %cst_11 = arith.constant dense<0.000000e+00> : vector<8x128xf32>
    %16 = tpu.matmul %14, %15, %cst_11 {dimension_numbers = #tpu.dot_dimension_numbers<[1], [0], [0], [1], [0, 0, 1, 1], [], []>} : vector<8x2048xbf16>, vector<2048x128xbf16>, vector<8x128xf32> -> vector<8x128xf32>
    %c0_12 = arith.constant 0 : index
    %c0_13 = arith.constant 0 : index
    %17 = vector.load %arg4[%c0_12, %c0_13] : memref<1x128xf32, #tpu.memory_space<vmem>>, vector<1x128xf32>
    %18 = vector.broadcast %17 : vector<1x128xf32> to vector<8x128xf32>
    %19 = arith.addf %16, %18 : vector<8x128xf32>
    %cst_14 = arith.constant 0.000000e+00 : f32
    %20 = vector.broadcast %cst_14 : f32 to vector<8x128xf32>
    %21 = arith.maximumf %19, %20 : vector<8x128xf32>
    %cst_15 = arith.constant 0.000000e+00 : bf16
    %22 = vector.broadcast %cst_15 : bf16 to vector<1x128xbf16>
    %23 = arith.truncf %21 : vector<8x128xf32> to vector<8x128xbf16>
    %24 = tpu.concatenate %22, %23, %22 in 0 : vector<1x128xbf16>, vector<8x128xbf16>, vector<1x128xbf16> -> vector<10x128xbf16>
    %25 = vector.extract_strided_slice %24 {offsets = [0, 0], sizes = [8, 128], strides = [1, 1]} : vector<10x128xbf16> to vector<8x128xbf16>
    %26 = vector.extract_strided_slice %24 {offsets = [1, 0], sizes = [8, 128], strides = [1, 1]} : vector<10x128xbf16> to vector<8x128xbf16>
    %27 = vector.extract_strided_slice %24 {offsets = [2, 0], sizes = [8, 128], strides = [1, 1]} : vector<10x128xbf16> to vector<8x128xbf16>
    %28 = tpu.concatenate %25, %26, %27 in 1 : vector<8x128xbf16>, vector<8x128xbf16>, vector<8x128xbf16> -> vector<8x384xbf16>
    %c0_16 = arith.constant 0 : index
    %c0_17 = arith.constant 0 : index
    %29 = vector.load %arg5[%c0_16, %c0_17] : memref<384x128xbf16, #tpu.memory_space<vmem>>, vector<384x128xbf16>
    %cst_18 = arith.constant dense<0.000000e+00> : vector<8x128xf32>
    %30 = tpu.matmul %28, %29, %cst_18 {dimension_numbers = #tpu.dot_dimension_numbers<[1], [0], [0], [1], [0, 0, 1, 1], [], []>} : vector<8x384xbf16>, vector<384x128xbf16>, vector<8x128xf32> -> vector<8x128xf32>
    %c0_19 = arith.constant 0 : index
    %c0_20 = arith.constant 0 : index
    %31 = vector.load %arg6[%c0_19, %c0_20] : memref<1x128xf32, #tpu.memory_space<vmem>>, vector<1x128xf32>
    %32 = vector.broadcast %31 : vector<1x128xf32> to vector<8x128xf32>
    %33 = arith.addf %30, %32 : vector<8x128xf32>
    %cst_21 = arith.constant 0.449328959 : f32
    %34 = vector.broadcast %cst_21 : f32 to vector<8x128xf32>
    %35 = arith.addf %33, %34 : vector<8x128xf32>
    %cst_22 = arith.constant 1.000000e+00 : f32
    %36 = vector.broadcast %cst_22 : f32 to vector<8x128xf32>
    %37 = arith.mulf %35, %36 : vector<8x128xf32>
    %cst_23 = arith.constant 1.000000e+00 : f32
    %38 = vector.broadcast %cst_23 : f32 to vector<8x128xf32>
    %39 = arith.cmpf oge, %37, %38 : vector<8x128xf32>
    %40 = arith.extui %39 : vector<8x128xi1> to vector<8x128xi32>
    %41 = arith.sitofp %40 : vector<8x128xi32> to vector<8x128xf32>
    %cst_24 = arith.constant 0.000000e+00 : bf16
    %42 = vector.broadcast %cst_24 : bf16 to vector<1x128xbf16>
    %43 = arith.truncf %41 : vector<8x128xf32> to vector<8x128xbf16>
    %44 = tpu.concatenate %42, %43, %42 in 0 : vector<1x128xbf16>, vector<8x128xbf16>, vector<1x128xbf16> -> vector<10x128xbf16>
    %45 = vector.extract_strided_slice %44 {offsets = [0, 0], sizes = [8, 128], strides = [1, 1]} : vector<10x128xbf16> to vector<8x128xbf16>
    %46 = vector.extract_strided_slice %44 {offsets = [1, 0], sizes = [8, 128], strides = [1, 1]} : vector<10x128xbf16> to vector<8x128xbf16>
    %47 = vector.extract_strided_slice %44 {offsets = [2, 0], sizes = [8, 128], strides = [1, 1]} : vector<10x128xbf16> to vector<8x128xbf16>
    %48 = tpu.concatenate %45, %46, %47 in 1 : vector<8x128xbf16>, vector<8x128xbf16>, vector<8x128xbf16> -> vector<8x384xbf16>
    %c0_25 = arith.constant 0 : index
    %c0_26 = arith.constant 0 : index
    %49 = vector.load %arg7[%c0_25, %c0_26] : memref<384x128xbf16, #tpu.memory_space<vmem>>, vector<384x128xbf16>
    %cst_27 = arith.constant dense<0.000000e+00> : vector<8x128xf32>
    %50 = tpu.matmul %48, %49, %cst_27 {dimension_numbers = #tpu.dot_dimension_numbers<[1], [0], [0], [1], [0, 0, 1, 1], [], []>} : vector<8x384xbf16>, vector<384x128xbf16>, vector<8x128xf32> -> vector<8x128xf32>
    %c0_28 = arith.constant 0 : index
    %c0_29 = arith.constant 0 : index
    %51 = vector.load %arg8[%c0_28, %c0_29] : memref<1x128xf32, #tpu.memory_space<vmem>>, vector<1x128xf32>
    %52 = vector.broadcast %51 : vector<1x128xf32> to vector<8x128xf32>
    %53 = arith.addf %50, %52 : vector<8x128xf32>
    %cst_30 = arith.constant 0.449328959 : f32
    %54 = vector.broadcast %cst_30 : f32 to vector<8x128xf32>
    %55 = arith.addf %53, %54 : vector<8x128xf32>
    %cst_31 = arith.constant 1.000000e+00 : f32
    %56 = vector.broadcast %cst_31 : f32 to vector<8x128xf32>
    %57 = arith.mulf %55, %56 : vector<8x128xf32>
    %cst_32 = arith.constant 1.000000e+00 : f32
    %58 = vector.broadcast %cst_32 : f32 to vector<8x128xf32>
    %59 = arith.cmpf oge, %57, %58 : vector<8x128xf32>
    %60 = arith.extui %59 : vector<8x128xi1> to vector<8x128xi32>
    %61 = arith.sitofp %60 : vector<8x128xi32> to vector<8x128xf32>
    %cst_33 = arith.constant dense<0.000000e+00> : vector<128xf32>
    %62 = vector.multi_reduction <add>, %61, %cst_33 [0] : vector<8x128xf32> to vector<128xf32>
    %63 = vector.shape_cast %62 : vector<128xf32> to vector<1x128xf32>
    %cst_34 = arith.constant 8.000000e+00 : f32
    %64 = vector.broadcast %cst_34 : f32 to vector<1x128xf32>
    %65 = arith.divf %63, %64 : vector<1x128xf32>
    %c0_35 = arith.constant 0 : index
    %c0_36 = arith.constant 0 : index
    %66 = vector.load %arg9[%c0_35, %c0_36] : memref<128x128xf32, #tpu.memory_space<vmem>>, vector<128x128xf32>
    %cst_37 = arith.constant dense<0.000000e+00> : vector<1x128xf32>
    %67 = tpu.matmul %65, %66, %cst_37 {dimension_numbers = #tpu.dot_dimension_numbers<[1], [0], [0], [1], [0, 0, 1, 1], [], []>} : vector<1x128xf32>, vector<128x128xf32>, vector<1x128xf32> -> vector<1x128xf32>
    %c0_38 = arith.constant 0 : index
    %c0_39 = arith.constant 0 : index
    %68 = vector.load %arg10[%c0_38, %c0_39] : memref<1x128xf32, #tpu.memory_space<vmem>>, vector<1x128xf32>
    %69 = arith.addf %67, %68 : vector<1x128xf32>
    %cst_40 = arith.constant 0.000000e+00 : f32
    %70 = vector.broadcast %cst_40 : f32 to vector<1x128xf32>
    %71 = arith.maximumf %69, %70 : vector<1x128xf32>
    %c0_41 = arith.constant 0 : index
    %c0_42 = arith.constant 0 : index
    %72 = vector.load %arg11[%c0_41, %c0_42] : memref<128x128xf32, #tpu.memory_space<vmem>>, vector<128x128xf32>
    %cst_43 = arith.constant dense<0.000000e+00> : vector<1x128xf32>
    %73 = tpu.matmul %71, %72, %cst_43 {dimension_numbers = #tpu.dot_dimension_numbers<[1], [0], [0], [1], [0, 0, 1, 1], [], []>} : vector<1x128xf32>, vector<128x128xf32>, vector<1x128xf32> -> vector<1x128xf32>
    %c0_44 = arith.constant 0 : index
    %c0_45 = arith.constant 0 : index
    %74 = vector.load %arg12[%c0_44, %c0_45] : memref<1x128xf32, #tpu.memory_space<vmem>>, vector<1x128xf32>
    %75 = arith.addf %73, %74 : vector<1x128xf32>
    %76 = arith.negf %75 : vector<1x128xf32>
    %77 = math.exp %76 : vector<1x128xf32>
    %cst_46 = arith.constant 1.000000e+00 : f32
    %78 = vector.broadcast %cst_46 : f32 to vector<1x128xf32>
    %79 = arith.addf %78, %77 : vector<1x128xf32>
    %80 = arith.divf %78, %79 : vector<1x128xf32>
    %c0_47 = arith.constant 0 : index
    %c0_48 = arith.constant 0 : index
    %81 = vector.load %arg13[%c0_47, %c0_48] : memref<8x128xf32, #tpu.memory_space<vmem>>, vector<8x128xf32>
    %cst_49 = arith.constant 0.000000e+00 : f32
    %82 = vector.broadcast %cst_49 : f32 to vector<3x128xf32>
    %83 = tpu.concatenate %82, %61, %82 in 0 : vector<3x128xf32>, vector<8x128xf32>, vector<3x128xf32> -> vector<14x128xf32>
    %84 = vector.extract_strided_slice %83 {offsets = [0, 0], sizes = [8, 128], strides = [1, 1]} : vector<14x128xf32> to vector<8x128xf32>
    %85 = vector.extract_strided_slice %81 {offsets = [0, 0], sizes = [1, 128], strides = [1, 1]} : vector<8x128xf32> to vector<1x128xf32>
    %86 = vector.broadcast %85 : vector<1x128xf32> to vector<8x128xf32>
    %87 = arith.mulf %84, %86 : vector<8x128xf32>
    %88 = vector.extract_strided_slice %83 {offsets = [1, 0], sizes = [8, 128], strides = [1, 1]} : vector<14x128xf32> to vector<8x128xf32>
    %89 = vector.extract_strided_slice %81 {offsets = [1, 0], sizes = [1, 128], strides = [1, 1]} : vector<8x128xf32> to vector<1x128xf32>
    %90 = vector.broadcast %89 : vector<1x128xf32> to vector<8x128xf32>
    %91 = arith.mulf %88, %90 : vector<8x128xf32>
    %92 = arith.addf %87, %91 : vector<8x128xf32>
    %93 = vector.extract_strided_slice %83 {offsets = [2, 0], sizes = [8, 128], strides = [1, 1]} : vector<14x128xf32> to vector<8x128xf32>
    %94 = vector.extract_strided_slice %81 {offsets = [2, 0], sizes = [1, 128], strides = [1, 1]} : vector<8x128xf32> to vector<1x128xf32>
    %95 = vector.broadcast %94 : vector<1x128xf32> to vector<8x128xf32>
    %96 = arith.mulf %93, %95 : vector<8x128xf32>
    %97 = arith.addf %92, %96 : vector<8x128xf32>
    %98 = vector.extract_strided_slice %83 {offsets = [3, 0], sizes = [8, 128], strides = [1, 1]} : vector<14x128xf32> to vector<8x128xf32>
    %99 = vector.extract_strided_slice %81 {offsets = [3, 0], sizes = [1, 128], strides = [1, 1]} : vector<8x128xf32> to vector<1x128xf32>
    %100 = vector.broadcast %99 : vector<1x128xf32> to vector<8x128xf32>
    %101 = arith.mulf %98, %100 : vector<8x128xf32>
    %102 = arith.addf %97, %101 : vector<8x128xf32>
    %103 = vector.extract_strided_slice %83 {offsets = [4, 0], sizes = [8, 128], strides = [1, 1]} : vector<14x128xf32> to vector<8x128xf32>
    %104 = vector.extract_strided_slice %81 {offsets = [4, 0], sizes = [1, 128], strides = [1, 1]} : vector<8x128xf32> to vector<1x128xf32>
    %105 = vector.broadcast %104 : vector<1x128xf32> to vector<8x128xf32>
    %106 = arith.mulf %103, %105 : vector<8x128xf32>
    %107 = arith.addf %102, %106 : vector<8x128xf32>
    %108 = vector.extract_strided_slice %83 {offsets = [5, 0], sizes = [8, 128], strides = [1, 1]} : vector<14x128xf32> to vector<8x128xf32>
    %109 = vector.extract_strided_slice %81 {offsets = [5, 0], sizes = [1, 128], strides = [1, 1]} : vector<8x128xf32> to vector<1x128xf32>
    %110 = vector.broadcast %109 : vector<1x128xf32> to vector<8x128xf32>
    %111 = arith.mulf %108, %110 : vector<8x128xf32>
    %112 = arith.addf %107, %111 : vector<8x128xf32>
    %113 = vector.extract_strided_slice %83 {offsets = [6, 0], sizes = [8, 128], strides = [1, 1]} : vector<14x128xf32> to vector<8x128xf32>
    %114 = vector.extract_strided_slice %81 {offsets = [6, 0], sizes = [1, 128], strides = [1, 1]} : vector<8x128xf32> to vector<1x128xf32>
    %115 = vector.broadcast %114 : vector<1x128xf32> to vector<8x128xf32>
    %116 = arith.mulf %113, %115 : vector<8x128xf32>
    %117 = arith.addf %112, %116 : vector<8x128xf32>
    %cst_50 = arith.constant dense<0.000000e+00> : vector<8xf32>
    %118 = vector.multi_reduction <add>, %117, %cst_50 [1] : vector<8x128xf32> to vector<8xf32>
    %119 = vector.shape_cast %118 : vector<8xf32> to vector<8x1xf32>
    %120 = vector.broadcast %2 : vector<1x1xf32> to vector<8x1xf32>
    %121 = arith.addf %119, %120 : vector<8x1xf32>
    %122 = arith.negf %121 : vector<8x1xf32>
    %123 = math.exp %122 : vector<8x1xf32>
    %cst_51 = arith.constant 1.000000e+00 : f32
    %124 = vector.broadcast %cst_51 : f32 to vector<8x1xf32>
    %125 = arith.addf %124, %123 : vector<8x1xf32>
    %126 = arith.divf %124, %125 : vector<8x1xf32>
    %127 = vector.broadcast %80 : vector<1x128xf32> to vector<8x128xf32>
    %128 = arith.mulf %61, %127 : vector<8x128xf32>
    %129 = vector.broadcast %0 : vector<1x1xf32> to vector<8x128xf32>
    %130 = arith.mulf %128, %129 : vector<8x128xf32>
    %131 = vector.broadcast %126 : vector<8x1xf32> to vector<8x128xf32>
    %132 = arith.mulf %61, %131 : vector<8x128xf32>
    %133 = vector.broadcast %1 : vector<1x1xf32> to vector<8x128xf32>
    %134 = arith.mulf %132, %133 : vector<8x128xf32>
    %135 = arith.addf %130, %134 : vector<8x128xf32>
    %136 = arith.addf %135, %21 : vector<8x128xf32>
    %cst_52 = arith.constant dense<0.000000e+00> : vector<128xf32>
    %137 = vector.multi_reduction <add>, %136, %cst_52 [0] : vector<8x128xf32> to vector<128xf32>
    %138 = vector.shape_cast %137 : vector<128xf32> to vector<1x128xf32>
    %cst_53 = arith.constant 8.000000e+00 : f32
    %139 = vector.broadcast %cst_53 : f32 to vector<1x128xf32>
    %140 = arith.divf %138, %139 : vector<1x128xf32>
    %c0_54 = arith.constant 0 : index
    %c0_55 = arith.constant 0 : index
    %141 = vector.load %arg14[%c0_54, %c0_55] : memref<128x128xf32, #tpu.memory_space<vmem>>, vector<128x128xf32>
    %cst_56 = arith.constant dense<0.000000e+00> : vector<1x128xf32>
    %142 = tpu.matmul %140, %141, %cst_56 {dimension_numbers = #tpu.dot_dimension_numbers<[1], [0], [0], [1], [0, 0, 1, 1], [], []>} : vector<1x128xf32>, vector<128x128xf32>, vector<1x128xf32> -> vector<1x128xf32>
    %c0_57 = arith.constant 0 : index
    %c0_58 = arith.constant 0 : index
    %143 = vector.load %arg15[%c0_57, %c0_58] : memref<1x128xf32, #tpu.memory_space<vmem>>, vector<1x128xf32>
    %144 = arith.addf %142, %143 : vector<1x128xf32>
    %c0_59 = arith.constant 0 : index
    %c0_60 = arith.constant 0 : index
    %c0_61 = arith.constant 0 : index
    %145 = vector.load %arg17[%c0_59, %c0_60, %c0_61] : memref<1x1x128xf32, #tpu.memory_space<vmem>>, vector<1x1x128xf32>
    %146 = vector.shape_cast %145 : vector<1x1x128xf32> to vector<1x128xf32>
    %147 = vector.shape_cast %144 : vector<1x128xf32> to vector<1x1x128xf32>
    tpu.vector_store %arg17[%c0_59, %c0_60, %c0_61], %147 {strides = array<i32>} : memref<1x1x128xf32, #tpu.memory_space<vmem>>, vector<1x1x128xf32>,
    return
  }
  func.func @transform_0(%arg0: i32) -> (i32, i32, i32) {
    %c0_i32 = arith.constant 0 : i32
    %c0_i32_0 = arith.constant 0 : i32
    %c0_i32_1 = arith.constant 0 : i32
    return %arg0, %c0_i32, %c0_i32_0 : i32, i32, i32
  }
  func.func @transform_1(%arg0: i32) -> (i32, i32) {
    %c0_i32 = arith.constant 0 : i32
    %c0_i32_0 = arith.constant 0 : i32
    %c0_i32_1 = arith.constant 0 : i32
    return %c0_i32, %c0_i32_0 : i32, i32
  }
  func.func @transform_2(%arg0: i32) -> (i32, i32) {
    %c0_i32 = arith.constant 0 : i32
    %c0_i32_0 = arith.constant 0 : i32
    %c0_i32_1 = arith.constant 0 : i32
    return %c0_i32, %c0_i32_0 : i32, i32
  }
  func.func @transform_3(%arg0: i32) -> (i32, i32) {
    %c0_i32 = arith.constant 0 : i32
    %c0_i32_0 = arith.constant 0 : i32
    %c0_i32_1 = arith.constant 0 : i32
    return %c0_i32, %c0_i32_0 : i32, i32
  }
  func.func @transform_4(%arg0: i32) -> (i32, i32) {
    %c0_i32 = arith.constant 0 : i32
    %c0_i32_0 = arith.constant 0 : i32
    %c0_i32_1 = arith.constant 0 : i32
    return %c0_i32, %c0_i32_0 : i32, i32
  }
  func.func @transform_5(%arg0: i32) -> (i32, i32) {
    %c0_i32 = arith.constant 0 : i32
    %c0_i32_0 = arith.constant 0 : i32
    %c0_i32_1 = arith.constant 0 : i32
    return %c0_i32, %c0_i32_0 : i32, i32
  }
  func.func @transform_6(%arg0: i32) -> (i32, i32) {
    %c0_i32 = arith.constant 0 : i32
    %c0_i32_0 = arith.constant 0 : i32
    %c0_i32_1 = arith.constant 0 : i32
    return %c0_i32, %c0_i32_0 : i32, i32
  }
  func.func @transform_7(%arg0: i32) -> (i32, i32) {
    %c0_i32 = arith.constant 0 : i32
    %c0_i32_0 = arith.constant 0 : i32
    %c0_i32_1 = arith.constant 0 : i32
    return %c0_i32, %c0_i32_0 : i32, i32
  }
  func.func @transform_8(%arg0: i32) -> (i32, i32) {
    %c0_i32 = arith.constant 0 : i32
    %c0_i32_0 = arith.constant 0 : i32
    %c0_i32_1 = arith.constant 0 : i32
    return %c0_i32, %c0_i32_0 : i32, i32
  }
  func.func @transform_9(%arg0: i32) -> (i32, i32) {
    %c0_i32 = arith.constant 0 : i32
    %c0_i32_0 = arith.constant 0 : i32
    %c0_i32_1 = arith.constant 0 : i32
    return %c0_i32, %c0_i32_0 : i32, i32
  }
  func.func @transform_10(%arg0: i32) -> (i32, i32) {
    %c0_i32 = arith.constant 0 : i32
    %c0_i32_0 = arith.constant 0 : i32
    %c0_i32_1 = arith.constant 0 : i32
    return %c0_i32, %c0_i32_0 : i32, i32
  }
  func.func @transform_11(%arg0: i32) -> (i32, i32) {
    %c0_i32 = arith.constant 0 : i32
    %c0_i32_0 = arith.constant 0 : i32
    %c0_i32_1 = arith.constant 0 : i32
    return %c0_i32, %c0_i32_0 : i32, i32
  }
  func.func @transform_12(%arg0: i32) -> (i32, i32) {
    %c0_i32 = arith.constant 0 : i32
    %c0_i32_0 = arith.constant 0 : i32
    %c0_i32_1 = arith.constant 0 : i32
    return %c0_i32, %c0_i32_0 : i32, i32
  }
  func.func @transform_13(%arg0: i32) -> (i32, i32) {
    %c0_i32 = arith.constant 0 : i32
    %c0_i32_0 = arith.constant 0 : i32
    %c0_i32_1 = arith.constant 0 : i32
    return %c0_i32, %c0_i32_0 : i32, i32
  }
  func.func @transform_14(%arg0: i32) -> (i32, i32) {
    %c0_i32 = arith.constant 0 : i32
    %c0_i32_0 = arith.constant 0 : i32
    %c0_i32_1 = arith.constant 0 : i32
    return %c0_i32, %c0_i32_0 : i32, i32
  }
  func.func @transform_15(%arg0: i32) -> (i32, i32) {
    %c0_i32 = arith.constant 0 : i32
    %c0_i32_0 = arith.constant 0 : i32
    %c0_i32_1 = arith.constant 0 : i32
    return %c0_i32, %c0_i32_0 : i32, i32
  }
  func.func @transform_16(%arg0: i32) -> (i32, i32, i32) {
    %c0_i32 = arith.constant 0 : i32
    %c0_i32_0 = arith.constant 0 : i32
    %c0_i32_1 = arith.constant 0 : i32
    return %arg0, %c0_i32, %c0_i32_0 : i32, i32, i32
  }
}

</mosaic_0001>

<llo_original>
// kernel: tcsn_forward.1
$region0: #{tcsn_forward.1}
  #allocation0 [shape = 'u32[]', space=smem, size = 0x4, offset = 0x4, fixed_abs, tag = 'smem constant byte address 0x4 - core index']
  #allocation1 [shape = 'u32[144,128]{1,0:T(1,128)}', space=vmem, size = 0x12000, scoped, tag = 'internal scratch']
  %s0 = inlined_call_operand.vmem [shape: f32[2,16,128], index: 0, kind: input, shape index: {}]
  %s1 = inlined_call_operand.vmem [shape: f32[128,512], index: 1, kind: input, shape index: {}]
  %s2 = inlined_call_operand.vmem [shape: bf16[2048,128], index: 2, kind: input, shape index: {}]
  %s3 = inlined_call_operand.vmem [shape: f32[1,128], index: 3, kind: input, shape index: {}]
  %s4 = inlined_call_operand.vmem [shape: bf16[384,128], index: 4, kind: input, shape index: {}]
  %s5 = inlined_call_operand.hbm [shape: f32[1,128], index: 5, kind: input, shape index: {}]
  %s6 = inlined_call_operand.vmem [shape: bf16[384,128], index: 6, kind: input, shape index: {}]
  %s7 = inlined_call_operand.hbm [shape: f32[1,128], index: 7, kind: input, shape index: {}]
  %s8 = inlined_call_operand.vmem [shape: f32[128,128], index: 8, kind: input, shape index: {}]
  %s9 = inlined_call_operand.vmem [shape: f32[1,128], index: 9, kind: input, shape index: {}]
  %s10 = inlined_call_operand.vmem [shape: f32[128,128], index: 10, kind: input, shape index: {}]
  %s11 = inlined_call_operand.vmem [shape: f32[1,128], index: 11, kind: input, shape index: {}]
  %s12 = inlined_call_operand.vmem [shape: f32[8,128], index: 12, kind: input, shape index: {}]
  %s13 = inlined_call_operand.hbm [shape: f32[128,128], index: 13, kind: input, shape index: {}]
  %s14 = inlined_call_operand.vmem [shape: f32[1,128], index: 14, kind: input, shape index: {}]
  %s15 = inlined_call_operand.vmem [shape: f32[1,128], index: 15, kind: input, shape index: {}]
  %s16 = inlined_call_operand.hbm [shape: f32[2,1,128], index: 16, kind: output, shape index: {}]
  %s17 = sld [smem:[#allocation0]]
  $region109: #{tcsn_forward.1} parent=0
    _
  %s19 = ssub.s32 1, %s17
  %s20 = scalar_select 0, %s19, %s17
  $region1: #{tcsn_forward.1} parent=0
    #allocation2 [shape = 'u8[512]{0}', space=vmem, size = 0x400, scoped, tag = 'input window, operand 5, single buffered']
    #allocation3 [shape = 's32[2]{0}', space=sflag, size = 0x8, scoped, tag = 'scoped memory for tcsn_forward.1']
    #allocation4 [shape = 's32[2]{0}', space=sflag, size = 0x8, scoped, tag = 'scoped memory for tcsn_forward.1']
    #allocation5 [shape = 'u8[512]{0}', space=vmem, size = 0x400, scoped, tag = 'input window, operand 7, single buffered']
    #allocation6 [shape = 's32[1]{0}', space=sflag, size = 0x4, scoped, tag = 'scoped memory for tcsn_forward.1']
    #allocation7 [shape = 'u8[65536]{0}', space=vmem, size = 0x10000, scoped, tag = 'input window, operand 13, single buffered']
    #allocation8 [shape = 'u8[1024]{0}', space=vmem, size = 0x400, scoped, tag = 'output window, operand 0']
    %21 = vsyncpa [#allocation3], 0
    %22 = vsyncpa [#allocation6], 0
    %23 = vsyncpa [#allocation4], 0
    %s24 = scalar_lea.sflag [#allocation4], 1
    %25 = vsyncpa %s24, 0
    loop: start=0, step=1, limit=4
    $region2: #{tcsn_forward.1} parent=1 // loop_pre_header
      _
    $region3: #{tcsn_forward.1} parent=1 // loop_header
      %s27 = sphi 0, %s31
      %p28 = scmp.ge.s32.totalorder %s27, 4
      %s37 = sphi 0, %s39
      %s40 = sphi 0, %s37
      %s41 = sphi 0, %s40
      %s57 = sphi 0, %s41
      %s61 = sphi 0, %s61
      %s63 = sphi 0, %s61
      %s64 = sphi 0, %s63
      %s78 = sphi 0, %s64
      %s82 = sphi 0, %s82
      %s84 = sphi 0, %s82
      %s85 = sphi 0, %s84
      %s99 = sphi 0, %s85
      %s103 = sphi 0, %s103
      %s105 = sphi 0, %s103
      %s106 = sphi 0, %s105
      %s120 = sphi 0, %s106
      %s124 = sphi 0, %s124
      %s126 = sphi 0, %s124
      %s127 = sphi 0, %s126
      %s141 = sphi 0, %s127
      %s145 = sphi 0, %s145
      %s147 = sphi 0, %s145
      %s148 = sphi 0, %s147
      %s162 = sphi 0, %s148
      %s166 = sphi 0, %s166
      %s168 = sphi 0, %s166
      %s169 = sphi 0, %s168
      %s183 = sphi 0, %s169
      %s187 = sphi 0, %s187
      %s189 = sphi 0, %s187
      %s190 = sphi 0, %s189
      %s204 = sphi 0, %s190
      %s208 = sphi 0, %s208
      %s210 = sphi 0, %s208
      %s211 = sphi 0, %s210
      %s225 = sphi 0, %s211
      %s229 = sphi 0, %s229
      %s231 = sphi 0, %s229
      %s232 = sphi 0, %s231
      %s246 = sphi 0, %s232
      %s250 = sphi 0, %s250
      %s252 = sphi 0, %s250
      %s253 = sphi 0, %s252
      %s267 = sphi 0, %s253
      %s271 = sphi 0, %s271
      %s273 = sphi 0, %s271
      %s274 = sphi 0, %s273
      %s288 = sphi 0, %s274
      %s292 = sphi 0, %s292
      %s294 = sphi 0, %s292
      %s295 = sphi 0, %s294
      %s309 = sphi 0, %s295
      %s313 = sphi 0, %s313
      %s315 = sphi 0, %s313
      %s316 = sphi 0, %s315
      %s330 = sphi 0, %s316
      %s334 = sphi 0, %s334
      %s336 = sphi 0, %s334
      %s337 = sphi 0, %s336
      %s351 = sphi 0, %s337
      %s355 = sphi 0, %s355
      %s357 = sphi 0, %s355
      %s358 = sphi 0, %s357
      %s372 = sphi 0, %s358
      %s378 = sphi 0, %s380
      %s381 = sphi 0, %s378
      %s382 = sphi 0, %s381
      %s398 = sphi 0, %s382
    $region4: #{tcsn_forward.1} parent=1 // loop_header_branch
      %30 = sbr.rel (%p28) target = $region8
    $region5: #{tcsn_forward.1} parent=1 // loop_body
      %s32 = ssub.s32 %s27, 1
      %s33 = ssub.s32 %s27, 2
      %s34 = sadd.s32 %s27, 1
      %s35 = ssub.s32 %s27, %s34
      %p36 = scmp.eq.s32.totalorder %s35, 0
      %s38 = sadd.s32 %s37, 1
      %s39 = scalar_select %p36, %s37, %s38
      %p42 = pneg %p36
      %p43 = scmp.eq.s32.totalorder %s27, 1
      %p44 = por %p42, %p43
      %p45 = scmp.ne.s32.totalorder %s37, %s40
      %p46 = scmp.eq.s32.totalorder %s27, 0
      %p47 = por %p45, %p46
      %p48 = scmp.ne.s32.totalorder %s37, %s40
      %p49 = scmp.eq.s32.totalorder %s32, 1
      %p50 = por %p48, %p49
      %p51 = scmp.ne.s32.totalorder %s40, %s41
      %p52 = scmp.eq.s32.totalorder %s32, 0
      %p53 = por %p51, %p52
      %p54 = scmp.ne.s32.totalorder %s40, %s41
      %p55 = scmp.eq.s32.totalorder %s33, 1
      %p56 = por %p54, %p55
      %p58 = scmp.ne.s32.totalorder %s41, %s57
      %p59 = scmp.eq.s32.totalorder %s33, 0
      %p60 = por %p58, %p59
      %s62 = sadd.s32 %s61, 1
      %p65 = scmp.eq.s32.totalorder %s27, 1
      %p66 = scmp.ne.s32.totalorder %s61, %s63
      %p67 = scmp.eq.s32.totalorder %s27, 0
      %p68 = por %p66, %p67
      %p69 = scmp.ne.s32.totalorder %s61, %s63
      %p70 = scmp.eq.s32.totalorder %s32, 1
      %p71 = por %p69, %p70
      %p72 = scmp.ne.s32.totalorder %s63, %s64
      %p73 = scmp.eq.s32.totalorder %s32, 0
      %p74 = por %p72, %p73
      %p75 = scmp.ne.s32.totalorder %s63, %s64
      %p76 = scmp.eq.s32.totalorder %s33, 1
      %p77 = por %p75, %p76
      %p79 = scmp.ne.s32.totalorder %s64, %s78
      %p80 = scmp.eq.s32.totalorder %s33, 0
      %p81 = por %p79, %p80
      %s83 = sadd.s32 %s82, 1
      %p86 = scmp.eq.s32.totalorder %s27, 1
      %p87 = scmp.ne.s32.totalorder %s82, %s84
      %p88 = scmp.eq.s32.totalorder %s27, 0
      %p89 = por %p87, %p88
      %p90 = scmp.ne.s32.totalorder %s82, %s84
      %p91 = scmp.eq.s32.totalorder %s32, 1
      %p92 = por %p90, %p91
      %p93 = scmp.ne.s32.totalorder %s84, %s85
      %p94 = scmp.eq.s32.totalorder %s32, 0
      %p95 = por %p93, %p94
      %p96 = scmp.ne.s32.totalorder %s84, %s85
      %p97 = scmp.eq.s32.totalorder %s33, 1
      %p98 = por %p96, %p97
      %p100 = scmp.ne.s32.totalorder %s85, %s99
      %p101 = scmp.eq.s32.totalorder %s33, 0
      %p102 = por %p100, %p101
      %s104 = sadd.s32 %s103, 1
      %p107 = scmp.eq.s32.totalorder %s27, 1
      %p108 = scmp.ne.s32.totalorder %s103, %s105
      %p109 = scmp.eq.s32.totalorder %s27, 0
      %p110 = por %p108, %p109
      %p111 = scmp.ne.s32.totalorder %s103, %s105
      %p112 = scmp.eq.s32.totalorder %s32, 1
      %p113 = por %p111, %p112
      %p114 = scmp.ne.s32.totalorder %s105, %s106
      %p115 = scmp.eq.s32.totalorder %s32, 0
      %p116 = por %p114, %p115
      %p117 = scmp.ne.s32.totalorder %s105, %s106
      %p118 = scmp.eq.s32.totalorder %s33, 1
      %p119 = por %p117, %p118
      %p121 = scmp.ne.s32.totalorder %s106, %s120
      %p122 = scmp.eq.s32.totalorder %s33, 0
      %p123 = por %p121, %p122
      %s125 = sadd.s32 %s124, 1
      %p128 = scmp.eq.s32.totalorder %s27, 1
      %p129 = scmp.ne.s32.totalorder %s124, %s126
      %p130 = scmp.eq.s32.totalorder %s27, 0
      %p131 = por %p129, %p130
      %p132 = scmp.ne.s32.totalorder %s124, %s126
      %p133 = scmp.eq.s32.totalorder %s32, 1
      %p134 = por %p132, %p133
      %p135 = scmp.ne.s32.totalorder %s126, %s127
      %p136 = scmp.eq.s32.totalorder %s32, 0
      %p137 = por %p135, %p136
      %p138 = scmp.ne.s32.totalorder %s126, %s127
      %p139 = scmp.eq.s32.totalorder %s33, 1
      %p140 = por %p138, %p139
      %p142 = scmp.ne.s32.totalorder %s127, %s141
      %p143 = scmp.eq.s32.totalorder %s33, 0
      %p144 = por %p142, %p143
      %s146 = sadd.s32 %s145, 1
      %p149 = scmp.eq.s32.totalorder %s27, 1
      %p150 = scmp.ne.s32.totalorder %s145, %s147
      %p151 = scmp.eq.s32.totalorder %s27, 0
      %p152 = por %p150, %p151
      %p153 = scmp.ne.s32.totalorder %s145, %s147
      %p154 = scmp.eq.s32.totalorder %s32, 1
      %p155 = por %p153, %p154
      %p156 = scmp.ne.s32.totalorder %s147, %s148
      %p157 = scmp.eq.s32.totalorder %s32, 0
      %p158 = por %p156, %p157
      %p159 = scmp.ne.s32.totalorder %s147, %s148
      %p160 = scmp.eq.s32.totalorder %s33, 1
      %p161 = por %p159, %p160
      %p163 = scmp.ne.s32.totalorder %s148, %s162
      %p164 = scmp.eq.s32.totalorder %s33, 0
      %p165 = por %p163, %p164
      %s167 = sadd.s32 %s166, 1
      %p170 = scmp.eq.s32.totalorder %s27, 1
      %p171 = scmp.ne.s32.totalorder %s166, %s168
      %p172 = scmp.eq.s32.totalorder %s27, 0
      %p173 = por %p171, %p172
      %p174 = scmp.ne.s32.totalorder %s166, %s168
      %p175 = scmp.eq.s32.totalorder %s32, 1
      %p176 = por %p174, %p175
      %p177 = scmp.ne.s32.totalorder %s168, %s169
      %p178 = scmp.eq.s32.totalorder %s32, 0
      %p179 = por %p177, %p178
      %p180 = scmp.ne.s32.totalorder %s168, %s169
      %p181 = scmp.eq.s32.totalorder %s33, 1
      %p182 = por %p180, %p181
      %p184 = scmp.ne.s32.totalorder %s169, %s183
      %p185 = scmp.eq.s32.totalorder %s33, 0
      %p186 = por %p184, %p185
      %s188 = sadd.s32 %s187, 1
      %p191 = scmp.eq.s32.totalorder %s27, 1
      %p192 = scmp.ne.s32.totalorder %s187, %s189
      %p193 = scmp.eq.s32.totalorder %s27, 0
      %p194 = por %p192, %p193
      %p195 = scmp.ne.s32.totalorder %s187, %s189
      %p196 = scmp.eq.s32.totalorder %s32, 1
      %p197 = por %p195, %p196
      %p198 = scmp.ne.s32.totalorder %s189, %s190
      %p199 = scmp.eq.s32.totalorder %s32, 0
      %p200 = por %p198, %p199
      %p201 = scmp.ne.s32.totalorder %s189, %s190
      %p202 = scmp.eq.s32.totalorder %s33, 1
      %p203 = por %p201, %p202
      %p205 = scmp.ne.s32.totalorder %s190, %s204
      %p206 = scmp.eq.s32.totalorder %s33, 0
      %p207 = por %p205, %p206
      %s209 = sadd.s32 %s208, 1
      %p212 = scmp.eq.s32.totalorder %s27, 1
      %p213 = scmp.ne.s32.totalorder %s208, %s210
      %p214 = scmp.eq.s32.totalorder %s27, 0
      %p215 = por %p213, %p214
      %p216 = scmp.ne.s32.totalorder %s208, %s210
      %p217 = scmp.eq.s32.totalorder %s32, 1
      %p218 = por %p216, %p217
      %p219 = scmp.ne.s32.totalorder %s210, %s211
      %p220 = scmp.eq.s32.totalorder %s32, 0
      %p221 = por %p219, %p220
      %p222 = scmp.ne.s32.totalorder %s210, %s211
      %p223 = scmp.eq.s32.totalorder %s33, 1
      %p224 = por %p222, %p223
      %p226 = scmp.ne.s32.totalorder %s211, %s225
      %p227 = scmp.eq.s32.totalorder %s33, 0
      %p228 = por %p226, %p227
      %s230 = sadd.s32 %s229, 1
      %p233 = scmp.eq.s32.totalorder %s27, 1
      %p234 = scmp.ne.s32.totalorder %s229, %s231
      %p235 = scmp.eq.s32.totalorder %s27, 0
      %p236 = por %p234, %p235
      %p237 = scmp.ne.s32.totalorder %s229, %s231
      %p238 = scmp.eq.s32.totalorder %s32, 1
      %p239 = por %p237, %p238
      %p240 = scmp.ne.s32.totalorder %s231, %s232
      %p241 = scmp.eq.s32.totalorder %s32, 0
      %p242 = por %p240, %p241
      %p243 = scmp.ne.s32.totalorder %s231, %s232
      %p244 = scmp.eq.s32.totalorder %s33, 1
      %p245 = por %p243, %p244
      %p247 = scmp.ne.s32.totalorder %s232, %s246
      %p248 = scmp.eq.s32.totalorder %s33, 0
      %p249 = por %p247, %p248
      %s251 = sadd.s32 %s250, 1
      %p254 = scmp.eq.s32.totalorder %s27, 1
      %p255 = scmp.ne.s32.totalorder %s250, %s252
      %p256 = scmp.eq.s32.totalorder %s27, 0
      %p257 = por %p255, %p256
      %p258 = scmp.ne.s32.totalorder %s250, %s252
      %p259 = scmp.eq.s32.totalorder %s32, 1
      %p260 = por %p258, %p259
      %p261 = scmp.ne.s32.totalorder %s252, %s253
      %p262 = scmp.eq.s32.totalorder %s32, 0
      %p263 = por %p261, %p262
      %p264 = scmp.ne.s32.totalorder %s252, %s253
      %p265 = scmp.eq.s32.totalorder %s33, 1
      %p266 = por %p264, %p265
      %p268 = scmp.ne.s32.totalorder %s253, %s267
      %p269 = scmp.eq.s32.totalorder %s33, 0
      %p270 = por %p268, %p269
      %s272 = sadd.s32 %s271, 1
      %p275 = scmp.eq.s32.totalorder %s27, 1
      %p276 = scmp.ne.s32.totalorder %s271, %s273
      %p277 = scmp.eq.s32.totalorder %s27, 0
      %p278 = por %p276, %p277
      %p279 = scmp.ne.s32.totalorder %s271, %s273
      %p280 = scmp.eq.s32.totalorder %s32, 1
      %p281 = por %p279, %p280
      %p282 = scmp.ne.s32.totalorder %s273, %s274
      %p283 = scmp.eq.s32.totalorder %s32, 0
      %p284 = por %p282, %p283
      %p285 = scmp.ne.s32.totalorder %s273, %s274
      %p286 = scmp.eq.s32.totalorder %s33, 1
      %p287 = por %p285, %p286
      %p289 = scmp.ne.s32.totalorder %s274, %s288
      %p290 = scmp.eq.s32.totalorder %s33, 0
      %p291 = por %p289, %p290
      %s293 = sadd.s32 %s292, 1
      %p296 = scmp.eq.s32.totalorder %s27, 1
      %p297 = scmp.ne.s32.totalorder %s292, %s294
      %p298 = scmp.eq.s32.totalorder %s27, 0
      %p299 = por %p297, %p298
      %p300 = scmp.ne.s32.totalorder %s292, %s294
      %p301 = scmp.eq.s32.totalorder %s32, 1
      %p302 = por %p300, %p301
      %p303 = scmp.ne.s32.totalorder %s294, %s295
      %p304 = scmp.eq.s32.totalorder %s32, 0
      %p305 = por %p303, %p304
      %p306 = scmp.ne.s32.totalorder %s294, %s295
      %p307 = scmp.eq.s32.totalorder %s33, 1
      %p308 = por %p306, %p307
      %p310 = scmp.ne.s32.totalorder %s295, %s309
      %p311 = scmp.eq.s32.totalorder %s33, 0
      %p312 = por %p310, %p311
      %s314 = sadd.s32 %s313, 1
      %p317 = scmp.eq.s32.totalorder %s27, 1
      %p318 = scmp.ne.s32.totalorder %s313, %s315
      %p319 = scmp.eq.s32.totalorder %s27, 0
      %p320 = por %p318, %p319
      %p321 = scmp.ne.s32.totalorder %s313, %s315
      %p322 = scmp.eq.s32.totalorder %s32, 1
      %p323 = por %p321, %p322
      %p324 = scmp.ne.s32.totalorder %s315, %s316
      %p325 = scmp.eq.s32.totalorder %s32, 0
      %p326 = por %p324, %p325
      %p327 = scmp.ne.s32.totalorder %s315, %s316
      %p328 = scmp.eq.s32.totalorder %s33, 1
      %p329 = por %p327, %p328
      %p331 = scmp.ne.s32.totalorder %s316, %s330
      %p332 = scmp.eq.s32.totalorder %s33, 0
      %p333 = por %p331, %p332
      %s335 = sadd.s32 %s334, 1
      %p338 = scmp.eq.s32.totalorder %s27, 1
      %p339 = scmp.ne.s32.totalorder %s334, %s336
      %p340 = scmp.eq.s32.totalorder %s27, 0
      %p341 = por %p339, %p340
      %p342 = scmp.ne.s32.totalorder %s334, %s336
      %p343 = scmp.eq.s32.totalorder %s32, 1
      %p344 = por %p342, %p343
      %p345 = scmp.ne.s32.totalorder %s336, %s337
      %p346 = scmp.eq.s32.totalorder %s32, 0
      %p347 = por %p345, %p346
      %p348 = scmp.ne.s32.totalorder %s336, %s337
      %p349 = scmp.eq.s32.totalorder %s33, 1
      %p350 = por %p348, %p349
      %p352 = scmp.ne.s32.totalorder %s337, %s351
      %p353 = scmp.eq.s32.totalorder %s33, 0
      %p354 = por %p352, %p353
      %s356 = sadd.s32 %s355, 1
      %p359 = scmp.eq.s32.totalorder %s27, 1
      %p360 = scmp.ne.s32.totalorder %s355, %s357
      %p361 = scmp.eq.s32.totalorder %s27, 0
      %p362 = por %p360, %p361
      %p363 = scmp.ne.s32.totalorder %s355, %s357
      %p364 = scmp.eq.s32.totalorder %s32, 1
      %p365 = por %p363, %p364
      %p366 = scmp.ne.s32.totalorder %s357, %s358
      %p367 = scmp.eq.s32.totalorder %s32, 0
      %p368 = por %p366, %p367
      %p369 = scmp.ne.s32.totalorder %s357, %s358
      %p370 = scmp.eq.s32.totalorder %s33, 1
      %p371 = por %p369, %p370
      %p373 = scmp.ne.s32.totalorder %s358, %s372
      %p374 = scmp.eq.s32.totalorder %s33, 0
      %p375 = por %p373, %p374
      %s376 = ssub.s32 %s27, %s34
      %p377 = scmp.eq.s32.totalorder %s376, 0
      %s379 = sadd.s32 %s378, 1
      %s380 = scalar_select %p377, %s378, %s379
      %p383 = pneg %p377
      %p384 = scmp.eq.s32.totalorder %s27, 1
      %p385 = por %p383, %p384
      %p386 = scmp.ne.s32.totalorder %s378, %s381
      %p387 = scmp.eq.s32.totalorder %s27, 0
      %p388 = por %p386, %p387
      %p389 = scmp.ne.s32.totalorder %s378, %s381
      %p390 = scmp.eq.s32.totalorder %s32, 1
      %p391 = por %p389, %p390
      %p392 = scmp.ne.s32.totalorder %s381, %s382
      %p393 = scmp.eq.s32.totalorder %s32, 0
      %p394 = por %p392, %p393
      %p395 = scmp.ne.s32.totalorder %s381, %s382
      %p396 = scmp.eq.s32.totalorder %s33, 1
      %p397 = por %p395, %p396
      %p399 = scmp.ne.s32.totalorder %s382, %s398
      %p400 = scmp.eq.s32.totalorder %s33, 0
      %p401 = por %p399, %p400
      %p402 = scmp.le.s32.totalorder 1, %s27
      %p403 = scmp.lt.s32.totalorder %s27, 3
      %p404 = pnand %p402, %p403
      %p405 = pneg %p404
      // Predicated region
      $region9: #{tcsn_forward.1} parent=5 // pred_check
        _
      $region10: #{tcsn_forward.1} parent=5 // pred_check_branch
        %407 = sbr.rel (%p404) target = $region12
      $region11: #{tcsn_forward.1} parent=5 // pred_region
        %s408 = ssub.s32 %s27, 1
        // Predicated region
        $region13: #{tcsn_forward.1} parent=11 // pred_check
          %p409 = pneg %p74
        $region14: #{tcsn_forward.1} parent=11 // pred_check_branch
          %411 = sbr.rel (%p409) target = $region16
        $region15: #{tcsn_forward.1} parent=11 // pred_region
          _
        $region16: #{tcsn_forward.1} parent=11 // pred_fallthru
          _
        // Predicated region
        $region17: #{tcsn_forward.1} parent=11 // pred_check
          %p412 = pneg %p95
        $region18: #{tcsn_forward.1} parent=11 // pred_check_branch
          %414 = sbr.rel (%p412) target = $region20
        $region19: #{tcsn_forward.1} parent=11 // pred_region
          _
        $region20: #{tcsn_forward.1} parent=11 // pred_fallthru
          _
        // Predicated region
        $region21: #{tcsn_forward.1} parent=11 // pred_check
          %p415 = pneg %p116
        $region22: #{tcsn_forward.1} parent=11 // pred_check_branch
          %417 = sbr.rel (%p415) target = $region24
        $region23: #{tcsn_forward.1} parent=11 // pred_region
          _
        $region24: #{tcsn_forward.1} parent=11 // pred_fallthru
          _
        // Predicated region
        $region25: #{tcsn_forward.1} parent=11 // pred_check
          %p418 = pneg %p137
        $region26: #{tcsn_forward.1} parent=11 // pred_check_branch
          %420 = sbr.rel (%p418) target = $region28
        $region27: #{tcsn_forward.1} parent=11 // pred_region
          _
        $region28: #{tcsn_forward.1} parent=11 // pred_fallthru
          _
        // Predicated region
        $region29: #{tcsn_forward.1} parent=11 // pred_check
          %p421 = pneg %p158
        $region30: #{tcsn_forward.1} parent=11 // pred_check_branch
          %423 = sbr.rel (%p421) target = $region32
        $region31: #{tcsn_forward.1} parent=11 // pred_region
          %s425 = ssub.s32 16, 16
          %426 = vsyncadd [#allocation3], %s425
          %s428 = sshll.u32 [#allocation2], 4
          %s429 = int_to_ptr.vmem [resolvable:$true] %s428
          %431 = dma.hbm_to_vmem [thread:$0]  %s5, 16, %s429, [#allocation3]
        $region32: #{tcsn_forward.1} parent=11 // pred_fallthru
          _
        // Predicated region
        $region33: #{tcsn_forward.1} parent=11 // pred_check
          %p432 = pneg %p179
        $region34: #{tcsn_forward.1} parent=11 // pred_check_branch
          %434 = sbr.rel (%p432) target = $region36
        $region35: #{tcsn_forward.1} parent=11 // pred_region
          _
        $region36: #{tcsn_forward.1} parent=11 // pred_fallthru
          _
        // Predicated region
        $region37: #{tcsn_forward.1} parent=11 // pred_check
          %p435 = pneg %p200
        $region38: #{tcsn_forward.1} parent=11 // pred_check_branch
          %437 = sbr.rel (%p435) target = $region40
        $region39: #{tcsn_forward.1} parent=11 // pred_region
          %s439 = ssub.s32 16, 16
          %440 = vsyncadd [#allocation6], %s439
          %s442 = sshll.u32 [#allocation5], 4
          %s443 = int_to_ptr.vmem [resolvable:$true] %s442
          %445 = dma.hbm_to_vmem [thread:$0]  %s7, 16, %s443, [#allocation6]
        $region40: #{tcsn_forward.1} parent=11 // pred_fallthru
          _
        // Predicated region
        $region41: #{tcsn_forward.1} parent=11 // pred_check
          %p446 = pneg %p221
        $region42: #{tcsn_forward.1} parent=11 // pred_check_branch
          %448 = sbr.rel (%p446) target = $region44
        $region43: #{tcsn_forward.1} parent=11 // pred_region
          _
        $region44: #{tcsn_forward.1} parent=11 // pred_fallthru
          _
        // Predicated region
        $region45: #{tcsn_forward.1} parent=11 // pred_check
          %p449 = pneg %p242
        $region46: #{tcsn_forward.1} parent=11 // pred_check_branch
          %451 = sbr.rel (%p449) target = $region48
        $region47: #{tcsn_forward.1} parent=11 // pred_region
          _
        $region48: #{tcsn_forward.1} parent=11 // pred_fallthru
          _
        // Predicated region
        $region49: #{tcsn_forward.1} parent=11 // pred_check
          %p452 = pneg %p263
        $region50: #{tcsn_forward.1} parent=11 // pred_check_branch
          %454 = sbr.rel (%p452) target = $region52
        $region51: #{tcsn_forward.1} parent=11 // pred_region
          _
        $region52: #{tcsn_forward.1} parent=11 // pred_fallthru
          _
        // Predicated region
        $region53: #{tcsn_forward.1} parent=11 // pred_check
          %p455 = pneg %p284
        $region54: #{tcsn_forward.1} parent=11 // pred_check_branch
          %457 = sbr.rel (%p455) target = $region56
        $region55: #{tcsn_forward.1} parent=11 // pred_region
          _
        $region56: #{tcsn_forward.1} parent=11 // pred_fallthru
          _
        // Predicated region
        $region57: #{tcsn_forward.1} parent=11 // pred_check
          %p458 = pneg %p305
        $region58: #{tcsn_forward.1} parent=11 // pred_check_branch
          %460 = sbr.rel (%p458) target = $region60
        $region59: #{tcsn_forward.1} parent=11 // pred_region
          _
        $region60: #{tcsn_forward.1} parent=11 // pred_fallthru
          _
        // Predicated region
        $region61: #{tcsn_forward.1} parent=11 // pred_check
          %p461 = pneg %p326
        $region62: #{tcsn_forward.1} parent=11 // pred_check_branch
          %463 = sbr.rel (%p461) target = $region64
        $region63: #{tcsn_forward.1} parent=11 // pred_region
          %s465 = ssub.s32 2048, 2048
          %466 = vsyncadd [#allocation6], %s465
          %s467 = sshll.u32 [#allocation7], 4
          %s468 = int_to_ptr.vmem [resolvable:$true] %s467
          %473 = dma.hbm_to_vmem [thread:$0]  %s13, 2048, %s468, [#allocation6], 128, 128, 8
        $region64: #{tcsn_forward.1} parent=11 // pred_fallthru
          _
        // Predicated region
        $region65: #{tcsn_forward.1} parent=11 // pred_check
          %p474 = pneg %p347
        $region66: #{tcsn_forward.1} parent=11 // pred_check_branch
          %476 = sbr.rel (%p474) target = $region68
        $region67: #{tcsn_forward.1} parent=11 // pred_region
          _
        $region68: #{tcsn_forward.1} parent=11 // pred_fallthru
          _
        // Predicated region
        $region69: #{tcsn_forward.1} parent=11 // pred_check
          %p477 = pneg %p368
        $region70: #{tcsn_forward.1} parent=11 // pred_check_branch
          %479 = sbr.rel (%p477) target = $region72
        $region71: #{tcsn_forward.1} parent=11 // pred_region
          _
        $region72: #{tcsn_forward.1} parent=11 // pred_fallthru
          _
      $region12: #{tcsn_forward.1} parent=5 // pred_fallthru
        _
      %p480 = scmp.lt.s32.totalorder %s27, 2
      // Predicated region
      $region73: #{tcsn_forward.1} parent=5 // pred_check
        %p481 = pneg %p480
      $region74: #{tcsn_forward.1} parent=5 // pred_check_branch
        %483 = sbr.rel (%p481) target = $region76
      $region75: #{tcsn_forward.1} parent=5 // pred_region
        // Predicated region
        $region77: #{tcsn_forward.1} parent=75 // pred_check
          %p484 = pneg %p47
        $region78: #{tcsn_forward.1} parent=75 // pred_check_branch
          %486 = sbr.rel (%p484) target = $region80
        $region79: #{tcsn_forward.1} parent=75 // pred_region
          %p487 = scmp.lt.s32.totalorder %s27, 1
          %s488 = scalar_select %p487, %s27, 1
          %s489 = smul.addr %s488, 2
          %s490 = smul.addr %s489, 8
          %s491 = scalar_lea.vmem %s0, %s490
        $region80: #{tcsn_forward.1} parent=75 // pred_fallthru
          _
      $region76: #{tcsn_forward.1} parent=5 // pred_fallthru
        _
      %p492 = scmp.le.s32.totalorder 1, %s27
      %p493 = scmp.lt.s32.totalorder %s27, 3
      %p494 = pnand %p492, %p493
      %p495 = pneg %p494
      // Predicated region
      $region81: #{tcsn_forward.1} parent=5 // pred_check
        _
      $region82: #{tcsn_forward.1} parent=5 // pred_check_branch
        %497 = sbr.rel (%p494) target = $region84
      $region83: #{tcsn_forward.1} parent=5 // pred_region
        %s498 = ssub.s32 %s27, 1
        // Predicated region
        $region85: #{tcsn_forward.1} parent=83 // pred_check
          %p499 = pneg %p158
        $region86: #{tcsn_forward.1} parent=83 // pred_check_branch
          %501 = sbr.rel (%p499) target = $region88
        $region87: #{tcsn_forward.1} parent=83 // pred_region
          %502 = dma.done [#allocation3], 16
        $region88: #{tcsn_forward.1} parent=83 // pred_fallthru
          _
        // Predicated region
        $region89: #{tcsn_forward.1} parent=83 // pred_check
          %p503 = pneg %p200
        $region90: #{tcsn_forward.1} parent=83 // pred_check_branch
          %505 = sbr.rel (%p503) target = $region92
        $region91: #{tcsn_forward.1} parent=83 // pred_region
          %506 = dma.done [#allocation6], 16
        $region92: #{tcsn_forward.1} parent=83 // pred_fallthru
          _
        // Predicated region
        $region93: #{tcsn_forward.1} parent=83 // pred_check
          %p507 = pneg %p326
        $region94: #{tcsn_forward.1} parent=83 // pred_check_branch
          %509 = sbr.rel (%p507) target = $region96
        $region95: #{tcsn_forward.1} parent=83 // pred_region
          %510 = dma.done [#allocation6], 2048
        $region96: #{tcsn_forward.1} parent=83 // pred_fallthru
          _
        %p511 = scmp.lt.s32.totalorder %s32, 1
        %s512 = scalar_select %p511, %s32, 1
        %s513 = smul.addr %s512, 2
        %s514 = smul.addr %s513, 8
        %s515 = scalar_lea.vmem %s0, %s514
        %p516 = pneg %p53
        %p517 = pneg %p50
        %p518 = pneg %p74
        %p519 = pneg %p71
        %p520 = pneg %p95
        %p521 = pneg %p92
        %p522 = pneg %p116
        %p523 = pneg %p113
        %p524 = pneg %p137
        %p525 = pneg %p134
        %p526 = pneg %p158
        %p527 = pneg %p155
        %p528 = pneg %p179
        %p529 = pneg %p176
        %p530 = pneg %p200
        %p531 = pneg %p197
        %p532 = pneg %p221
        %p533 = pneg %p218
        %p534 = pneg %p242
        %p535 = pneg %p239
        %p536 = pneg %p263
        %p537 = pneg %p260
        %p538 = pneg %p284
        %p539 = pneg %p281
        %p540 = pneg %p305
        %p541 = pneg %p302
        %p542 = pneg %p326
        %p543 = pneg %p323
        %p544 = pneg %p347
        %p545 = pneg %p344
        %p546 = pneg %p368
        %p547 = pneg %p365
        %p548 = pneg %p394
        %p549 = pneg %p391
        %s550 = sand.u32 %s381, 1
        %s551 = scalar_lea.sflag [#allocation4], %s550
        %s552 = sand.u32 %s381, 1
        %s553 = scalar_lea.vmem [#allocation8], %s552
        %p554 = scmp.lt.s32.totalorder %s32, 1
        %s555 = scalar_select %p554, %s32, 1
        %s556 = smul.addr %s555, 2
        %s557 = smul.addr %s556, 8
        %s558 = scalar_lea.vmem %s0, %s557
        %v560 = vld [vmem:[%s15] sm:$0x1]
        %v561 = vld [vmem:[%s1] sm:$0xff]
        %v562 = vld [vmem:[%s1 + $0x8] sm:$0xff]
        %v563 = vld [vmem:[%s1 + $0x10] sm:$0xff]
        %v564 = vld [vmem:[%s1 + $0x18] sm:$0xff]
        %v565 = vld [vmem:[%s1 + $0x20] sm:$0xff]
        %v566 = vld [vmem:[%s1 + $0x28] sm:$0xff]
        %v567 = vld [vmem:[%s1 + $0x30] sm:$0xff]
        %v568 = vld [vmem:[%s1 + $0x38] sm:$0xff]
        %v569 = vld [vmem:[%s1 + $0x40] sm:$0xff]
        %v570 = vld [vmem:[%s1 + $0x48] sm:$0xff]
        %v571 = vld [vmem:[%s1 + $0x50] sm:$0xff]
        %v572 = vld [vmem:[%s1 + $0x58] sm:$0xff]
        %v573 = vld [vmem:[%s1 + $0x60] sm:$0xff]
        %v574 = vld [vmem:[%s1 + $0x68] sm:$0xff]
        %v575 = vld [vmem:[%s1 + $0x70] sm:$0xff]
        %v576 = vld [vmem:[%s1 + $0x78] sm:$0xff]
        %v577 = vld [vmem:[%s1 + $0x80] sm:$0xff]
        %v578 = vld [vmem:[%s1 + $0x88] sm:$0xff]
        %v579 = vld [vmem:[%s1 + $0x90] sm:$0xff]
        %v580 = vld [vmem:[%s1 + $0x98] sm:$0xff]
        %v581 = vld [vmem:[%s1 + $0xa0] sm:$0xff]
        %v582 = vld [vmem:[%s1 + $0xa8] sm:$0xff]
        %v583 = vld [vmem:[%s1 + $0xb0] sm:$0xff]
        %v584 = vld [vmem:[%s1 + $0xb8] sm:$0xff]
        %v585 = vld [vmem:[%s1 + $0xc0] sm:$0xff]
        %v586 = vld [vmem:[%s1 + $0xc8] sm:$0xff]
        %v587 = vld [vmem:[%s1 + $0xd0] sm:$0xff]
        %v588 = vld [vmem:[%s1 + $0xd8] sm:$0xff]
        %v589 = vld [vmem:[%s1 + $0xe0] sm:$0xff]
        %v590 = vld [vmem:[%s1 + $0xe8] sm:$0xff]
        %v591 = vld [vmem:[%s1 + $0xf0] sm:$0xff]
        %v592 = vld [vmem:[%s1 + $0xf8] sm:$0xff]
        %v593 = vld [vmem:[%s1 + $0x100] sm:$0xff]
        %v594 = vld [vmem:[%s1 + $0x108] sm:$0xff]
        %v595 = vld [vmem:[%s1 + $0x110] sm:$0xff]
        %v596 = vld [vmem:[%s1 + $0x118] sm:$0xff]
        %v597 = vld [vmem:[%s1 + $0x120] sm:$0xff]
        %v598 = vld [vmem:[%s1 + $0x128] sm:$0xff]
        %v599 = vld [vmem:[%s1 + $0x130] sm:$0xff]
        %v600 = vld [vmem:[%s1 + $0x138] sm:$0xff]
        %v601 = vld [vmem:[%s1 + $0x140] sm:$0xff]
        %v602 = vld [vmem:[%s1 + $0x148] sm:$0xff]
        %v603 = vld [vmem:[%s1 + $0x150] sm:$0xff]
        %v604 = vld [vmem:[%s1 + $0x158] sm:$0xff]
        %v605 = vld [vmem:[%s1 + $0x160] sm:$0xff]
        %v606 = vld [vmem:[%s1 + $0x168] sm:$0xff]
        %v607 = vld [vmem:[%s1 + $0x170] sm:$0xff]
        %v608 = vld [vmem:[%s1 + $0x178] sm:$0xff]
        %v609 = vld [vmem:[%s1 + $0x180] sm:$0xff]
        %v610 = vld [vmem:[%s1 + $0x188] sm:$0xff]
        %v611 = vld [vmem:[%s1 + $0x190] sm:$0xff]
        %v612 = vld [vmem:[%s1 + $0x198] sm:$0xff]
        %v613 = vld [vmem:[%s1 + $0x1a0] sm:$0xff]
        %v614 = vld [vmem:[%s1 + $0x1a8] sm:$0xff]
        %v615 = vld [vmem:[%s1 + $0x1b0] sm:$0xff]
        %v616 = vld [vmem:[%s1 + $0x1b8] sm:$0xff]
        %v617 = vld [vmem:[%s1 + $0x1c0] sm:$0xff]
        %v618 = vld [vmem:[%s1 + $0x1c8] sm:$0xff]
        %v619 = vld [vmem:[%s1 + $0x1d0] sm:$0xff]
        %v620 = vld [vmem:[%s1 + $0x1d8] sm:$0xff]
        %v621 = vld [vmem:[%s1 + $0x1e0] sm:$0xff]
        %v622 = vld [vmem:[%s1 + $0x1e8] sm:$0xff]
        %v623 = vld [vmem:[%s1 + $0x1f0] sm:$0xff]
        %v624 = vld [vmem:[%s1 + $0x1f8] sm:$0xff]
        %v625 = vld [vmem:[%s558] sm:$0xff]
        %v626 = vld [vmem:[%s558 + $0x8] sm:$0xff]
        %627 = vmatprep.subr.mxu0 %v562
        %628 = vmatpush1.msra.mxu0 %v561
        %629 = vmatprep.subr.mxu0 %v566
        %630 = vmatpush1.msra.mxu0 %v565
        %631 = vmatprep.subr.mxu0 %v570
        %632 = vmatpush1.msra.mxu0 %v569
        %633 = vmatprep.subr.mxu0 %v574
        %634 = vmatpush1.msra.mxu0 %v573
        %635 = vmatprep.subr.mxu0 %v578
        %636 = vmatpush1.msra.mxu0 %v577
        %637 = vmatprep.subr.mxu0 %v582
        %638 = vmatpush1.msra.mxu0 %v581
        %639 = vmatprep.subr.mxu0 %v586
        %640 = vmatpush1.msra.mxu0 %v585
        %641 = vmatprep.subr.mxu0 %v590
        %642 = vmatpush1.msra.mxu0 %v589
        %643 = vmatprep.subr.mxu0 %v594
        %644 = vmatpush1.msra.mxu0 %v593
        %645 = vmatprep.subr.mxu0 %v598
        %646 = vmatpush1.msra.mxu0 %v597
        %647 = vmatprep.subr.mxu0 %v602
        %648 = vmatpush1.msra.mxu0 %v601
        %649 = vmatprep.subr.mxu0 %v606
        %650 = vmatpush1.msra.mxu0 %v605
        %651 = vmatprep.subr.mxu0 %v610
        %652 = vmatpush1.msra.mxu0 %v609
        %653 = vmatprep.subr.mxu0 %v614
        %654 = vmatpush1.msra.mxu0 %v613
        %655 = vmatprep.subr.mxu0 %v618
        %656 = vmatpush1.msra.mxu0 %v617
        %657 = vmatprep.subr.mxu0 %v622
        %658 = vmatpush1.msra.mxu0 %v621
        %659 = vmatprep.subr.mxu0 0.0
        %660 = vmatpush1.msra.mxu0 0.0
        %661 = vmatprep.subr.mxu0 0.0
        %662 = vmatpush1.msra.mxu0 0.0
        %663 = vmatprep.subr.mxu0 0.0
        %664 = vmatpush1.msra.mxu0 0.0
        %665 = vmatprep.subr.mxu0 0.0
        %666 = vmatpush1.msra.mxu0 0.0
        %667 = vmatprep.subr.mxu0 0.0
        %668 = vmatpush1.msra.mxu0 0.0
        %669 = vmatprep.subr.mxu0 0.0
        %670 = vmatpush1.msra.mxu0 0.0
        %671 = vmatprep.subr.mxu0 0.0
        %672 = vmatpush1.msra.mxu0 0.0
        %673 = vmatprep.subr.mxu0 0.0
        %674 = vmatpush1.msra.mxu0 0.0
        %675 = vmatprep.subr.mxu0 0.0
        %676 = vmatpush1.msra.mxu0 0.0
        %677 = vmatprep.subr.mxu0 0.0
        %678 = vmatpush1.msra.mxu0 0.0
        %679 = vmatprep.subr.mxu0 0.0
        %680 = vmatpush1.msra.mxu0 0.0
        %681 = vmatprep.subr.mxu0 0.0
        %682 = vmatpush1.msra.mxu0 0.0
        %683 = vmatprep.subr.mxu0 0.0
        %684 = vmatpush1.msra.mxu0 0.0
        %685 = vmatprep.subr.mxu0 0.0
        %686 = vmatpush1.msra.mxu0 0.0
        %687 = vmatprep.subr.mxu0 0.0
        %688 = vmatpush1.msra.mxu0 0.0
        %689 = vmatprep.subr.mxu0 0.0
        %690 = vmatpush1.msra.mxu0 0.0
        %691 = vmatprep.mubr.f32.mxu0 0.0
        %692 = vmatmul.mubr.f32.gmra.mrb[0].mxu0 %v625
        %v693 = vpop.f32.mrb[0].mxu0
        %v694 = vadd.f32 0.0, %v693
        %v695 = vpop.f32.mrb[0].mxu0
        %v696 = vadd.f32 0.0, %v695
        %697 = vmatprep.mubr.f32.mxu0 0.0
        %698 = vmatmul.mubr.f32.gmra.mrb[0].mxu0 %v626
        %v699 = vpop.f32.mrb[0].mxu0
        %v700 = vadd.f32 0.0, %v699
        %v701 = vpop.f32.mrb[0].mxu0
        %v702 = vadd.f32 0.0, %v701
        %703 = vdwg.mxu0
        %704 = vmatprep.subr.mxu0 %v564
        %705 = vmatpush1.msra.mxu0 %v563
        %706 = vmatprep.subr.mxu0 %v568
        %707 = vmatpush1.msra.mxu0 %v567
        %708 = vmatprep.subr.mxu0 %v572
        %709 = vmatpush1.msra.mxu0 %v571
        %710 = vmatprep.subr.mxu0 %v576
        %711 = vmatpush1.msra.mxu0 %v575
        %712 = vmatprep.subr.mxu0 %v580
        %713 = vmatpush1.msra.mxu0 %v579
        %714 = vmatprep.subr.mxu0 %v584
        %715 = vmatpush1.msra.mxu0 %v583
        %716 = vmatprep.subr.mxu0 %v588
        %717 = vmatpush1.msra.mxu0 %v587
        %718 = vmatprep.subr.mxu0 %v592
        %719 = vmatpush1.msra.mxu0 %v591
        %720 = vmatprep.subr.mxu0 %v596
        %721 = vmatpush1.msra.mxu0 %v595
        %722 = vmatprep.subr.mxu0 %v600
        %723 = vmatpush1.msra.mxu0 %v599
        %724 = vmatprep.subr.mxu0 %v604
        %725 = vmatpush1.msra.mxu0 %v603
        %726 = vmatprep.subr.mxu0 %v608
        %727 = vmatpush1.msra.mxu0 %v607
        %728 = vmatprep.subr.mxu0 %v612
        %729 = vmatpush1.msra.mxu0 %v611
        %730 = vmatprep.subr.mxu0 %v616
        %731 = vmatpush1.msra.mxu0 %v615
        %732 = vmatprep.subr.mxu0 %v620
        %733 = vmatpush1.msra.mxu0 %v619
        %734 = vmatprep.subr.mxu0 %v624
        %735 = vmatpush1.msra.mxu0 %v623
        %736 = vmatprep.subr.mxu0 0.0
        %737 = vmatpush1.msra.mxu0 0.0
        %738 = vmatprep.subr.mxu0 0.0
        %739 = vmatpush1.msra.mxu0 0.0
        %740 = vmatprep.subr.mxu0 0.0
        %741 = vmatpush1.msra.mxu0 0.0
        %742 = vmatprep.subr.mxu0 0.0
        %743 = vmatpush1.msra.mxu0 0.0
        %744 = vmatprep.subr.mxu0 0.0
        %745 = vmatpush1.msra.mxu0 0.0
        %746 = vmatprep.subr.mxu0 0.0
        %747 = vmatpush1.msra.mxu0 0.0
        %748 = vmatprep.subr.mxu0 0.0
        %749 = vmatpush1.msra.mxu0 0.0
        %750 = vmatprep.subr.mxu0 0.0
        %751 = vmatpush1.msra.mxu0 0.0
        %752 = vmatprep.subr.mxu0 0.0
        %753 = vmatpush1.msra.mxu0 0.0
        %754 = vmatprep.subr.mxu0 0.0
        %755 = vmatpush1.msra.mxu0 0.0
        %756 = vmatprep.subr.mxu0 0.0
        %757 = vmatpush1.msra.mxu0 0.0
        %758 = vmatprep.subr.mxu0 0.0
        %759 = vmatpush1.msra.mxu0 0.0
        %760 = vmatprep.subr.mxu0 0.0
        %761 = vmatpush1.msra.mxu0 0.0
        %762 = vmatprep.subr.mxu0 0.0
        %763 = vmatpush1.msra.mxu0 0.0
        %764 = vmatprep.subr.mxu0 0.0
        %765 = vmatpush1.msra.mxu0 0.0
        %766 = vmatprep.subr.mxu0 0.0
        %767 = vmatpush1.msra.mxu0 0.0
        %768 = vmatprep.mubr.f32.mxu0 0.0
        %769 = vmatmul.mubr.f32.gmra.mrb[0].mxu0 %v625
        %v770 = vpop.f32.mrb[0].mxu0
        %v771 = vadd.f32 0.0, %v770
        %v772 = vpop.f32.mrb[0].mxu0
        %v773 = vadd.f32 0.0, %v772
        %774 = vmatprep.mubr.f32.mxu0 0.0
        %775 = vmatmul.mubr.f32.gmra.mrb[0].mxu0 %v626
        %v776 = vpop.f32.mrb[0].mxu0
        %v777 = vadd.f32 0.0, %v776
        %v778 = vpop.f32.mrb[0].mxu0
        %v779 = vadd.f32 0.0, %v778
        %780 = vdwg.mxu0
        %v781 = vmax.f32 %v694, 0.0
        %v782 = vmax.f32 %v696, 0.0
        %v783 = vmax.f32 %v771, 0.0
        %v784 = vmax.f32 %v773, 0.0
        %v785 = vmax.f32 %v700, 0.0
        %v786 = vmax.f32 %v702, 0.0
        %v787 = vmax.f32 %v777, 0.0
        %v788 = vmax.f32 %v779, 0.0
        %v789 = vpack.c.bf16 %v785, %v781
        %v790 = vpack.c.bf16 %v786, %v782
        %v791 = vpack.c.bf16 %v787, %v783
        %v792 = vpack.c.bf16 %v788, %v784
        %v794 = vshrl.u32 %v789, 16
        %v796 = vshll.u32 %v789, 16
        %v798 = vrot.slane %v796, 1
        %v799 = vor.u32 %v794, %v798
        %v801 = vshrl.u32 %v790, 16
        %v803 = vshll.u32 %v790, 16
        %v805 = vrot.slane %v803, 1
        %v806 = vor.u32 %v801, %v805
        %v808 = vshrl.u32 %v791, 16
        %v810 = vshll.u32 %v791, 16
        %v812 = vrot.slane %v810, 1
        %v813 = vor.u32 %v808, %v812
        %v815 = vshrl.u32 %v792, 16
        %v817 = vshll.u32 %v792, 16
        %v819 = vrot.slane %v817, 1
        %v820 = vor.u32 %v815, %v819
        %v829 = vrot.slane %v789, 1
        %v830 = vrot.slane %v790, 1
        %v831 = vrot.slane %v791, 1
        %v832 = vrot.slane %v792, 1
        %v837 = vrot.slane %v794, 1
        %v838 = vrot.slane %v796, 2
        %v839 = vor.u32 %v837, %v838
        %v840 = vrot.slane %v801, 1
        %v841 = vrot.slane %v803, 2
        %v842 = vor.u32 %v840, %v841
        %v843 = vrot.slane %v808, 1
        %v844 = vrot.slane %v810, 2
        %v845 = vor.u32 %v843, %v844
        %v846 = vrot.slane %v815, 1
        %v847 = vrot.slane %v817, 2
        %v848 = vor.u32 %v846, %v847
        %v853 = vld [vmem:[%s2] sm:$0xf]
        %v854 = vld [vmem:[%s2 + $0x4] sm:$0xf]
        %v855 = vld [vmem:[%s2 + $0x8] sm:$0xf]
        %v856 = vld [vmem:[%s2 + $0xc] sm:$0xf]
        %v857 = vld [vmem:[%s2 + $0x10] sm:$0xf]
        %v858 = vld [vmem:[%s2 + $0x14] sm:$0xf]
        %v859 = vld [vmem:[%s2 + $0x18] sm:$0xf]
        %v860 = vld [vmem:[%s2 + $0x1c] sm:$0xf]
        %v861 = vld [vmem:[%s2 + $0x20] sm:$0xf]
        %v862 = vld [vmem:[%s2 + $0x24] sm:$0xf]
        %v863 = vld [vmem:[%s2 + $0x28] sm:$0xf]
        %v864 = vld [vmem:[%s2 + $0x2c] sm:$0xf]
        %v865 = vld [vmem:[%s2 + $0x30] sm:$0xf]
        %v866 = vld [vmem:[%s2 + $0x34] sm:$0xf]
        %v867 = vld [vmem:[%s2 + $0x38] sm:$0xf]
        %v868 = vld [vmem:[%s2 + $0x3c] sm:$0xf]
        %v869 = vld [vmem:[%s2 + $0x40] sm:$0xf]
        %v870 = vld [vmem:[%s2 + $0x44] sm:$0xf]
        %v871 = vld [vmem:[%s2 + $0x48] sm:$0xf]
        %v872 = vld [vmem:[%s2 + $0x4c] sm:$0xf]
        %v873 = vld [vmem:[%s2 + $0x50] sm:$0xf]
        %v874 = vld [vmem:[%s2 + $0x54] sm:$0xf]
        %v875 = vld [vmem:[%s2 + $0x58] sm:$0xf]
        %v876 = vld [vmem:[%s2 + $0x5c] sm:$0xf]
        %v877 = vld [vmem:[%s2 + $0x60] sm:$0xf]
        %v878 = vld [vmem:[%s2 + $0x64] sm:$0xf]
        %v879 = vld [vmem:[%s2 + $0x68] sm:$0xf]
        %v880 = vld [vmem:[%s2 + $0x6c] sm:$0xf]
        %v881 = vld [vmem:[%s2 + $0x70] sm:$0xf]
        %v882 = vld [vmem:[%s2 + $0x74] sm:$0xf]
        %v883 = vld [vmem:[%s2 + $0x78] sm:$0xf]
        %v884 = vld [vmem:[%s2 + $0x7c] sm:$0xf]
        %v885 = vld [vmem:[%s2 + $0x80] sm:$0xf]
        %v886 = vld [vmem:[%s2 + $0x84] sm:$0xf]
        %v887 = vld [vmem:[%s2 + $0x88] sm:$0xf]
        %v888 = vld [vmem:[%s2 + $0x8c] sm:$0xf]
        %v889 = vld [vmem:[%s2 + $0x90] sm:$0xf]
        %v890 = vld [vmem:[%s2 + $0x94] sm:$0xf]
        %v891 = vld [vmem:[%s2 + $0x98] sm:$0xf]
        %v892 = vld [vmem:[%s2 + $0x9c] sm:$0xf]
        %v893 = vld [vmem:[%s2 + $0xa0] sm:$0xf]
        %v894 = vld [vmem:[%s2 + $0xa4] sm:$0xf]
        %v895 = vld [vmem:[%s2 + $0xa8] sm:$0xf]
        %v896 = vld [vmem:[%s2 + $0xac] sm:$0xf]
        %v897 = vld [vmem:[%s2 + $0xb0] sm:$0xf]
        %v898 = vld [vmem:[%s2 + $0xb4] sm:$0xf]
        %v899 = vld [vmem:[%s2 + $0xb8] sm:$0xf]
        %v900 = vld [vmem:[%s2 + $0xbc] sm:$0xf]
        %v901 = vld [vmem:[%s2 + $0xc0] sm:$0xf]
        %v902 = vld [vmem:[%s2 + $0xc4] sm:$0xf]
        %v903 = vld [vmem:[%s2 + $0xc8] sm:$0xf]
        %v904 = vld [vmem:[%s2 + $0xcc] sm:$0xf]
        %v905 = vld [vmem:[%s2 + $0xd0] sm:$0xf]
        %v906 = vld [vmem:[%s2 + $0xd4] sm:$0xf]
        %v907 = vld [vmem:[%s2 + $0xd8] sm:$0xf]
        %v908 = vld [vmem:[%s2 + $0xdc] sm:$0xf]
        %v909 = vld [vmem:[%s2 + $0xe0] sm:$0xf]
        %v910 = vld [vmem:[%s2 + $0xe4] sm:$0xf]
        %v911 = vld [vmem:[%s2 + $0xe8] sm:$0xf]
        %v912 = vld [vmem:[%s2 + $0xec] sm:$0xf]
        %v913 = vld [vmem:[%s2 + $0xf0] sm:$0xf]
        %v914 = vld [vmem:[%s2 + $0xf4] sm:$0xf]
        %v915 = vld [vmem:[%s2 + $0xf8] sm:$0xf]
        %v916 = vld [vmem:[%s2 + $0xfc] sm:$0xf]
        %v917 = vld [vmem:[%s2 + $0x100] sm:$0xf]
        %v918 = vld [vmem:[%s2 + $0x104] sm:$0xf]
        %v919 = vld [vmem:[%s2 + $0x108] sm:$0xf]
        %v920 = vld [vmem:[%s2 + $0x10c] sm:$0xf]
        %v921 = vld [vmem:[%s2 + $0x110] sm:$0xf]
        %v922 = vld [vmem:[%s2 + $0x114] sm:$0xf]
        %v923 = vld [vmem:[%s2 + $0x118] sm:$0xf]
        %v924 = vld [vmem:[%s2 + $0x11c] sm:$0xf]
        %v925 = vld [vmem:[%s2 + $0x120] sm:$0xf]
        %v926 = vld [vmem:[%s2 + $0x124] sm:$0xf]
        %v927 = vld [vmem:[%s2 + $0x128] sm:$0xf]
        %v928 = vld [vmem:[%s2 + $0x12c] sm:$0xf]
        %v929 = vld [vmem:[%s2 + $0x130] sm:$0xf]
        %v930 = vld [vmem:[%s2 + $0x134] sm:$0xf]
        %v931 = vld [vmem:[%s2 + $0x138] sm:$0xf]
        %v932 = vld [vmem:[%s2 + $0x13c] sm:$0xf]
        %v933 = vld [vmem:[%s2 + $0x140] sm:$0xf]
        %v934 = vld [vmem:[%s2 + $0x144] sm:$0xf]
        %v935 = vld [vmem:[%s2 + $0x148] sm:$0xf]
        %v936 = vld [vmem:[%s2 + $0x14c] sm:$0xf]
        %v937 = vld [vmem:[%s2 + $0x150] sm:$0xf]
        %v938 = vld [vmem:[%s2 + $0x154] sm:$0xf]
        %v939 = vld [vmem:[%s2 + $0x158] sm:$0xf]
        %v940 = vld [vmem:[%s2 + $0x15c] sm:$0xf]
        %v941 = vld [vmem:[%s2 + $0x160] sm:$0xf]
        %v942 = vld [vmem:[%s2 + $0x164] sm:$0xf]
        %v943 = vld [vmem:[%s2 + $0x168] sm:$0xf]
        %v944 = vld [vmem:[%s2 + $0x16c] sm:$0xf]
        %v945 = vld [vmem:[%s2 + $0x170] sm:$0xf]
        %v946 = vld [vmem:[%s2 + $0x174] sm:$0xf]
        %v947 = vld [vmem:[%s2 + $0x178] sm:$0xf]
        %v948 = vld [vmem:[%s2 + $0x17c] sm:$0xf]
        %v949 = vld [vmem:[%s2 + $0x180] sm:$0xf]
        %v950 = vld [vmem:[%s2 + $0x184] sm:$0xf]
        %v951 = vld [vmem:[%s2 + $0x188] sm:$0xf]
        %v952 = vld [vmem:[%s2 + $0x18c] sm:$0xf]
        %v953 = vld [vmem:[%s2 + $0x190] sm:$0xf]
        %v954 = vld [vmem:[%s2 + $0x194] sm:$0xf]
        %v955 = vld [vmem:[%s2 + $0x198] sm:$0xf]
        %v956 = vld [vmem:[%s2 + $0x19c] sm:$0xf]
        %v957 = vld [vmem:[%s2 + $0x1a0] sm:$0xf]
        %v958 = vld [vmem:[%s2 + $0x1a4] sm:$0xf]
        %v959 = vld [vmem:[%s2 + $0x1a8] sm:$0xf]
        %v960 = vld [vmem:[%s2 + $0x1ac] sm:$0xf]
        %v961 = vld [vmem:[%s2 + $0x1b0] sm:$0xf]
        %v962 = vld [vmem:[%s2 + $0x1b4] sm:$0xf]
        %v963 = vld [vmem:[%s2 + $0x1b8] sm:$0xf]
        %v964 = vld [vmem:[%s2 + $0x1bc] sm:$0xf]
        %v965 = vld [vmem:[%s2 + $0x1c0] sm:$0xf]
        %v966 = vld [vmem:[%s2 + $0x1c4] sm:$0xf]
        %v967 = vld [vmem:[%s2 + $0x1c8] sm:$0xf]
        %v968 = vld [vmem:[%s2 + $0x1cc] sm:$0xf]
        %v969 = vld [vmem:[%s2 + $0x1d0] sm:$0xf]
        %v970 = vld [vmem:[%s2 + $0x1d4] sm:$0xf]
        %v971 = vld [vmem:[%s2 + $0x1d8] sm:$0xf]
        %v972 = vld [vmem:[%s2 + $0x1dc] sm:$0xf]
        %v973 = vld [vmem:[%s2 + $0x1e0] sm:$0xf]
        %v974 = vld [vmem:[%s2 + $0x1e4] sm:$0xf]
        %v975 = vld [vmem:[%s2 + $0x1e8] sm:$0xf]
        %v976 = vld [vmem:[%s2 + $0x1ec] sm:$0xf]
        %v977 = vld [vmem:[%s2 + $0x1f0] sm:$0xf]
        %v978 = vld [vmem:[%s2 + $0x1f4] sm:$0xf]
        %v979 = vld [vmem:[%s2 + $0x1f8] sm:$0xf]
        %v980 = vld [vmem:[%s2 + $0x1fc] sm:$0xf]
        %v981 = vld [vmem:[%s2 + $0x200] sm:$0xf]
        %v982 = vld [vmem:[%s2 + $0x204] sm:$0xf]
        %v983 = vld [vmem:[%s2 + $0x208] sm:$0xf]
        %v984 = vld [vmem:[%s2 + $0x20c] sm:$0xf]
        %v985 = vld [vmem:[%s2 + $0x210] sm:$0xf]
        %v986 = vld [vmem:[%s2 + $0x214] sm:$0xf]
        %v987 = vld [vmem:[%s2 + $0x218] sm:$0xf]
        %v988 = vld [vmem:[%s2 + $0x21c] sm:$0xf]
        %v989 = vld [vmem:[%s2 + $0x220] sm:$0xf]
        %v990 = vld [vmem:[%s2 + $0x224] sm:$0xf]
        %v991 = vld [vmem:[%s2 + $0x228] sm:$0xf]
        %v992 = vld [vmem:[%s2 + $0x22c] sm:$0xf]
        %v993 = vld [vmem:[%s2 + $0x230] sm:$0xf]
        %v994 = vld [vmem:[%s2 + $0x234] sm:$0xf]
        %v995 = vld [vmem:[%s2 + $0x238] sm:$0xf]
        %v996 = vld [vmem:[%s2 + $0x23c] sm:$0xf]
        %v997 = vld [vmem:[%s2 + $0x240] sm:$0xf]
        %v998 = vld [vmem:[%s2 + $0x244] sm:$0xf]
        %v999 = vld [vmem:[%s2 + $0x248] sm:$0xf]
        %v1000 = vld [vmem:[%s2 + $0x24c] sm:$0xf]
        %v1001 = vld [vmem:[%s2 + $0x250] sm:$0xf]
        %v1002 = vld [vmem:[%s2 + $0x254] sm:$0xf]
        %v1003 = vld [vmem:[%s2 + $0x258] sm:$0xf]
        %v1004 = vld [vmem:[%s2 + $0x25c] sm:$0xf]
        %v1005 = vld [vmem:[%s2 + $0x260] sm:$0xf]
        %v1006 = vld [vmem:[%s2 + $0x264] sm:$0xf]
        %v1007 = vld [vmem:[%s2 + $0x268] sm:$0xf]
        %v1008 = vld [vmem:[%s2 + $0x26c] sm:$0xf]
        %v1009 = vld [vmem:[%s2 + $0x270] sm:$0xf]
        %v1010 = vld [vmem:[%s2 + $0x274] sm:$0xf]
        %v1011 = vld [vmem:[%s2 + $0x278] sm:$0xf]
        %v1012 = vld [vmem:[%s2 + $0x27c] sm:$0xf]
        %v1013 = vld [vmem:[%s2 + $0x280] sm:$0xf]
        %v1014 = vld [vmem:[%s2 + $0x284] sm:$0xf]
        %v1015 = vld [vmem:[%s2 + $0x288] sm:$0xf]
        %v1016 = vld [vmem:[%s2 + $0x28c] sm:$0xf]
        %v1017 = vld [vmem:[%s2 + $0x290] sm:$0xf]
        %v1018 = vld [vmem:[%s2 + $0x294] sm:$0xf]
        %v1019 = vld [vmem:[%s2 + $0x298] sm:$0xf]
        %v1020 = vld [vmem:[%s2 + $0x29c] sm:$0xf]
        %v1021 = vld [vmem:[%s2 + $0x2a0] sm:$0xf]
        %v1022 = vld [vmem:[%s2 + $0x2a4] sm:$0xf]
        %v1023 = vld [vmem:[%s2 + $0x2a8] sm:$0xf]
        %v1024 = vld [vmem:[%s2 + $0x2ac] sm:$0xf]
        %v1025 = vld [vmem:[%s2 + $0x2b0] sm:$0xf]
        %v1026 = vld [vmem:[%s2 + $0x2b4] sm:$0xf]
        %v1027 = vld [vmem:[%s2 + $0x2b8] sm:$0xf]
        %v1028 = vld [vmem:[%s2 + $0x2bc] sm:$0xf]
        %v1029 = vld [vmem:[%s2 + $0x2c0] sm:$0xf]
        %v1030 = vld [vmem:[%s2 + $0x2c4] sm:$0xf]
        %v1031 = vld [vmem:[%s2 + $0x2c8] sm:$0xf]
        %v1032 = vld [vmem:[%s2 + $0x2cc] sm:$0xf]
        %v1033 = vld [vmem:[%s2 + $0x2d0] sm:$0xf]
        %v1034 = vld [vmem:[%s2 + $0x2d4] sm:$0xf]
        %v1035 = vld [vmem:[%s2 + $0x2d8] sm:$0xf]
        %v1036 = vld [vmem:[%s2 + $0x2dc] sm:$0xf]
        %v1037 = vld [vmem:[%s2 + $0x2e0] sm:$0xf]
        %v1038 = vld [vmem:[%s2 + $0x2e4] sm:$0xf]
        %v1039 = vld [vmem:[%s2 + $0x2e8] sm:$0xf]
        %v1040 = vld [vmem:[%s2 + $0x2ec] sm:$0xf]
        %v1041 = vld [vmem:[%s2 + $0x2f0] sm:$0xf]
        %v1042 = vld [vmem:[%s2 + $0x2f4] sm:$0xf]
        %v1043 = vld [vmem:[%s2 + $0x2f8] sm:$0xf]
        %v1044 = vld [vmem:[%s2 + $0x2fc] sm:$0xf]
        %v1045 = vld [vmem:[%s2 + $0x300] sm:$0xf]
        %v1046 = vld [vmem:[%s2 + $0x304] sm:$0xf]
        %v1047 = vld [vmem:[%s2 + $0x308] sm:$0xf]
        %v1048 = vld [vmem:[%s2 + $0x30c] sm:$0xf]
        %v1049 = vld [vmem:[%s2 + $0x310] sm:$0xf]
        %v1050 = vld [vmem:[%s2 + $0x314] sm:$0xf]
        %v1051 = vld [vmem:[%s2 + $0x318] sm:$0xf]
        %v1052 = vld [vmem:[%s2 + $0x31c] sm:$0xf]
        %v1053 = vld [vmem:[%s2 + $0x320] sm:$0xf]
        %v1054 = vld [vmem:[%s2 + $0x324] sm:$0xf]
        %v1055 = vld [vmem:[%s2 + $0x328] sm:$0xf]
        %v1056 = vld [vmem:[%s2 + $0x32c] sm:$0xf]
        %v1057 = vld [vmem:[%s2 + $0x330] sm:$0xf]
        %v1058 = vld [vmem:[%s2 + $0x334] sm:$0xf]
        %v1059 = vld [vmem:[%s2 + $0x338] sm:$0xf]
        %v1060 = vld [vmem:[%s2 + $0x33c] sm:$0xf]
        %v1061 = vld [vmem:[%s2 + $0x340] sm:$0xf]
        %v1062 = vld [vmem:[%s2 + $0x344] sm:$0xf]
        %v1063 = vld [vmem:[%s2 + $0x348] sm:$0xf]
        %v1064 = vld [vmem:[%s2 + $0x34c] sm:$0xf]
        %v1065 = vld [vmem:[%s2 + $0x350] sm:$0xf]
        %v1066 = vld [vmem:[%s2 + $0x354] sm:$0xf]
        %v1067 = vld [vmem:[%s2 + $0x358] sm:$0xf]
        %v1068 = vld [vmem:[%s2 + $0x35c] sm:$0xf]
        %v1069 = vld [vmem:[%s2 + $0x360] sm:$0xf]
        %v1070 = vld [vmem:[%s2 + $0x364] sm:$0xf]
        %v1071 = vld [vmem:[%s2 + $0x368] sm:$0xf]
        %v1072 = vld [vmem:[%s2 + $0x36c] sm:$0xf]
        %v1073 = vld [vmem:[%s2 + $0x370] sm:$0xf]
        %v1074 = vld [vmem:[%s2 + $0x374] sm:$0xf]
        %v1075 = vld [vmem:[%s2 + $0x378] sm:$0xf]
        %v1076 = vld [vmem:[%s2 + $0x37c] sm:$0xf]
        %v1077 = vld [vmem:[%s2 + $0x380] sm:$0xf]
        %v1078 = vld [vmem:[%s2 + $0x384] sm:$0xf]
        %v1079 = vld [vmem:[%s2 + $0x388] sm:$0xf]
        %v1080 = vld [vmem:[%s2 + $0x38c] sm:$0xf]
        %v1081 = vld [vmem:[%s2 + $0x390] sm:$0xf]
        %v1082 = vld [vmem:[%s2 + $0x394] sm:$0xf]
        %v1083 = vld [vmem:[%s2 + $0x398] sm:$0xf]
        %v1084 = vld [vmem:[%s2 + $0x39c] sm:$0xf]
        %v1085 = vld [vmem:[%s2 + $0x3a0] sm:$0xf]
        %v1086 = vld [vmem:[%s2 + $0x3a4] sm:$0xf]
        %v1087 = vld [vmem:[%s2 + $0x3a8] sm:$0xf]
        %v1088 = vld [vmem:[%s2 + $0x3ac] sm:$0xf]
        %v1089 = vld [vmem:[%s2 + $0x3b0] sm:$0xf]
        %v1090 = vld [vmem:[%s2 + $0x3b4] sm:$0xf]
        %v1091 = vld [vmem:[%s2 + $0x3b8] sm:$0xf]
        %v1092 = vld [vmem:[%s2 + $0x3bc] sm:$0xf]
        %v1093 = vld [vmem:[%s2 + $0x3c0] sm:$0xf]
        %v1094 = vld [vmem:[%s2 + $0x3c4] sm:$0xf]
        %v1095 = vld [vmem:[%s2 + $0x3c8] sm:$0xf]
        %v1096 = vld [vmem:[%s2 + $0x3cc] sm:$0xf]
        %v1097 = vld [vmem:[%s2 + $0x3d0] sm:$0xf]
        %v1098 = vld [vmem:[%s2 + $0x3d4] sm:$0xf]
        %v1099 = vld [vmem:[%s2 + $0x3d8] sm:$0xf]
        %v1100 = vld [vmem:[%s2 + $0x3dc] sm:$0xf]
        %v1101 = vld [vmem:[%s2 + $0x3e0] sm:$0xf]
        %v1102 = vld [vmem:[%s2 + $0x3e4] sm:$0xf]
        %v1103 = vld [vmem:[%s2 + $0x3e8] sm:$0xf]
        %v1104 = vld [vmem:[%s2 + $0x3ec] sm:$0xf]
        %v1105 = vld [vmem:[%s2 + $0x3f0] sm:$0xf]
        %v1106 = vld [vmem:[%s2 + $0x3f4] sm:$0xf]
        %v1107 = vld [vmem:[%s2 + $0x3f8] sm:$0xf]
        %v1108 = vld [vmem:[%s2 + $0x3fc] sm:$0xf]
        %v1109 = vld [vmem:[%s3] sm:$0x1]
        %v1111 = vlaneseq
        %v1112 = vshrl.u32 %v1111, 7
        %v1113 = vsub.s32 0, %v1112
        %v1114 = vrot.slane %v1109, %v1113
        %v1372 = vunpack.c.l.b16 %v853
        %v1373 = vunpack.c.l.b16 %v854
        %v1374 = vunpack.c.l.b16 %v855
        %v1375 = vunpack.c.l.b16 %v856
        %v1376 = vunpack.c.l.b16 %v857
        %v1377 = vunpack.c.l.b16 %v858
        %v1378 = vunpack.c.l.b16 %v859
        %v1379 = vunpack.c.l.b16 %v860
        %v1380 = vunpack.c.l.b16 %v861
        %v1381 = vunpack.c.l.b16 %v862
        %v1382 = vunpack.c.l.b16 %v863
        %v1383 = vunpack.c.l.b16 %v864
        %v1384 = vunpack.c.l.b16 %v865
        %v1385 = vunpack.c.l.b16 %v866
        %v1386 = vunpack.c.l.b16 %v867
        %v1387 = vunpack.c.l.b16 %v868
        %v1388 = vunpack.c.l.b16 %v869
        %v1389 = vunpack.c.l.b16 %v870
        %v1390 = vunpack.c.l.b16 %v871
        %v1391 = vunpack.c.l.b16 %v872
        %v1392 = vunpack.c.l.b16 %v873
        %v1393 = vunpack.c.l.b16 %v874
        %v1394 = vunpack.c.l.b16 %v875
        %v1395 = vunpack.c.l.b16 %v876
        %v1396 = vunpack.c.l.b16 %v877
        %v1397 = vunpack.c.l.b16 %v878
        %v1398 = vunpack.c.l.b16 %v879
        %v1399 = vunpack.c.l.b16 %v880
        %v1400 = vunpack.c.l.b16 %v881
        %v1401 = vunpack.c.l.b16 %v882
        %v1402 = vunpack.c.l.b16 %v883
        %v1403 = vunpack.c.l.b16 %v884
        %v1404 = vunpack.c.l.b16 %v885
        %v1405 = vunpack.c.l.b16 %v886
        %v1406 = vunpack.c.l.b16 %v887
        %v1407 = vunpack.c.l.b16 %v888
        %v1408 = vunpack.c.l.b16 %v889
        %v1409 = vunpack.c.l.b16 %v890
        %v1410 = vunpack.c.l.b16 %v891
        %v1411 = vunpack.c.l.b16 %v892
        %v1412 = vunpack.c.l.b16 %v893
        %v1413 = vunpack.c.l.b16 %v894
        %v1414 = vunpack.c.l.b16 %v895
        %v1415 = vunpack.c.l.b16 %v896
        %v1416 = vunpack.c.l.b16 %v897
        %v1417 = vunpack.c.l.b16 %v898
        %v1418 = vunpack.c.l.b16 %v899
        %v1419 = vunpack.c.l.b16 %v900
        %v1420 = vunpack.c.l.b16 %v901
        %v1421 = vunpack.c.l.b16 %v902
        %v1422 = vunpack.c.l.b16 %v903
        %v1423 = vunpack.c.l.b16 %v904
        %v1424 = vunpack.c.l.b16 %v905
        %v1425 = vunpack.c.l.b16 %v906
        %v1426 = vunpack.c.l.b16 %v907
        %v1427 = vunpack.c.l.b16 %v908
        %v1428 = vunpack.c.l.b16 %v909
        %v1429 = vunpack.c.l.b16 %v910
        %v1430 = vunpack.c.l.b16 %v911
        %v1431 = vunpack.c.l.b16 %v912
        %v1432 = vunpack.c.l.b16 %v913
        %v1433 = vunpack.c.l.b16 %v914
        %v1434 = vunpack.c.l.b16 %v915
        %v1435 = vunpack.c.l.b16 %v916
        %v1436 = vunpack.c.l.b16 %v917
        %v1437 = vunpack.c.l.b16 %v918
        %v1438 = vunpack.c.l.b16 %v919
        %v1439 = vunpack.c.l.b16 %v920
        %v1440 = vunpack.c.l.b16 %v921
        %v1441 = vunpack.c.l.b16 %v922
        %v1442 = vunpack.c.l.b16 %v923
        %v1443 = vunpack.c.l.b16 %v924
        %v1444 = vunpack.c.l.b16 %v925
        %v1445 = vunpack.c.l.b16 %v926
        %v1446 = vunpack.c.l.b16 %v927
        %v1447 = vunpack.c.l.b16 %v928
        %v1448 = vunpack.c.l.b16 %v929
        %v1449 = vunpack.c.l.b16 %v930
        %v1450 = vunpack.c.l.b16 %v931
        %v1451 = vunpack.c.l.b16 %v932
        %v1452 = vunpack.c.l.b16 %v933
        %v1453 = vunpack.c.l.b16 %v934
        %v1454 = vunpack.c.l.b16 %v935
        %v1455 = vunpack.c.l.b16 %v936
        %v1456 = vunpack.c.l.b16 %v937
        %v1457 = vunpack.c.l.b16 %v938
        %v1458 = vunpack.c.l.b16 %v939
        %v1459 = vunpack.c.l.b16 %v940
        %v1460 = vunpack.c.l.b16 %v941
        %v1461 = vunpack.c.l.b16 %v942
        %v1462 = vunpack.c.l.b16 %v943
        %v1463 = vunpack.c.l.b16 %v944
        %v1464 = vunpack.c.l.b16 %v945
        %v1465 = vunpack.c.l.b16 %v946
        %v1466 = vunpack.c.l.b16 %v947
        %v1467 = vunpack.c.l.b16 %v948
        %v1468 = vunpack.c.l.b16 %v949
        %v1469 = vunpack.c.l.b16 %v950
        %v1470 = vunpack.c.l.b16 %v951
        %v1471 = vunpack.c.l.b16 %v952
        %v1472 = vunpack.c.l.b16 %v953
        %v1473 = vunpack.c.l.b16 %v954
        %v1474 = vunpack.c.l.b16 %v955
        %v1475 = vunpack.c.l.b16 %v956
        %v1476 = vunpack.c.l.b16 %v957
        %v1477 = vunpack.c.l.b16 %v958
        %v1478 = vunpack.c.l.b16 %v959
        %v1479 = vunpack.c.l.b16 %v960
        %v1480 = vunpack.c.l.b16 %v961
        %v1481 = vunpack.c.l.b16 %v962
        %v1482 = vunpack.c.l.b16 %v963
        %v1483 = vunpack.c.l.b16 %v964
        %v1484 = vunpack.c.l.b16 %v965
        %v1485 = vunpack.c.l.b16 %v966
        %v1486 = vunpack.c.l.b16 %v967
        %v1487 = vunpack.c.l.b16 %v968
        %v1488 = vunpack.c.l.b16 %v969
        %v1489 = vunpack.c.l.b16 %v970
        %v1490 = vunpack.c.l.b16 %v971
        %v1491 = vunpack.c.l.b16 %v972
        %v1492 = vunpack.c.l.b16 %v973
        %v1493 = vunpack.c.l.b16 %v974
        %v1494 = vunpack.c.l.b16 %v975
        %v1495 = vunpack.c.l.b16 %v976
        %v1496 = vunpack.c.l.b16 %v977
        %v1497 = vunpack.c.l.b16 %v978
        %v1498 = vunpack.c.l.b16 %v979
        %v1499 = vunpack.c.l.b16 %v980
        %v1500 = vunpack.c.l.b16 %v981
        %v1501 = vunpack.c.l.b16 %v982
        %v1502 = vunpack.c.l.b16 %v983
        %v1503 = vunpack.c.l.b16 %v984
        %v1504 = vunpack.c.l.b16 %v985
        %v1505 = vunpack.c.l.b16 %v986
        %v1506 = vunpack.c.l.b16 %v987
        %v1507 = vunpack.c.l.b16 %v988
        %v1508 = vunpack.c.l.b16 %v989
        %v1509 = vunpack.c.l.b16 %v990
        %v1510 = vunpack.c.l.b16 %v991
        %v1511 = vunpack.c.l.b16 %v992
        %v1512 = vunpack.c.l.b16 %v993
        %v1513 = vunpack.c.l.b16 %v994
        %v1514 = vunpack.c.l.b16 %v995
        %v1515 = vunpack.c.l.b16 %v996
        %v1516 = vunpack.c.l.b16 %v997
        %v1517 = vunpack.c.l.b16 %v998
        %v1518 = vunpack.c.l.b16 %v999
        %v1519 = vunpack.c.l.b16 %v1000
        %v1520 = vunpack.c.l.b16 %v1001
        %v1521 = vunpack.c.l.b16 %v1002
        %v1522 = vunpack.c.l.b16 %v1003
        %v1523 = vunpack.c.l.b16 %v1004
        %v1524 = vunpack.c.l.b16 %v1005
        %v1525 = vunpack.c.l.b16 %v1006
        %v1526 = vunpack.c.l.b16 %v1007
        %v1527 = vunpack.c.l.b16 %v1008
        %v1528 = vunpack.c.l.b16 %v1009
        %v1529 = vunpack.c.l.b16 %v1010
        %v1530 = vunpack.c.l.b16 %v1011
        %v1531 = vunpack.c.l.b16 %v1012
        %v1532 = vunpack.c.l.b16 %v1013
        %v1533 = vunpack.c.l.b16 %v1014
        %v1534 = vunpack.c.l.b16 %v1015
        %v1535 = vunpack.c.l.b16 %v1016
        %v1536 = vunpack.c.l.b16 %v1017
        %v1537 = vunpack.c.l.b16 %v1018
        %v1538 = vunpack.c.l.b16 %v1019
        %v1539 = vunpack.c.l.b16 %v1020
        %v1540 = vunpack.c.l.b16 %v1021
        %v1541 = vunpack.c.l.b16 %v1022
        %v1542 = vunpack.c.l.b16 %v1023
        %v1543 = vunpack.c.l.b16 %v1024
        %v1544 = vunpack.c.l.b16 %v1025
        %v1545 = vunpack.c.l.b16 %v1026
        %v1546 = vunpack.c.l.b16 %v1027
        %v1547 = vunpack.c.l.b16 %v1028
        %v1548 = vunpack.c.l.b16 %v1029
        %v1549 = vunpack.c.l.b16 %v1030
        %v1550 = vunpack.c.l.b16 %v1031
        %v1551 = vunpack.c.l.b16 %v1032
        %v1552 = vunpack.c.l.b16 %v1033
        %v1553 = vunpack.c.l.b16 %v1034
        %v1554 = vunpack.c.l.b16 %v1035
        %v1555 = vunpack.c.l.b16 %v1036
        %v1556 = vunpack.c.l.b16 %v1037
        %v1557 = vunpack.c.l.b16 %v1038
        %v1558 = vunpack.c.l.b16 %v1039
        %v1559 = vunpack.c.l.b16 %v1040
        %v1560 = vunpack.c.l.b16 %v1041
        %v1561 = vunpack.c.l.b16 %v1042
        %v1562 = vunpack.c.l.b16 %v1043
        %v1563 = vunpack.c.l.b16 %v1044
        %v1564 = vunpack.c.l.b16 %v1045
        %v1565 = vunpack.c.l.b16 %v1046
        %v1566 = vunpack.c.l.b16 %v1047
        %v1567 = vunpack.c.l.b16 %v1048
        %v1568 = vunpack.c.l.b16 %v1049
        %v1569 = vunpack.c.l.b16 %v1050
        %v1570 = vunpack.c.l.b16 %v1051
        %v1571 = vunpack.c.l.b16 %v1052
        %v1572 = vunpack.c.l.b16 %v1053
        %v1573 = vunpack.c.l.b16 %v1054
        %v1574 = vunpack.c.l.b16 %v1055
        %v1575 = vunpack.c.l.b16 %v1056
        %v1576 = vunpack.c.l.b16 %v1057
        %v1577 = vunpack.c.l.b16 %v1058
        %v1578 = vunpack.c.l.b16 %v1059
        %v1579 = vunpack.c.l.b16 %v1060
        %v1580 = vunpack.c.l.b16 %v1061
        %v1581 = vunpack.c.l.b16 %v1062
        %v1582 = vunpack.c.l.b16 %v1063
        %v1583 = vunpack.c.l.b16 %v1064
        %v1584 = vunpack.c.l.b16 %v1065
        %v1585 = vunpack.c.l.b16 %v1066
        %v1586 = vunpack.c.l.b16 %v1067
        %v1587 = vunpack.c.l.b16 %v1068
        %v1588 = vunpack.c.l.b16 %v1069
        %v1589 = vunpack.c.l.b16 %v1070
        %v1590 = vunpack.c.l.b16 %v1071
        %v1591 = vunpack.c.l.b16 %v1072
        %v1592 = vunpack.c.l.b16 %v1073
        %v1593 = vunpack.c.l.b16 %v1074
        %v1594 = vunpack.c.l.b16 %v1075
        %v1595 = vunpack.c.l.b16 %v1076
        %v1596 = vunpack.c.l.b16 %v1077
        %v1597 = vunpack.c.l.b16 %v1078
        %v1598 = vunpack.c.l.b16 %v1079
        %v1599 = vunpack.c.l.b16 %v1080
        %v1600 = vunpack.c.l.b16 %v1081
        %v1601 = vunpack.c.l.b16 %v1082
        %v1602 = vunpack.c.l.b16 %v1083
        %v1603 = vunpack.c.l.b16 %v1084
        %v1604 = vunpack.c.l.b16 %v1085
        %v1605 = vunpack.c.l.b16 %v1086
        %v1606 = vunpack.c.l.b16 %v1087
        %v1607 = vunpack.c.l.b16 %v1088
        %v1608 = vunpack.c.l.b16 %v1089
        %v1609 = vunpack.c.l.b16 %v1090
        %v1610 = vunpack.c.l.b16 %v1091
        %v1611 = vunpack.c.l.b16 %v1092
        %v1612 = vunpack.c.l.b16 %v1093
        %v1613 = vunpack.c.l.b16 %v1094
        %v1614 = vunpack.c.l.b16 %v1095
        %v1615 = vunpack.c.l.b16 %v1096
        %v1616 = vunpack.c.l.b16 %v1097
        %v1617 = vunpack.c.l.b16 %v1098
        %v1618 = vunpack.c.l.b16 %v1099
        %v1619 = vunpack.c.l.b16 %v1100
        %v1620 = vunpack.c.l.b16 %v1101
        %v1621 = vunpack.c.l.b16 %v1102
        %v1622 = vunpack.c.l.b16 %v1103
        %v1623 = vunpack.c.l.b16 %v1104
        %v1624 = vunpack.c.l.b16 %v1105
        %v1625 = vunpack.c.l.b16 %v1106
        %v1626 = vunpack.c.l.b16 %v1107
        %v1627 = vunpack.c.l.b16 %v1108
        %v1628 = vpack.c.b16 %v1373, %v1372
        %v1629 = vpack.c.b16 %v1375, %v1374
        %v1630 = vpack.c.b16 %v1377, %v1376
        %v1631 = vpack.c.b16 %v1379, %v1378
        %v1632 = vpack.c.b16 %v1381, %v1380
        %v1633 = vpack.c.b16 %v1383, %v1382
        %v1634 = vpack.c.b16 %v1385, %v1384
        %v1635 = vpack.c.b16 %v1387, %v1386
        %v1636 = vpack.c.b16 %v1389, %v1388
        %v1637 = vpack.c.b16 %v1391, %v1390
        %v1638 = vpack.c.b16 %v1393, %v1392
        %v1639 = vpack.c.b16 %v1395, %v1394
        %v1640 = vpack.c.b16 %v1397, %v1396
        %v1641 = vpack.c.b16 %v1399, %v1398
        %v1642 = vpack.c.b16 %v1401, %v1400
        %v1643 = vpack.c.b16 %v1403, %v1402
        %v1644 = vpack.c.b16 %v1405, %v1404
        %v1645 = vpack.c.b16 %v1407, %v1406
        %v1646 = vpack.c.b16 %v1409, %v1408
        %v1647 = vpack.c.b16 %v1411, %v1410
        %v1648 = vpack.c.b16 %v1413, %v1412
        %v1649 = vpack.c.b16 %v1415, %v1414
        %v1650 = vpack.c.b16 %v1417, %v1416
        %v1651 = vpack.c.b16 %v1419, %v1418
        %v1652 = vpack.c.b16 %v1421, %v1420
        %v1653 = vpack.c.b16 %v1423, %v1422
        %v1654 = vpack.c.b16 %v1425, %v1424
        %v1655 = vpack.c.b16 %v1427, %v1426
        %v1656 = vpack.c.b16 %v1429, %v1428
        %v1657 = vpack.c.b16 %v1431, %v1430
        %v1658 = vpack.c.b16 %v1433, %v1432
        %v1659 = vpack.c.b16 %v1435, %v1434
        %v1660 = vpack.c.b16 %v1437, %v1436
        %v1661 = vpack.c.b16 %v1439, %v1438
        %v1662 = vpack.c.b16 %v1441, %v1440
        %v1663 = vpack.c.b16 %v1443, %v1442
        %v1664 = vpack.c.b16 %v1445, %v1444
        %v1665 = vpack.c.b16 %v1447, %v1446
        %v1666 = vpack.c.b16 %v1449, %v1448
        %v1667 = vpack.c.b16 %v1451, %v1450
        %v1668 = vpack.c.b16 %v1453, %v1452
        %v1669 = vpack.c.b16 %v1455, %v1454
        %v1670 = vpack.c.b16 %v1457, %v1456
        %v1671 = vpack.c.b16 %v1459, %v1458
        %v1672 = vpack.c.b16 %v1461, %v1460
        %v1673 = vpack.c.b16 %v1463, %v1462
        %v1674 = vpack.c.b16 %v1465, %v1464
        %v1675 = vpack.c.b16 %v1467, %v1466
        %v1676 = vpack.c.b16 %v1469, %v1468
        %v1677 = vpack.c.b16 %v1471, %v1470
        %v1678 = vpack.c.b16 %v1473, %v1472
        %v1679 = vpack.c.b16 %v1475, %v1474
        %v1680 = vpack.c.b16 %v1477, %v1476
        %v1681 = vpack.c.b16 %v1479, %v1478
        %v1682 = vpack.c.b16 %v1481, %v1480
        %v1683 = vpack.c.b16 %v1483, %v1482
        %v1684 = vpack.c.b16 %v1485, %v1484
        %v1685 = vpack.c.b16 %v1487, %v1486
        %v1686 = vpack.c.b16 %v1489, %v1488
        %v1687 = vpack.c.b16 %v1491, %v1490
        %v1688 = vpack.c.b16 %v1493, %v1492
        %v1689 = vpack.c.b16 %v1495, %v1494
        %v1690 = vpack.c.b16 %v1497, %v1496
        %v1691 = vpack.c.b16 %v1499, %v1498
        %v1692 = vpack.c.b16 %v1501, %v1500
        %v1693 = vpack.c.b16 %v1503, %v1502
        %v1694 = vpack.c.b16 %v1505, %v1504
        %v1695 = vpack.c.b16 %v1507, %v1506
        %v1696 = vpack.c.b16 %v1509, %v1508
        %v1697 = vpack.c.b16 %v1511, %v1510
        %v1698 = vpack.c.b16 %v1513, %v1512
        %v1699 = vpack.c.b16 %v1515, %v1514
        %v1700 = vpack.c.b16 %v1517, %v1516
        %v1701 = vpack.c.b16 %v1519, %v1518
        %v1702 = vpack.c.b16 %v1521, %v1520
        %v1703 = vpack.c.b16 %v1523, %v1522
        %v1704 = vpack.c.b16 %v1525, %v1524
        %v1705 = vpack.c.b16 %v1527, %v1526
        %v1706 = vpack.c.b16 %v1529, %v1528
        %v1707 = vpack.c.b16 %v1531, %v1530
        %v1708 = vpack.c.b16 %v1533, %v1532
        %v1709 = vpack.c.b16 %v1535, %v1534
        %v1710 = vpack.c.b16 %v1537, %v1536
        %v1711 = vpack.c.b16 %v1539, %v1538
        %v1712 = vpack.c.b16 %v1541, %v1540
        %v1713 = vpack.c.b16 %v1543, %v1542
        %v1714 = vpack.c.b16 %v1545, %v1544
        %v1715 = vpack.c.b16 %v1547, %v1546
        %v1716 = vpack.c.b16 %v1549, %v1548
        %v1717 = vpack.c.b16 %v1551, %v1550
        %v1718 = vpack.c.b16 %v1553, %v1552
        %v1719 = vpack.c.b16 %v1555, %v1554
        %v1720 = vpack.c.b16 %v1557, %v1556
        %v1721 = vpack.c.b16 %v1559, %v1558
        %v1722 = vpack.c.b16 %v1561, %v1560
        %v1723 = vpack.c.b16 %v1563, %v1562
        %v1724 = vpack.c.b16 %v1565, %v1564
        %v1725 = vpack.c.b16 %v1567, %v1566
        %v1726 = vpack.c.b16 %v1569, %v1568
        %v1727 = vpack.c.b16 %v1571, %v1570
        %v1728 = vpack.c.b16 %v1573, %v1572
        %v1729 = vpack.c.b16 %v1575, %v1574
        %v1730 = vpack.c.b16 %v1577, %v1576
        %v1731 = vpack.c.b16 %v1579, %v1578
        %v1732 = vpack.c.b16 %v1581, %v1580
        %v1733 = vpack.c.b16 %v1583, %v1582
        %v1734 = vpack.c.b16 %v1585, %v1584
        %v1735 = vpack.c.b16 %v1587, %v1586
        %v1736 = vpack.c.b16 %v1589, %v1588
        %v1737 = vpack.c.b16 %v1591, %v1590
        %v1738 = vpack.c.b16 %v1593, %v1592
        %v1739 = vpack.c.b16 %v1595, %v1594
        %v1740 = vpack.c.b16 %v1597, %v1596
        %v1741 = vpack.c.b16 %v1599, %v1598
        %v1742 = vpack.c.b16 %v1601, %v1600
        %v1743 = vpack.c.b16 %v1603, %v1602
        %v1744 = vpack.c.b16 %v1605, %v1604
        %v1745 = vpack.c.b16 %v1607, %v1606
        %v1746 = vpack.c.b16 %v1609, %v1608
        %v1747 = vpack.c.b16 %v1611, %v1610
        %v1748 = vpack.c.b16 %v1613, %v1612
        %v1749 = vpack.c.b16 %v1615, %v1614
        %v1750 = vpack.c.b16 %v1617, %v1616
        %v1751 = vpack.c.b16 %v1619, %v1618
        %v1752 = vpack.c.b16 %v1621, %v1620
        %v1753 = vpack.c.b16 %v1623, %v1622
        %v1754 = vpack.c.b16 %v1625, %v1624
        %v1755 = vpack.c.b16 %v1627, %v1626
        %1884 = vmatprep.subr.bf16.mxu0 0
        %1885 = vmatpush1.bf16.msra.mxu0 %v1628
        %1886 = vmatprep.subr.bf16.mxu0 0
        %1887 = vmatpush1.bf16.msra.mxu0 %v1629
        %1888 = vmatprep.subr.bf16.mxu0 0
        %1889 = vmatpush1.bf16.msra.mxu0 %v1630
        %1890 = vmatprep.subr.bf16.mxu0 0
        %1891 = vmatpush1.bf16.msra.mxu0 %v1631
        %1892 = vmatprep.subr.bf16.mxu0 0
        %1893 = vmatpush1.bf16.msra.mxu0 %v1632
        %1894 = vmatprep.subr.bf16.mxu0 0
        %1895 = vmatpush1.bf16.msra.mxu0 %v1633
        %1896 = vmatprep.subr.bf16.mxu0 0
        %1897 = vmatpush1.bf16.msra.mxu0 %v1634
        %1898 = vmatprep.subr.bf16.mxu0 0
        %1899 = vmatpush1.bf16.msra.mxu0 %v1635
        %1900 = vmatprep.subr.bf16.mxu0 0
        %1901 = vmatpush1.bf16.msra.mxu0 %v1636
        %1902 = vmatprep.subr.bf16.mxu0 0
        %1903 = vmatpush1.bf16.msra.mxu0 %v1637
        %1904 = vmatprep.subr.bf16.mxu0 0
        %1905 = vmatpush1.bf16.msra.mxu0 %v1638
        %1906 = vmatprep.subr.bf16.mxu0 0
        %1907 = vmatpush1.bf16.msra.mxu0 %v1639
        %1908 = vmatprep.subr.bf16.mxu0 0
        %1909 = vmatpush1.bf16.msra.mxu0 %v1640
        %1910 = vmatprep.subr.bf16.mxu0 0
        %1911 = vmatpush1.bf16.msra.mxu0 %v1641
        %1912 = vmatprep.subr.bf16.mxu0 0
        %1913 = vmatpush1.bf16.msra.mxu0 %v1642
        %1914 = vmatprep.subr.bf16.mxu0 0
        %1915 = vmatpush1.bf16.msra.mxu0 %v1643
        %1916 = vmatprep.mubr.bf16.mxu0 %v790
        %1917 = vmatmul.mubr.bf16.gmra.mrb[0].mxu0 %v789
        %v1918 = vpop.f32.mrb[0].mxu0
        %v1919 = vadd.f32 %v1114, %v1918
        %v1920 = vpop.f32.mrb[0].mxu0
        %v1921 = vpop.f32.mrb[0].mxu0
        %v1922 = vpop.f32.mrb[0].mxu0
        %1923 = vdwg.mxu0
        %1924 = vmatprep.subr.bf16.mxu0 0
        %1925 = vmatpush1.bf16.msra.mxu0 %v1644
        %1926 = vmatprep.subr.bf16.mxu0 0
        %1927 = vmatpush1.bf16.msra.mxu0 %v1645
        %1928 = vmatprep.subr.bf16.mxu0 0
        %1929 = vmatpush1.bf16.msra.mxu0 %v1646
        %1930 = vmatprep.subr.bf16.mxu0 0
        %1931 = vmatpush1.bf16.msra.mxu0 %v1647
        %1932 = vmatprep.subr.bf16.mxu0 0
        %1933 = vmatpush1.bf16.msra.mxu0 %v1648
        %1934 = vmatprep.subr.bf16.mxu0 0
        %1935 = vmatpush1.bf16.msra.mxu0 %v1649
        %1936 = vmatprep.subr.bf16.mxu0 0
        %1937 = vmatpush1.bf16.msra.mxu0 %v1650
        %1938 = vmatprep.subr.bf16.mxu0 0
        %1939 = vmatpush1.bf16.msra.mxu0 %v1651
        %1940 = vmatprep.subr.bf16.mxu0 0
        %1941 = vmatpush1.bf16.msra.mxu0 %v1652
        %1942 = vmatprep.subr.bf16.mxu0 0
        %1943 = vmatpush1.bf16.msra.mxu0 %v1653
        %1944 = vmatprep.subr.bf16.mxu0 0
        %1945 = vmatpush1.bf16.msra.mxu0 %v1654
        %1946 = vmatprep.subr.bf16.mxu0 0
        %1947 = vmatpush1.bf16.msra.mxu0 %v1655
        %1948 = vmatprep.subr.bf16.mxu0 0
        %1949 = vmatpush1.bf16.msra.mxu0 %v1656
        %1950 = vmatprep.subr.bf16.mxu0 0
        %1951 = vmatpush1.bf16.msra.mxu0 %v1657
        %1952 = vmatprep.subr.bf16.mxu0 0
        %1953 = vmatpush1.bf16.msra.mxu0 %v1658
        %1954 = vmatprep.subr.bf16.mxu0 0
        %1955 = vmatpush1.bf16.msra.mxu0 %v1659
        %1956 = vmatprep.mubr.bf16.mxu0 %v792
        %1957 = vmatmul.mubr.bf16.gmra.mrb[0].mxu0 %v791
        %v1958 = vpop.f32.mrb[0].mxu0
        %v1959 = vadd.f32 %v1919, %v1958
        %v1960 = vpop.f32.mrb[0].mxu0
        %v1961 = vpop.f32.mrb[0].mxu0
        %v1962 = vpop.f32.mrb[0].mxu0
        %1963 = vdwg.mxu0
        %1964 = vmatprep.subr.bf16.mxu0 0
        %1965 = vmatpush1.bf16.msra.mxu0 %v1660
        %1966 = vmatprep.subr.bf16.mxu0 0
        %1967 = vmatpush1.bf16.msra.mxu0 %v1661
        %1968 = vmatprep.subr.bf16.mxu0 0
        %1969 = vmatpush1.bf16.msra.mxu0 %v1662
        %1970 = vmatprep.subr.bf16.mxu0 0
        %1971 = vmatpush1.bf16.msra.mxu0 %v1663
        %1972 = vmatprep.subr.bf16.mxu0 0
        %1973 = vmatpush1.bf16.msra.mxu0 %v1664
        %1974 = vmatprep.subr.bf16.mxu0 0
        %1975 = vmatpush1.bf16.msra.mxu0 %v1665
        %1976 = vmatprep.subr.bf16.mxu0 0
        %1977 = vmatpush1.bf16.msra.mxu0 %v1666
        %1978 = vmatprep.subr.bf16.mxu0 0
        %1979 = vmatpush1.bf16.msra.mxu0 %v1667
        %1980 = vmatprep.subr.bf16.mxu0 0
        %1981 = vmatpush1.bf16.msra.mxu0 %v1668
        %1982 = vmatprep.subr.bf16.mxu0 0
        %1983 = vmatpush1.bf16.msra.mxu0 %v1669
        %1984 = vmatprep.subr.bf16.mxu0 0
        %1985 = vmatpush1.bf16.msra.mxu0 %v1670
        %1986 = vmatprep.subr.bf16.mxu0 0
        %1987 = vmatpush1.bf16.msra.mxu0 %v1671
        %1988 = vmatprep.subr.bf16.mxu0 0
        %1989 = vmatpush1.bf16.msra.mxu0 %v1672
        %1990 = vmatprep.subr.bf16.mxu0 0
        %1991 = vmatpush1.bf16.msra.mxu0 %v1673
        %1992 = vmatprep.subr.bf16.mxu0 0
        %1993 = vmatpush1.bf16.msra.mxu0 %v1674
        %1994 = vmatprep.subr.bf16.mxu0 0
        %1995 = vmatpush1.bf16.msra.mxu0 %v1675
        %1996 = vmatprep.mubr.bf16.mxu0 %v806
        %1997 = vmatmul.mubr.bf16.gmra.mrb[0].mxu0 %v799
        %v1998 = vpop.f32.mrb[0].mxu0
        %v1999 = vadd.f32 %v1959, %v1998
        %v2000 = vpop.f32.mrb[0].mxu0
        %v2001 = vpop.f32.mrb[0].mxu0
        %v2002 = vpop.f32.mrb[0].mxu0
        %2003 = vdwg.mxu0
        %2004 = vmatprep.subr.bf16.mxu0 0
        %2005 = vmatpush1.bf16.msra.mxu0 %v1676
        %2006 = vmatprep.subr.bf16.mxu0 0
        %2007 = vmatpush1.bf16.msra.mxu0 %v1677
        %2008 = vmatprep.subr.bf16.mxu0 0
        %2009 = vmatpush1.bf16.msra.mxu0 %v1678
        %2010 = vmatprep.subr.bf16.mxu0 0
        %2011 = vmatpush1.bf16.msra.mxu0 %v1679
        %2012 = vmatprep.subr.bf16.mxu0 0
        %2013 = vmatpush1.bf16.msra.mxu0 %v1680
        %2014 = vmatprep.subr.bf16.mxu0 0
        %2015 = vmatpush1.bf16.msra.mxu0 %v1681
        %2016 = vmatprep.subr.bf16.mxu0 0
        %2017 = vmatpush1.bf16.msra.mxu0 %v1682
        %2018 = vmatprep.subr.bf16.mxu0 0
        %2019 = vmatpush1.bf16.msra.mxu0 %v1683
        %2020 = vmatprep.subr.bf16.mxu0 0
        %2021 = vmatpush1.bf16.msra.mxu0 %v1684
        %2022 = vmatprep.subr.bf16.mxu0 0
        %2023 = vmatpush1.bf16.msra.mxu0 %v1685
        %2024 = vmatprep.subr.bf16.mxu0 0
        %2025 = vmatpush1.bf16.msra.mxu0 %v1686
        %2026 = vmatprep.subr.bf16.mxu0 0
        %2027 = vmatpush1.bf16.msra.mxu0 %v1687
        %2028 = vmatprep.subr.bf16.mxu0 0
        %2029 = vmatpush1.bf16.msra.mxu0 %v1688
        %2030 = vmatprep.subr.bf16.mxu0 0
        %2031 = vmatpush1.bf16.msra.mxu0 %v1689
        %2032 = vmatprep.subr.bf16.mxu0 0
        %2033 = vmatpush1.bf16.msra.mxu0 %v1690
        %2034 = vmatprep.subr.bf16.mxu0 0
        %2035 = vmatpush1.bf16.msra.mxu0 %v1691
        %2036 = vmatprep.mubr.bf16.mxu0 %v820
        %2037 = vmatmul.mubr.bf16.gmra.mrb[0].mxu0 %v813
        %v2038 = vpop.f32.mrb[0].mxu0
        %v2039 = vadd.f32 %v1999, %v2038
        %v2040 = vpop.f32.mrb[0].mxu0
        %v2041 = vpop.f32.mrb[0].mxu0
        %v2042 = vpop.f32.mrb[0].mxu0
        %2043 = vdwg.mxu0
        %2044 = vmatprep.subr.bf16.mxu0 0
        %2045 = vmatpush1.bf16.msra.mxu0 %v1692
        %2046 = vmatprep.subr.bf16.mxu0 0
        %2047 = vmatpush1.bf16.msra.mxu0 %v1693
        %2048 = vmatprep.subr.bf16.mxu0 0
        %2049 = vmatpush1.bf16.msra.mxu0 %v1694
        %2050 = vmatprep.subr.bf16.mxu0 0
        %2051 = vmatpush1.bf16.msra.mxu0 %v1695
        %2052 = vmatprep.subr.bf16.mxu0 0
        %2053 = vmatpush1.bf16.msra.mxu0 %v1696
        %2054 = vmatprep.subr.bf16.mxu0 0
        %2055 = vmatpush1.bf16.msra.mxu0 %v1697
        %2056 = vmatprep.subr.bf16.mxu0 0
        %2057 = vmatpush1.bf16.msra.mxu0 %v1698
        %2058 = vmatprep.subr.bf16.mxu0 0
        %2059 = vmatpush1.bf16.msra.mxu0 %v1699
        %2060 = vmatprep.subr.bf16.mxu0 0
        %2061 = vmatpush1.bf16.msra.mxu0 %v1700
        %2062 = vmatprep.subr.bf16.mxu0 0
        %2063 = vmatpush1.bf16.msra.mxu0 %v1701
        %2064 = vmatprep.subr.bf16.mxu0 0
        %2065 = vmatpush1.bf16.msra.mxu0 %v1702
        %2066 = vmatprep.subr.bf16.mxu0 0
        %2067 = vmatpush1.bf16.msra.mxu0 %v1703
        %2068 = vmatprep.subr.bf16.mxu0 0
        %2069 = vmatpush1.bf16.msra.mxu0 %v1704
        %2070 = vmatprep.subr.bf16.mxu0 0
        %2071 = vmatpush1.bf16.msra.mxu0 %v1705
        %2072 = vmatprep.subr.bf16.mxu0 0
        %2073 = vmatpush1.bf16.msra.mxu0 %v1706
        %2074 = vmatprep.subr.bf16.mxu0 0
        %2075 = vmatpush1.bf16.msra.mxu0 %v1707
        %2076 = vmatprep.mubr.bf16.mxu0 %v830
        %2077 = vmatmul.mubr.bf16.gmra.mrb[0].mxu0 %v829
        %v2078 = vpop.f32.mrb[0].mxu0
        %v2079 = vadd.f32 %v2039, %v2078
        %v2080 = vpop.f32.mrb[0].mxu0
        %v2081 = vpop.f32.mrb[0].mxu0
        %v2082 = vpop.f32.mrb[0].mxu0
        %2083 = vdwg.mxu0
        %2084 = vmatprep.subr.bf16.mxu0 0
        %2085 = vmatpush1.bf16.msra.mxu0 %v1708
        %2086 = vmatprep.subr.bf16.mxu0 0
        %2087 = vmatpush1.bf16.msra.mxu0 %v1709
        %2088 = vmatprep.subr.bf16.mxu0 0
        %2089 = vmatpush1.bf16.msra.mxu0 %v1710
        %2090 = vmatprep.subr.bf16.mxu0 0
        %2091 = vmatpush1.bf16.msra.mxu0 %v1711
        %2092 = vmatprep.subr.bf16.mxu0 0
        %2093 = vmatpush1.bf16.msra.mxu0 %v1712
        %2094 = vmatprep.subr.bf16.mxu0 0
        %2095 = vmatpush1.bf16.msra.mxu0 %v1713
        %2096 = vmatprep.subr.bf16.mxu0 0
        %2097 = vmatpush1.bf16.msra.mxu0 %v1714
        %2098 = vmatprep.subr.bf16.mxu0 0
        %2099 = vmatpush1.bf16.msra.mxu0 %v1715
        %2100 = vmatprep.subr.bf16.mxu0 0
        %2101 = vmatpush1.bf16.msra.mxu0 %v1716
        %2102 = vmatprep.subr.bf16.mxu0 0
        %2103 = vmatpush1.bf16.msra.mxu0 %v1717
        %2104 = vmatprep.subr.bf16.mxu0 0
        %2105 = vmatpush1.bf16.msra.mxu0 %v1718
        %2106 = vmatprep.subr.bf16.mxu0 0
        %2107 = vmatpush1.bf16.msra.mxu0 %v1719
        %2108 = vmatprep.subr.bf16.mxu0 0
        %2109 = vmatpush1.bf16.msra.mxu0 %v1720
        %2110 = vmatprep.subr.bf16.mxu0 0
        %2111 = vmatpush1.bf16.msra.mxu0 %v1721
        %2112 = vmatprep.subr.bf16.mxu0 0
        %2113 = vmatpush1.bf16.msra.mxu0 %v1722
        %2114 = vmatprep.subr.bf16.mxu0 0
        %2115 = vmatpush1.bf16.msra.mxu0 %v1723
        %2116 = vmatprep.mubr.bf16.mxu0 %v832
        %2117 = vmatmul.mubr.bf16.gmra.mrb[0].mxu0 %v831
        %v2118 = vpop.f32.mrb[0].mxu0
        %v2119 = vadd.f32 %v2079, %v2118
        %v2120 = vpop.f32.mrb[0].mxu0
        %v2121 = vpop.f32.mrb[0].mxu0
        %v2122 = vpop.f32.mrb[0].mxu0
        %2123 = vdwg.mxu0
        %2124 = vmatprep.subr.bf16.mxu0 0
        %2125 = vmatpush1.bf16.msra.mxu0 %v1724
        %2126 = vmatprep.subr.bf16.mxu0 0
        %2127 = vmatpush1.bf16.msra.mxu0 %v1725
        %2128 = vmatprep.subr.bf16.mxu0 0
        %2129 = vmatpush1.bf16.msra.mxu0 %v1726
        %2130 = vmatprep.subr.bf16.mxu0 0
        %2131 = vmatpush1.bf16.msra.mxu0 %v1727
        %2132 = vmatprep.subr.bf16.mxu0 0
        %2133 = vmatpush1.bf16.msra.mxu0 %v1728
        %2134 = vmatprep.subr.bf16.mxu0 0
        %2135 = vmatpush1.bf16.msra.mxu0 %v1729
        %2136 = vmatprep.subr.bf16.mxu0 0
        %2137 = vmatpush1.bf16.msra.mxu0 %v1730
        %2138 = vmatprep.subr.bf16.mxu0 0
        %2139 = vmatpush1.bf16.msra.mxu0 %v1731
        %2140 = vmatprep.subr.bf16.mxu0 0
        %2141 = vmatpush1.bf16.msra.mxu0 %v1732
        %2142 = vmatprep.subr.bf16.mxu0 0
        %2143 = vmatpush1.bf16.msra.mxu0 %v1733
        %2144 = vmatprep.subr.bf16.mxu0 0
        %2145 = vmatpush1.bf16.msra.mxu0 %v1734
        %2146 = vmatprep.subr.bf16.mxu0 0
        %2147 = vmatpush1.bf16.msra.mxu0 %v1735
        %2148 = vmatprep.subr.bf16.mxu0 0
        %2149 = vmatpush1.bf16.msra.mxu0 %v1736
        %2150 = vmatprep.subr.bf16.mxu0 0
        %2151 = vmatpush1.bf16.msra.mxu0 %v1737
        %2152 = vmatprep.subr.bf16.mxu0 0
        %2153 = vmatpush1.bf16.msra.mxu0 %v1738
        %2154 = vmatprep.subr.bf16.mxu0 0
        %2155 = vmatpush1.bf16.msra.mxu0 %v1739
        %2156 = vmatprep.mubr.bf16.mxu0 %v842
        %2157 = vmatmul.mubr.bf16.gmra.mrb[0].mxu0 %v839
        %v2158 = vpop.f32.mrb[0].mxu0
        %v2159 = vadd.f32 %v2119, %v2158
        %v2160 = vpop.f32.mrb[0].mxu0
        %v2161 = vpop.f32.mrb[0].mxu0
        %v2162 = vpop.f32.mrb[0].mxu0
        %2163 = vdwg.mxu0
        %2164 = vmatprep.subr.bf16.mxu0 0
        %2165 = vmatpush1.bf16.msra.mxu0 %v1740
        %2166 = vmatprep.subr.bf16.mxu0 0
        %2167 = vmatpush1.bf16.msra.mxu0 %v1741
        %2168 = vmatprep.subr.bf16.mxu0 0
        %2169 = vmatpush1.bf16.msra.mxu0 %v1742
        %2170 = vmatprep.subr.bf16.mxu0 0
        %2171 = vmatpush1.bf16.msra.mxu0 %v1743
        %2172 = vmatprep.subr.bf16.mxu0 0
        %2173 = vmatpush1.bf16.msra.mxu0 %v1744
        %2174 = vmatprep.subr.bf16.mxu0 0
        %2175 = vmatpush1.bf16.msra.mxu0 %v1745
        %2176 = vmatprep.subr.bf16.mxu0 0
        %2177 = vmatpush1.bf16.msra.mxu0 %v1746
        %2178 = vmatprep.subr.bf16.mxu0 0
        %2179 = vmatpush1.bf16.msra.mxu0 %v1747
        %2180 = vmatprep.subr.bf16.mxu0 0
        %2181 = vmatpush1.bf16.msra.mxu0 %v1748
        %2182 = vmatprep.subr.bf16.mxu0 0
        %2183 = vmatpush1.bf16.msra.mxu0 %v1749
        %2184 = vmatprep.subr.bf16.mxu0 0
        %2185 = vmatpush1.bf16.msra.mxu0 %v1750
        %2186 = vmatprep.subr.bf16.mxu0 0
        %2187 = vmatpush1.bf16.msra.mxu0 %v1751
        %2188 = vmatprep.subr.bf16.mxu0 0
        %2189 = vmatpush1.bf16.msra.mxu0 %v1752
        %2190 = vmatprep.subr.bf16.mxu0 0
        %2191 = vmatpush1.bf16.msra.mxu0 %v1753
        %2192 = vmatprep.subr.bf16.mxu0 0
        %2193 = vmatpush1.bf16.msra.mxu0 %v1754
        %2194 = vmatprep.subr.bf16.mxu0 0
        %2195 = vmatpush1.bf16.msra.mxu0 %v1755
        %2196 = vmatprep.mubr.bf16.mxu0 %v848
        %2197 = vmatmul.mubr.bf16.gmra.mrb[0].mxu0 %v845
        %v2198 = vpop.f32.mrb[0].mxu0
        %v2199 = vadd.f32 %v2159, %v2198
        %v2200 = vpop.f32.mrb[0].mxu0
        %v2201 = vpop.f32.mrb[0].mxu0
        %v2202 = vpop.f32.mrb[0].mxu0
        %2203 = vdwg.mxu0
        %v2204 = vmax.f32 %v2199, 0.0
        %v2205 = vpack.c.bf16 %v2204, %v2204
        %v2207 = vshrl.u32 %v2205, 16
        %v2209 = vrot.slane %v2207, 7
        %v2210 = vshll.u32 %v2205, 16
        %v2212 = vor.u32 %v2209, %v2210
        %vm2214 = vcmask 1040384
        %vm2215 = vsmask.f32 256
        %vm2216 = vmand %vm2214, %vm2215
        %v2217 = vsel %vm2216, 0, %v2212
        %vm2218 = vcmask 1044480
        %vm2219 = vsmask.f32 4352
        %vm2220 = vmand %vm2218, %vm2219
        %v2221 = vsel %vm2220, %v2217, 0
        %v2223 = vshrl.u32 %v2221, 16
        %v2225 = vshll.u32 %v2221, 16
        %v2227 = vrot.slane %v2225, 1
        %v2228 = vor.u32 %v2223, %v2227
        %v2231 = vrot.slane %v2221, 1
        %v2233 = vld [vmem:[%s4] sm:$0xf]
        %v2234 = vld [vmem:[%s4 + $0x4] sm:$0xf]
        %v2235 = vld [vmem:[%s4 + $0x8] sm:$0xf]
        %v2236 = vld [vmem:[%s4 + $0xc] sm:$0xf]
        %v2237 = vld [vmem:[%s4 + $0x10] sm:$0xf]
        %v2238 = vld [vmem:[%s4 + $0x14] sm:$0xf]
        %v2239 = vld [vmem:[%s4 + $0x18] sm:$0xf]
        %v2240 = vld [vmem:[%s4 + $0x1c] sm:$0xf]
        %v2241 = vld [vmem:[%s4 + $0x20] sm:$0xf]
        %v2242 = vld [vmem:[%s4 + $0x24] sm:$0xf]
        %v2243 = vld [vmem:[%s4 + $0x28] sm:$0xf]
        %v2244 = vld [vmem:[%s4 + $0x2c] sm:$0xf]
        %v2245 = vld [vmem:[%s4 + $0x30] sm:$0xf]
        %v2246 = vld [vmem:[%s4 + $0x34] sm:$0xf]
        %v2247 = vld [vmem:[%s4 + $0x38] sm:$0xf]
        %v2248 = vld [vmem:[%s4 + $0x3c] sm:$0xf]
        %v2249 = vld [vmem:[%s4 + $0x40] sm:$0xf]
        %v2250 = vld [vmem:[%s4 + $0x44] sm:$0xf]
        %v2251 = vld [vmem:[%s4 + $0x48] sm:$0xf]
        %v2252 = vld [vmem:[%s4 + $0x4c] sm:$0xf]
        %v2253 = vld [vmem:[%s4 + $0x50] sm:$0xf]
        %v2254 = vld [vmem:[%s4 + $0x54] sm:$0xf]
        %v2255 = vld [vmem:[%s4 + $0x58] sm:$0xf]
        %v2256 = vld [vmem:[%s4 + $0x5c] sm:$0xf]
        %v2257 = vld [vmem:[%s4 + $0x60] sm:$0xf]
        %v2258 = vld [vmem:[%s4 + $0x64] sm:$0xf]
        %v2259 = vld [vmem:[%s4 + $0x68] sm:$0xf]
        %v2260 = vld [vmem:[%s4 + $0x6c] sm:$0xf]
        %v2261 = vld [vmem:[%s4 + $0x70] sm:$0xf]
        %v2262 = vld [vmem:[%s4 + $0x74] sm:$0xf]
        %v2263 = vld [vmem:[%s4 + $0x78] sm:$0xf]
        %v2264 = vld [vmem:[%s4 + $0x7c] sm:$0xf]
        %v2265 = vld [vmem:[%s4 + $0x80] sm:$0xf]
        %v2266 = vld [vmem:[%s4 + $0x84] sm:$0xf]
        %v2267 = vld [vmem:[%s4 + $0x88] sm:$0xf]
        %v2268 = vld [vmem:[%s4 + $0x8c] sm:$0xf]
        %v2269 = vld [vmem:[%s4 + $0x90] sm:$0xf]
        %v2270 = vld [vmem:[%s4 + $0x94] sm:$0xf]
        %v2271 = vld [vmem:[%s4 + $0x98] sm:$0xf]
        %v2272 = vld [vmem:[%s4 + $0x9c] sm:$0xf]
        %v2273 = vld [vmem:[%s4 + $0xa0] sm:$0xf]
        %v2274 = vld [vmem:[%s4 + $0xa4] sm:$0xf]
        %v2275 = vld [vmem:[%s4 + $0xa8] sm:$0xf]
        %v2276 = vld [vmem:[%s4 + $0xac] sm:$0xf]
        %v2277 = vld [vmem:[%s4 + $0xb0] sm:$0xf]
        %v2278 = vld [vmem:[%s4 + $0xb4] sm:$0xf]
        %v2279 = vld [vmem:[%s4 + $0xb8] sm:$0xf]
        %v2280 = vld [vmem:[%s4 + $0xbc] sm:$0xf]
        %v2281 = vld [vmem:[#allocation2] sm:$0x1]
        %v2283 = vlaneseq
        %v2284 = vshrl.u32 %v2283, 7
        %v2285 = vsub.s32 0, %v2284
        %v2286 = vrot.slane %v2281, %v2285
        %v2336 = vunpack.c.l.b16 %v2233
        %v2337 = vunpack.c.l.b16 %v2234
        %v2338 = vunpack.c.l.b16 %v2235
        %v2339 = vunpack.c.l.b16 %v2236
        %v2340 = vunpack.c.l.b16 %v2237
        %v2341 = vunpack.c.l.b16 %v2238
        %v2342 = vunpack.c.l.b16 %v2239
        %v2343 = vunpack.c.l.b16 %v2240
        %v2344 = vunpack.c.l.b16 %v2241
        %v2345 = vunpack.c.l.b16 %v2242
        %v2346 = vunpack.c.l.b16 %v2243
        %v2347 = vunpack.c.l.b16 %v2244
        %v2348 = vunpack.c.l.b16 %v2245
        %v2349 = vunpack.c.l.b16 %v2246
        %v2350 = vunpack.c.l.b16 %v2247
        %v2351 = vunpack.c.l.b16 %v2248
        %v2352 = vunpack.c.l.b16 %v2249
        %v2353 = vunpack.c.l.b16 %v2250
        %v2354 = vunpack.c.l.b16 %v2251
        %v2355 = vunpack.c.l.b16 %v2252
        %v2356 = vunpack.c.l.b16 %v2253
        %v2357 = vunpack.c.l.b16 %v2254
        %v2358 = vunpack.c.l.b16 %v2255
        %v2359 = vunpack.c.l.b16 %v2256
        %v2360 = vunpack.c.l.b16 %v2257
        %v2361 = vunpack.c.l.b16 %v2258
        %v2362 = vunpack.c.l.b16 %v2259
        %v2363 = vunpack.c.l.b16 %v2260
        %v2364 = vunpack.c.l.b16 %v2261
        %v2365 = vunpack.c.l.b16 %v2262
        %v2366 = vunpack.c.l.b16 %v2263
        %v2367 = vunpack.c.l.b16 %v2264
        %v2368 = vunpack.c.l.b16 %v2265
        %v2369 = vunpack.c.l.b16 %v2266
        %v2370 = vunpack.c.l.b16 %v2267
        %v2371 = vunpack.c.l.b16 %v2268
        %v2372 = vunpack.c.l.b16 %v2269
        %v2373 = vunpack.c.l.b16 %v2270
        %v2374 = vunpack.c.l.b16 %v2271
        %v2375 = vunpack.c.l.b16 %v2272
        %v2376 = vunpack.c.l.b16 %v2273
        %v2377 = vunpack.c.l.b16 %v2274
        %v2378 = vunpack.c.l.b16 %v2275
        %v2379 = vunpack.c.l.b16 %v2276
        %v2380 = vunpack.c.l.b16 %v2277
        %v2381 = vunpack.c.l.b16 %v2278
        %v2382 = vunpack.c.l.b16 %v2279
        %v2383 = vunpack.c.l.b16 %v2280
        %v2384 = vpack.c.b16 %v2337, %v2336
        %v2385 = vpack.c.b16 %v2339, %v2338
        %v2386 = vpack.c.b16 %v2341, %v2340
        %v2387 = vpack.c.b16 %v2343, %v2342
        %v2388 = vpack.c.b16 %v2345, %v2344
        %v2389 = vpack.c.b16 %v2347, %v2346
        %v2390 = vpack.c.b16 %v2349, %v2348
        %v2391 = vpack.c.b16 %v2351, %v2350
        %v2392 = vpack.c.b16 %v2353, %v2352
        %v2393 = vpack.c.b16 %v2355, %v2354
        %v2394 = vpack.c.b16 %v2357, %v2356
        %v2395 = vpack.c.b16 %v2359, %v2358
        %v2396 = vpack.c.b16 %v2361, %v2360
        %v2397 = vpack.c.b16 %v2363, %v2362
        %v2398 = vpack.c.b16 %v2365, %v2364
        %v2399 = vpack.c.b16 %v2367, %v2366
        %v2400 = vpack.c.b16 %v2369, %v2368
        %v2401 = vpack.c.b16 %v2371, %v2370
        %v2402 = vpack.c.b16 %v2373, %v2372
        %v2403 = vpack.c.b16 %v2375, %v2374
        %v2404 = vpack.c.b16 %v2377, %v2376
        %v2405 = vpack.c.b16 %v2379, %v2378
        %v2406 = vpack.c.b16 %v2381, %v2380
        %v2407 = vpack.c.b16 %v2383, %v2382
        %2432 = vmatprep.subr.bf16.mxu0 0
        %2433 = vmatpush1.bf16.msra.mxu0 %v2384
        %2434 = vmatprep.subr.bf16.mxu0 0
        %2435 = vmatpush1.bf16.msra.mxu0 %v2385
        %2436 = vmatprep.subr.bf16.mxu0 0
        %2437 = vmatpush1.bf16.msra.mxu0 %v2386
        %2438 = vmatprep.subr.bf16.mxu0 0
        %2439 = vmatpush1.bf16.msra.mxu0 %v2387
        %2440 = vmatprep.subr.bf16.mxu0 0
        %2441 = vmatpush1.bf16.msra.mxu0 %v2388
        %2442 = vmatprep.subr.bf16.mxu0 0
        %2443 = vmatpush1.bf16.msra.mxu0 %v2389
        %2444 = vmatprep.subr.bf16.mxu0 0
        %2445 = vmatpush1.bf16.msra.mxu0 %v2390
        %2446 = vmatprep.subr.bf16.mxu0 0
        %2447 = vmatpush1.bf16.msra.mxu0 %v2391
        %2448 = vmatprep.subr.bf16.mxu0 0
        %2449 = vmatpush1.bf16.msra.mxu0 %v2392
        %2450 = vmatprep.subr.bf16.mxu0 0
        %2451 = vmatpush1.bf16.msra.mxu0 %v2393
        %2452 = vmatprep.subr.bf16.mxu0 0
        %2453 = vmatpush1.bf16.msra.mxu0 %v2394
        %2454 = vmatprep.subr.bf16.mxu0 0
        %2455 = vmatpush1.bf16.msra.mxu0 %v2395
        %2456 = vmatprep.subr.bf16.mxu0 0
        %2457 = vmatpush1.bf16.msra.mxu0 %v2396
        %2458 = vmatprep.subr.bf16.mxu0 0
        %2459 = vmatpush1.bf16.msra.mxu0 %v2397
        %2460 = vmatprep.subr.bf16.mxu0 0
        %2461 = vmatpush1.bf16.msra.mxu0 %v2398
        %2462 = vmatprep.subr.bf16.mxu0 0
        %2463 = vmatpush1.bf16.msra.mxu0 %v2399
        %2464 = vmatprep.mubr.bf16.mxu0 %v2228
        %2465 = vmatmul.mubr.bf16.gmra.mrb[0].mxu0 %v2221
        %v2466 = vpop.f32.mrb[0].mxu0
        %v2467 = vadd.f32 %v2286, %v2466
        %v2468 = vpop.f32.mrb[0].mxu0
        %v2469 = vpop.f32.mrb[0].mxu0
        %v2470 = vpop.f32.mrb[0].mxu0
        %2471 = vdwg.mxu0
        %2472 = vmatprep.subr.bf16.mxu0 0
        %2473 = vmatpush1.bf16.msra.mxu0 %v2400
        %2474 = vmatprep.subr.bf16.mxu0 0
        %2475 = vmatpush1.bf16.msra.mxu0 %v2401
        %2476 = vmatprep.subr.bf16.mxu0 0
        %2477 = vmatpush1.bf16.msra.mxu0 %v2402
        %2478 = vmatprep.subr.bf16.mxu0 0
        %2479 = vmatpush1.bf16.msra.mxu0 %v2403
        %2480 = vmatprep.subr.bf16.mxu0 0
        %2481 = vmatpush1.bf16.msra.mxu0 %v2404
        %2482 = vmatprep.subr.bf16.mxu0 0
        %2483 = vmatpush1.bf16.msra.mxu0 %v2405
        %2484 = vmatprep.subr.bf16.mxu0 0
        %2485 = vmatpush1.bf16.msra.mxu0 %v2406
        %2486 = vmatprep.subr.bf16.mxu0 0
        %2487 = vmatpush1.bf16.msra.mxu0 %v2407
        %2488 = vmatprep.subr.bf16.mxu0 0
        %2489 = vmatpush1.bf16.msra.mxu0 0
        %2490 = vmatprep.subr.bf16.mxu0 0
        %2491 = vmatpush1.bf16.msra.mxu0 0
        %2492 = vmatprep.subr.bf16.mxu0 0
        %2493 = vmatpush1.bf16.msra.mxu0 0
        %2494 = vmatprep.subr.bf16.mxu0 0
        %2495 = vmatpush1.bf16.msra.mxu0 0
        %2496 = vmatprep.subr.bf16.mxu0 0
        %2497 = vmatpush1.bf16.msra.mxu0 0
        %2498 = vmatprep.subr.bf16.mxu0 0
        %2499 = vmatpush1.bf16.msra.mxu0 0
        %2500 = vmatprep.subr.bf16.mxu0 0
        %2501 = vmatpush1.bf16.msra.mxu0 0
        %2502 = vmatprep.subr.bf16.mxu0 0
        %2503 = vmatpush1.bf16.msra.mxu0 0
        %2504 = vmatprep.mubr.bf16.mxu0 0
        %2505 = vmatmul.mubr.bf16.gmra.mrb[0].mxu0 %v2231
        %v2506 = vpop.f32.mrb[0].mxu0
        %v2507 = vadd.f32 %v2467, %v2506
        %v2508 = vpop.f32.mrb[0].mxu0
        %v2509 = vpop.f32.mrb[0].mxu0
        %v2510 = vpop.f32.mrb[0].mxu0
        %2511 = vdwg.mxu0
        %v2512 = vadd.f32 %v2507, 0.44932896
        %vm2513 = vcmp.ge.f32.partialorder %v2512, 1.0
        %v2514 = vsel %vm2513, 1, 0
        %v2515 = vcvt.s32.f32 %v2514
        %v2516 = vpack.c.bf16 %v2515, %v2515
        %v2518 = vshrl.u32 %v2516, 16
        %v2520 = vrot.slane %v2518, 7
        %v2521 = vshll.u32 %v2516, 16
        %v2523 = vor.u32 %v2520, %v2521
        %v2525 = vsel %vm2216, 0, %v2523
        %v2526 = vsel %vm2220, %v2525, 0
        %v2528 = vshrl.u32 %v2526, 16
        %v2530 = vshll.u32 %v2526, 16
        %v2532 = vrot.slane %v2530, 1
        %v2533 = vor.u32 %v2528, %v2532
        %v2536 = vrot.slane %v2526, 1
        %v2538 = vld [vmem:[%s6] sm:$0xf]
        %v2539 = vld [vmem:[%s6 + $0x4] sm:$0xf]
        %v2540 = vld [vmem:[%s6 + $0x8] sm:$0xf]
        %v2541 = vld [vmem:[%s6 + $0xc] sm:$0xf]
        %v2542 = vld [vmem:[%s6 + $0x10] sm:$0xf]
        %v2543 = vld [vmem:[%s6 + $0x14] sm:$0xf]
        %v2544 = vld [vmem:[%s6 + $0x18] sm:$0xf]
        %v2545 = vld [vmem:[%s6 + $0x1c] sm:$0xf]
        %v2546 = vld [vmem:[%s6 + $0x20] sm:$0xf]
        %v2547 = vld [vmem:[%s6 + $0x24] sm:$0xf]
        %v2548 = vld [vmem:[%s6 + $0x28] sm:$0xf]
        %v2549 = vld [vmem:[%s6 + $0x2c] sm:$0xf]
        %v2550 = vld [vmem:[%s6 + $0x30] sm:$0xf]
        %v2551 = vld [vmem:[%s6 + $0x34] sm:$0xf]
        %v2552 = vld [vmem:[%s6 + $0x38] sm:$0xf]
        %v2553 = vld [vmem:[%s6 + $0x3c] sm:$0xf]
        %v2554 = vld [vmem:[%s6 + $0x40] sm:$0xf]
        %v2555 = vld [vmem:[%s6 + $0x44] sm:$0xf]
        %v2556 = vld [vmem:[%s6 + $0x48] sm:$0xf]
        %v2557 = vld [vmem:[%s6 + $0x4c] sm:$0xf]
        %v2558 = vld [vmem:[%s6 + $0x50] sm:$0xf]
        %v2559 = vld [vmem:[%s6 + $0x54] sm:$0xf]
        %v2560 = vld [vmem:[%s6 + $0x58] sm:$0xf]
        %v2561 = vld [vmem:[%s6 + $0x5c] sm:$0xf]
        %v2562 = vld [vmem:[%s6 + $0x60] sm:$0xf]
        %v2563 = vld [vmem:[%s6 + $0x64] sm:$0xf]
        %v2564 = vld [vmem:[%s6 + $0x68] sm:$0xf]
        %v2565 = vld [vmem:[%s6 + $0x6c] sm:$0xf]
        %v2566 = vld [vmem:[%s6 + $0x70] sm:$0xf]
        %v2567 = vld [vmem:[%s6 + $0x74] sm:$0xf]
        %v2568 = vld [vmem:[%s6 + $0x78] sm:$0xf]
        %v2569 = vld [vmem:[%s6 + $0x7c] sm:$0xf]
        %v2570 = vld [vmem:[%s6 + $0x80] sm:$0xf]
        %v2571 = vld [vmem:[%s6 + $0x84] sm:$0xf]
        %v2572 = vld [vmem:[%s6 + $0x88] sm:$0xf]
        %v2573 = vld [vmem:[%s6 + $0x8c] sm:$0xf]
        %v2574 = vld [vmem:[%s6 + $0x90] sm:$0xf]
        %v2575 = vld [vmem:[%s6 + $0x94] sm:$0xf]
        %v2576 = vld [vmem:[%s6 + $0x98] sm:$0xf]
        %v2577 = vld [vmem:[%s6 + $0x9c] sm:$0xf]
        %v2578 = vld [vmem:[%s6 + $0xa0] sm:$0xf]
        %v2579 = vld [vmem:[%s6 + $0xa4] sm:$0xf]
        %v2580 = vld [vmem:[%s6 + $0xa8] sm:$0xf]
        %v2581 = vld [vmem:[%s6 + $0xac] sm:$0xf]
        %v2582 = vld [vmem:[%s6 + $0xb0] sm:$0xf]
        %v2583 = vld [vmem:[%s6 + $0xb4] sm:$0xf]
        %v2584 = vld [vmem:[%s6 + $0xb8] sm:$0xf]
        %v2585 = vld [vmem:[%s6 + $0xbc] sm:$0xf]
        %v2586 = vld [vmem:[#allocation5] sm:$0x1]
        %v2588 = vlaneseq
        %v2589 = vshrl.u32 %v2588, 7
        %v2590 = vsub.s32 0, %v2589
        %v2591 = vrot.slane %v2586, %v2590
        %v2641 = vunpack.c.l.b16 %v2538
        %v2642 = vunpack.c.l.b16 %v2539
        %v2643 = vunpack.c.l.b16 %v2540
        %v2644 = vunpack.c.l.b16 %v2541
        %v2645 = vunpack.c.l.b16 %v2542
        %v2646 = vunpack.c.l.b16 %v2543
        %v2647 = vunpack.c.l.b16 %v2544
        %v2648 = vunpack.c.l.b16 %v2545
        %v2649 = vunpack.c.l.b16 %v2546
        %v2650 = vunpack.c.l.b16 %v2547
        %v2651 = vunpack.c.l.b16 %v2548
        %v2652 = vunpack.c.l.b16 %v2549
        %v2653 = vunpack.c.l.b16 %v2550
        %v2654 = vunpack.c.l.b16 %v2551
        %v2655 = vunpack.c.l.b16 %v2552
        %v2656 = vunpack.c.l.b16 %v2553
        %v2657 = vunpack.c.l.b16 %v2554
        %v2658 = vunpack.c.l.b16 %v2555
        %v2659 = vunpack.c.l.b16 %v2556
        %v2660 = vunpack.c.l.b16 %v2557
        %v2661 = vunpack.c.l.b16 %v2558
        %v2662 = vunpack.c.l.b16 %v2559
        %v2663 = vunpack.c.l.b16 %v2560
        %v2664 = vunpack.c.l.b16 %v2561
        %v2665 = vunpack.c.l.b16 %v2562
        %v2666 = vunpack.c.l.b16 %v2563
        %v2667 = vunpack.c.l.b16 %v2564
        %v2668 = vunpack.c.l.b16 %v2565
        %v2669 = vunpack.c.l.b16 %v2566
        %v2670 = vunpack.c.l.b16 %v2567
        %v2671 = vunpack.c.l.b16 %v2568
        %v2672 = vunpack.c.l.b16 %v2569
        %v2673 = vunpack.c.l.b16 %v2570
        %v2674 = vunpack.c.l.b16 %v2571
        %v2675 = vunpack.c.l.b16 %v2572
        %v2676 = vunpack.c.l.b16 %v2573
        %v2677 = vunpack.c.l.b16 %v2574
        %v2678 = vunpack.c.l.b16 %v2575
        %v2679 = vunpack.c.l.b16 %v2576
        %v2680 = vunpack.c.l.b16 %v2577
        %v2681 = vunpack.c.l.b16 %v2578
        %v2682 = vunpack.c.l.b16 %v2579
        %v2683 = vunpack.c.l.b16 %v2580
        %v2684 = vunpack.c.l.b16 %v2581
        %v2685 = vunpack.c.l.b16 %v2582
        %v2686 = vunpack.c.l.b16 %v2583
        %v2687 = vunpack.c.l.b16 %v2584
        %v2688 = vunpack.c.l.b16 %v2585
        %v2689 = vpack.c.b16 %v2642, %v2641
        %v2690 = vpack.c.b16 %v2644, %v2643
        %v2691 = vpack.c.b16 %v2646, %v2645
        %v2692 = vpack.c.b16 %v2648, %v2647
        %v2693 = vpack.c.b16 %v2650, %v2649
        %v2694 = vpack.c.b16 %v2652, %v2651
        %v2695 = vpack.c.b16 %v2654, %v2653
        %v2696 = vpack.c.b16 %v2656, %v2655
        %v2697 = vpack.c.b16 %v2658, %v2657
        %v2698 = vpack.c.b16 %v2660, %v2659
        %v2699 = vpack.c.b16 %v2662, %v2661
        %v2700 = vpack.c.b16 %v2664, %v2663
        %v2701 = vpack.c.b16 %v2666, %v2665
        %v2702 = vpack.c.b16 %v2668, %v2667
        %v2703 = vpack.c.b16 %v2670, %v2669
        %v2704 = vpack.c.b16 %v2672, %v2671
        %v2705 = vpack.c.b16 %v2674, %v2673
        %v2706 = vpack.c.b16 %v2676, %v2675
        %v2707 = vpack.c.b16 %v2678, %v2677
        %v2708 = vpack.c.b16 %v2680, %v2679
        %v2709 = vpack.c.b16 %v2682, %v2681
        %v2710 = vpack.c.b16 %v2684, %v2683
        %v2711 = vpack.c.b16 %v2686, %v2685
        %v2712 = vpack.c.b16 %v2688, %v2687
        %2737 = vmatprep.subr.bf16.mxu0 0
        %2738 = vmatpush1.bf16.msra.mxu0 %v2689
        %2739 = vmatprep.subr.bf16.mxu0 0
        %2740 = vmatpush1.bf16.msra.mxu0 %v2690
        %2741 = vmatprep.subr.bf16.mxu0 0
        %2742 = vmatpush1.bf16.msra.mxu0 %v2691
        %2743 = vmatprep.subr.bf16.mxu0 0
        %2744 = vmatpush1.bf16.msra.mxu0 %v2692
        %2745 = vmatprep.subr.bf16.mxu0 0
        %2746 = vmatpush1.bf16.msra.mxu0 %v2693
        %2747 = vmatprep.subr.bf16.mxu0 0
        %2748 = vmatpush1.bf16.msra.mxu0 %v2694
        %2749 = vmatprep.subr.bf16.mxu0 0
        %2750 = vmatpush1.bf16.msra.mxu0 %v2695
        %2751 = vmatprep.subr.bf16.mxu0 0
        %2752 = vmatpush1.bf16.msra.mxu0 %v2696
        %2753 = vmatprep.subr.bf16.mxu0 0
        %2754 = vmatpush1.bf16.msra.mxu0 %v2697
        %2755 = vmatprep.subr.bf16.mxu0 0
        %2756 = vmatpush1.bf16.msra.mxu0 %v2698
        %2757 = vmatprep.subr.bf16.mxu0 0
        %2758 = vmatpush1.bf16.msra.mxu0 %v2699
        %2759 = vmatprep.subr.bf16.mxu0 0
        %2760 = vmatpush1.bf16.msra.mxu0 %v2700
        %2761 = vmatprep.subr.bf16.mxu0 0
        %2762 = vmatpush1.bf16.msra.mxu0 %v2701
        %2763 = vmatprep.subr.bf16.mxu0 0
        %2764 = vmatpush1.bf16.msra.mxu0 %v2702
        %2765 = vmatprep.subr.bf16.mxu0 0
        %2766 = vmatpush1.bf16.msra.mxu0 %v2703
        %2767 = vmatprep.subr.bf16.mxu0 0
        %2768 = vmatpush1.bf16.msra.mxu0 %v2704
        %2769 = vmatprep.mubr.bf16.mxu0 %v2533
        %2770 = vmatmul.mubr.bf16.gmra.mrb[0].mxu0 %v2526
        %v2771 = vpop.f32.mrb[0].mxu0
        %v2772 = vadd.f32 %v2591, %v2771
        %v2773 = vpop.f32.mrb[0].mxu0
        %v2774 = vpop.f32.mrb[0].mxu0
        %v2775 = vpop.f32.mrb[0].mxu0
        %2776 = vdwg.mxu0
        %2777 = vmatprep.subr.bf16.mxu0 0
        %2778 = vmatpush1.bf16.msra.mxu0 %v2705
        %2779 = vmatprep.subr.bf16.mxu0 0
        %2780 = vmatpush1.bf16.msra.mxu0 %v2706
        %2781 = vmatprep.subr.bf16.mxu0 0
        %2782 = vmatpush1.bf16.msra.mxu0 %v2707
        %2783 = vmatprep.subr.bf16.mxu0 0
        %2784 = vmatpush1.bf16.msra.mxu0 %v2708
        %2785 = vmatprep.subr.bf16.mxu0 0
        %2786 = vmatpush1.bf16.msra.mxu0 %v2709
        %2787 = vmatprep.subr.bf16.mxu0 0
        %2788 = vmatpush1.bf16.msra.mxu0 %v2710
        %2789 = vmatprep.subr.bf16.mxu0 0
        %2790 = vmatpush1.bf16.msra.mxu0 %v2711
        %2791 = vmatprep.subr.bf16.mxu0 0
        %2792 = vmatpush1.bf16.msra.mxu0 %v2712
        %2793 = vmatprep.subr.bf16.mxu0 0
        %2794 = vmatpush1.bf16.msra.mxu0 0
        %2795 = vmatprep.subr.bf16.mxu0 0
        %2796 = vmatpush1.bf16.msra.mxu0 0
        %2797 = vmatprep.subr.bf16.mxu0 0
        %2798 = vmatpush1.bf16.msra.mxu0 0
        %2799 = vmatprep.subr.bf16.mxu0 0
        %2800 = vmatpush1.bf16.msra.mxu0 0
        %2801 = vmatprep.subr.bf16.mxu0 0
        %2802 = vmatpush1.bf16.msra.mxu0 0
        %2803 = vmatprep.subr.bf16.mxu0 0
        %2804 = vmatpush1.bf16.msra.mxu0 0
        %2805 = vmatprep.subr.bf16.mxu0 0
        %2806 = vmatpush1.bf16.msra.mxu0 0
        %2807 = vmatprep.subr.bf16.mxu0 0
        %2808 = vmatpush1.bf16.msra.mxu0 0
        %2809 = vmatprep.mubr.bf16.mxu0 0
        %2810 = vmatmul.mubr.bf16.gmra.mrb[0].mxu0 %v2536
        %v2811 = vpop.f32.mrb[0].mxu0
        %v2812 = vadd.f32 %v2772, %v2811
        %v2813 = vpop.f32.mrb[0].mxu0
        %v2814 = vpop.f32.mrb[0].mxu0
        %v2815 = vpop.f32.mrb[0].mxu0
        %2816 = vdwg.mxu0
        %v2817 = vadd.f32 %v2812, 0.44932896
        %vm2818 = vcmp.ge.f32.partialorder %v2817, 1.0
        %v2819 = vsel %vm2818, 1, 0
        %v2820 = vcvt.s32.f32 %v2819
        %v2821 = vrot.slane %v2820, 4
        %v2822 = vadd.f32 %v2820, %v2821
        %v2823 = vrot.slane %v2822, 2
        %v2824 = vadd.f32 %v2822, %v2823
        %v2825 = vrot.slane %v2824, 1
        %v2826 = vadd.f32 %v2824, %v2825
        %v2827 = vrcp.pop 8.0
        %v2828 = vmul.f32 %v2826, %v2827
        %v2829 = vld [vmem:[%s8] sm:$0xff]
        %v2830 = vld [vmem:[%s8 + $0x8] sm:$0xff]
        %v2831 = vld [vmem:[%s8 + $0x10] sm:$0xff]
        %v2832 = vld [vmem:[%s8 + $0x18] sm:$0xff]
        %v2833 = vld [vmem:[%s8 + $0x20] sm:$0xff]
        %v2834 = vld [vmem:[%s8 + $0x28] sm:$0xff]
        %v2835 = vld [vmem:[%s8 + $0x30] sm:$0xff]
        %v2836 = vld [vmem:[%s8 + $0x38] sm:$0xff]
        %v2837 = vld [vmem:[%s8 + $0x40] sm:$0xff]
        %v2838 = vld [vmem:[%s8 + $0x48] sm:$0xff]
        %v2839 = vld [vmem:[%s8 + $0x50] sm:$0xff]
        %v2840 = vld [vmem:[%s8 + $0x58] sm:$0xff]
        %v2841 = vld [vmem:[%s8 + $0x60] sm:$0xff]
        %v2842 = vld [vmem:[%s8 + $0x68] sm:$0xff]
        %v2843 = vld [vmem:[%s8 + $0x70] sm:$0xff]
        %v2844 = vld [vmem:[%s8 + $0x78] sm:$0xff]
        %v2845 = vld [vmem:[%s9] sm:$0x1]
        %2846 = vmatprep.subr.mxu0 0.0
        %2847 = vmatpush1.msra.mxu0 %v2829
        %2848 = vmatprep.subr.mxu0 0.0
        %2849 = vmatpush1.msra.mxu0 %v2830
        %2850 = vmatprep.subr.mxu0 0.0
        %2851 = vmatpush1.msra.mxu0 %v2831
        %2852 = vmatprep.subr.mxu0 0.0
        %2853 = vmatpush1.msra.mxu0 %v2832
        %2854 = vmatprep.subr.mxu0 0.0
        %2855 = vmatpush1.msra.mxu0 %v2833
        %2856 = vmatprep.subr.mxu0 0.0
        %2857 = vmatpush1.msra.mxu0 %v2834
        %2858 = vmatprep.subr.mxu0 0.0
        %2859 = vmatpush1.msra.mxu0 %v2835
        %2860 = vmatprep.subr.mxu0 0.0
        %2861 = vmatpush1.msra.mxu0 %v2836
        %2862 = vmatprep.subr.mxu0 0.0
        %2863 = vmatpush1.msra.mxu0 %v2837
        %2864 = vmatprep.subr.mxu0 0.0
        %2865 = vmatpush1.msra.mxu0 %v2838
        %2866 = vmatprep.subr.mxu0 0.0
        %2867 = vmatpush1.msra.mxu0 %v2839
        %2868 = vmatprep.subr.mxu0 0.0
        %2869 = vmatpush1.msra.mxu0 %v2840
        %2870 = vmatprep.subr.mxu0 0.0
        %2871 = vmatpush1.msra.mxu0 %v2841
        %2872 = vmatprep.subr.mxu0 0.0
        %2873 = vmatpush1.msra.mxu0 %v2842
        %2874 = vmatprep.subr.mxu0 0.0
        %2875 = vmatpush1.msra.mxu0 %v2843
        %2876 = vmatprep.subr.mxu0 0.0
        %2877 = vmatpush1.msra.mxu0 %v2844
        %2878 = vmatprep.subr.mxu0 0.0
        %2879 = vmatpush1.msra.mxu0 0.0
        %2880 = vmatprep.subr.mxu0 0.0
        %2881 = vmatpush1.msra.mxu0 0.0
        %2882 = vmatprep.subr.mxu0 0.0
        %2883 = vmatpush1.msra.mxu0 0.0
        %2884 = vmatprep.subr.mxu0 0.0
        %2885 = vmatpush1.msra.mxu0 0.0
        %2886 = vmatprep.subr.mxu0 0.0
        %2887 = vmatpush1.msra.mxu0 0.0
        %2888 = vmatprep.subr.mxu0 0.0
        %2889 = vmatpush1.msra.mxu0 0.0
        %2890 = vmatprep.subr.mxu0 0.0
        %2891 = vmatpush1.msra.mxu0 0.0
        %2892 = vmatprep.subr.mxu0 0.0
        %2893 = vmatpush1.msra.mxu0 0.0
        %2894 = vmatprep.subr.mxu0 0.0
        %2895 = vmatpush1.msra.mxu0 0.0
        %2896 = vmatprep.subr.mxu0 0.0
        %2897 = vmatpush1.msra.mxu0 0.0
        %2898 = vmatprep.subr.mxu0 0.0
        %2899 = vmatpush1.msra.mxu0 0.0
        %2900 = vmatprep.subr.mxu0 0.0
        %2901 = vmatpush1.msra.mxu0 0.0
        %2902 = vmatprep.subr.mxu0 0.0
        %2903 = vmatpush1.msra.mxu0 0.0
        %2904 = vmatprep.subr.mxu0 0.0
        %2905 = vmatpush1.msra.mxu0 0.0
        %2906 = vmatprep.subr.mxu0 0.0
        %2907 = vmatpush1.msra.mxu0 0.0
        %2908 = vmatprep.subr.mxu0 0.0
        %2909 = vmatpush1.msra.mxu0 0.0
        %2910 = vmatprep.mubr.f32.mxu0 0.0
        %2911 = vmatmul.mubr.f32.gmra.mrb[0].mxu0 %v2828
        %v2912 = vpop.f32.mrb[0].mxu0
        %v2913 = vadd.f32 %v2845, %v2912
        %v2914 = vpop.f32.mrb[0].mxu0
        %2915 = vdwg.mxu0
        %v2916 = vmax.f32 %v2913, 0.0
        %v2917 = vld [vmem:[%s10] sm:$0xff]
        %v2918 = vld [vmem:[%s10 + $0x8] sm:$0xff]
        %v2919 = vld [vmem:[%s10 + $0x10] sm:$0xff]
        %v2920 = vld [vmem:[%s10 + $0x18] sm:$0xff]
        %v2921 = vld [vmem:[%s10 + $0x20] sm:$0xff]
        %v2922 = vld [vmem:[%s10 + $0x28] sm:$0xff]
        %v2923 = vld [vmem:[%s10 + $0x30] sm:$0xff]
        %v2924 = vld [vmem:[%s10 + $0x38] sm:$0xff]
        %v2925 = vld [vmem:[%s10 + $0x40] sm:$0xff]
        %v2926 = vld [vmem:[%s10 + $0x48] sm:$0xff]
        %v2927 = vld [vmem:[%s10 + $0x50] sm:$0xff]
        %v2928 = vld [vmem:[%s10 + $0x58] sm:$0xff]
        %v2929 = vld [vmem:[%s10 + $0x60] sm:$0xff]
        %v2930 = vld [vmem:[%s10 + $0x68] sm:$0xff]
        %v2931 = vld [vmem:[%s10 + $0x70] sm:$0xff]
        %v2932 = vld [vmem:[%s10 + $0x78] sm:$0xff]
        %v2933 = vld [vmem:[%s11] sm:$0x1]
        %2934 = vmatprep.subr.mxu0 0.0
        %2935 = vmatpush1.msra.mxu0 %v2917
        %2936 = vmatprep.subr.mxu0 0.0
        %2937 = vmatpush1.msra.mxu0 %v2918
        %2938 = vmatprep.subr.mxu0 0.0
        %2939 = vmatpush1.msra.mxu0 %v2919
        %2940 = vmatprep.subr.mxu0 0.0
        %2941 = vmatpush1.msra.mxu0 %v2920
        %2942 = vmatprep.subr.mxu0 0.0
        %2943 = vmatpush1.msra.mxu0 %v2921
        %2944 = vmatprep.subr.mxu0 0.0
        %2945 = vmatpush1.msra.mxu0 %v2922
        %2946 = vmatprep.subr.mxu0 0.0
        %2947 = vmatpush1.msra.mxu0 %v2923
        %2948 = vmatprep.subr.mxu0 0.0
        %2949 = vmatpush1.msra.mxu0 %v2924
        %2950 = vmatprep.subr.mxu0 0.0
        %2951 = vmatpush1.msra.mxu0 %v2925
        %2952 = vmatprep.subr.mxu0 0.0
        %2953 = vmatpush1.msra.mxu0 %v2926
        %2954 = vmatprep.subr.mxu0 0.0
        %2955 = vmatpush1.msra.mxu0 %v2927
        %2956 = vmatprep.subr.mxu0 0.0
        %2957 = vmatpush1.msra.mxu0 %v2928
        %2958 = vmatprep.subr.mxu0 0.0
        %2959 = vmatpush1.msra.mxu0 %v2929
        %2960 = vmatprep.subr.mxu0 0.0
        %2961 = vmatpush1.msra.mxu0 %v2930
        %2962 = vmatprep.subr.mxu0 0.0
        %2963 = vmatpush1.msra.mxu0 %v2931
        %2964 = vmatprep.subr.mxu0 0.0
        %2965 = vmatpush1.msra.mxu0 %v2932
        %2966 = vmatprep.subr.mxu0 0.0
        %2967 = vmatpush1.msra.mxu0 0.0
        %2968 = vmatprep.subr.mxu0 0.0
        %2969 = vmatpush1.msra.mxu0 0.0
        %2970 = vmatprep.subr.mxu0 0.0
        %2971 = vmatpush1.msra.mxu0 0.0
        %2972 = vmatprep.subr.mxu0 0.0
        %2973 = vmatpush1.msra.mxu0 0.0
        %2974 = vmatprep.subr.mxu0 0.0
        %2975 = vmatpush1.msra.mxu0 0.0
        %2976 = vmatprep.subr.mxu0 0.0
        %2977 = vmatpush1.msra.mxu0 0.0
        %2978 = vmatprep.subr.mxu0 0.0
        %2979 = vmatpush1.msra.mxu0 0.0
        %2980 = vmatprep.subr.mxu0 0.0
        %2981 = vmatpush1.msra.mxu0 0.0
        %2982 = vmatprep.subr.mxu0 0.0
        %2983 = vmatpush1.msra.mxu0 0.0
        %2984 = vmatprep.subr.mxu0 0.0
        %2985 = vmatpush1.msra.mxu0 0.0
        %2986 = vmatprep.subr.mxu0 0.0
        %2987 = vmatpush1.msra.mxu0 0.0
        %2988 = vmatprep.subr.mxu0 0.0
        %2989 = vmatpush1.msra.mxu0 0.0
        %2990 = vmatprep.subr.mxu0 0.0
        %2991 = vmatpush1.msra.mxu0 0.0
        %2992 = vmatprep.subr.mxu0 0.0
        %2993 = vmatpush1.msra.mxu0 0.0
        %2994 = vmatprep.subr.mxu0 0.0
        %2995 = vmatpush1.msra.mxu0 0.0
        %2996 = vmatprep.subr.mxu0 0.0
        %2997 = vmatpush1.msra.mxu0 0.0
        %2998 = vmatprep.mubr.f32.mxu0 0.0
        %2999 = vmatmul.mubr.f32.gmra.mrb[0].mxu0 %v2916
        %v3000 = vpop.f32.mrb[0].mxu0
        %v3001 = vadd.f32 %v2933, %v3000
        %v3002 = vpop.f32.mrb[0].mxu0
        %3003 = vdwg.mxu0
        %v3004 = vxor.u32 %v3001, 2147483648
        %v3005 = vmul.f32 %v3004, 1.442695
        %v3006 = vpow.pop %v3005
        %v3007 = vadd.f32 %v3006, 1.0
        %v3008 = vrcp.pop %v3007
        %v3009 = vmul.f32 1.0, %v3008
        %v3010 = vld [vmem:[%s12] sm:$0xff]
        %v3012 = vrot.slane %v2820, 5
        %vm3014 = vcmask 1042432
        %v3015 = vsel %vm3014, 0.0, %v3012
        %v3016 = vsel %vm3014, %v3012, 0.0
        %v3017 = vlaneseq
        %v3018 = vshrl.u32 %v3017, 7
        %v3019 = vsub.s32 0, %v3018
        %v3020 = vrot.slane %v3010, %v3019
        %v3021 = vmul.f32 %v3015, %v3020
        %v3022 = vlaneseq
        %v3023 = vshrl.u32 %v3022, 7
        %v3024 = vsub.s32 1, %v3023
        %v3025 = vrot.slane %v3010, %v3024
        %v3026 = vmul.f32 %v3015, %v3025
        %v3027 = vmul.f32 %v3016, %v3025
        %vm3030 = vcmask 1046528
        %v3031 = vrot.slane %v3026, 1
        %v3032 = vrot.slane %v3027, 1
        %v3033 = vsel %vm3030, %v3031, %v3032
        %v3035 = vadd.f32 %v3021, %v3033
        %v3036 = vlaneseq
        %v3037 = vshrl.u32 %v3036, 7
        %v3038 = vsub.s32 2, %v3037
        %v3039 = vrot.slane %v3010, %v3038
        %v3040 = vmul.f32 %v3015, %v3039
        %v3041 = vmul.f32 %v3016, %v3039
        %vm3044 = vcmask 1045504
        %v3045 = vrot.slane %v3040, 2
        %v3046 = vrot.slane %v3041, 2
        %v3047 = vsel %vm3044, %v3045, %v3046
        %v3049 = vadd.f32 %v3035, %v3047
        %v3050 = vlaneseq
        %v3051 = vshrl.u32 %v3050, 7
        %v3052 = vsub.s32 3, %v3051
        %v3053 = vrot.slane %v3010, %v3052
        %v3054 = vmul.f32 %v3015, %v3053
        %v3055 = vmul.f32 %v3016, %v3053
        %vm3058 = vcmask 1044480
        %v3059 = vrot.slane %v3054, 3
        %v3060 = vrot.slane %v3055, 3
        %v3061 = vsel %vm3058, %v3059, %v3060
        %v3063 = vadd.f32 %v3049, %v3061
        %v3064 = vlaneseq
        %v3065 = vshrl.u32 %v3064, 7
        %v3066 = vsub.s32 4, %v3065
        %v3067 = vrot.slane %v3010, %v3066
        %v3068 = vmul.f32 %v3015, %v3067
        %v3069 = vmul.f32 %v3016, %v3067
        %vm3072 = vcmask 1043456
        %v3073 = vrot.slane %v3068, 4
        %v3074 = vrot.slane %v3069, 4
        %v3075 = vsel %vm3072, %v3073, %v3074
        %v3077 = vadd.f32 %v3063, %v3075
        %v3078 = vlaneseq
        %v3079 = vshrl.u32 %v3078, 7
        %v3080 = vsub.s32 5, %v3079
        %v3081 = vrot.slane %v3010, %v3080
        %v3082 = vmul.f32 %v3015, %v3081
        %v3083 = vmul.f32 %v3016, %v3081
        %v3086 = vrot.slane %v3082, 5
        %v3087 = vrot.slane %v3083, 5
        %v3088 = vsel %vm3014, %v3086, %v3087
        %v3090 = vadd.f32 %v3077, %v3088
        %v3091 = vlaneseq
        %v3092 = vshrl.u32 %v3091, 7
        %v3093 = vsub.s32 6, %v3092
        %v3094 = vrot.slane %v3010, %v3093
        %v3095 = vmul.f32 %v3015, %v3094
        %v3096 = vmul.f32 %v3016, %v3094
        %vm3099 = vcmask 1041408
        %v3100 = vrot.slane %v3095, 6
        %v3101 = vrot.slane %v3096, 6
        %v3102 = vsel %vm3099, %v3100, %v3101
        %v3104 = vadd.f32 %v3090, %v3102
        %3105 = vadd.xlane.f32.xlu0 %v3104
        %v3106 = vpop.xlane.xlu0 %3105
        %v3108 = vlaneseq
        %v3109 = vshrl.u32 %v3108, 7
        %v3110 = vsub.s32 0, %v3109
        %v3111 = vrot.slane %v560, %v3110
        %v3113 = vadd.f32 %v3106, %v3111
        %v3114 = vxor.u32 %v3113, 2147483648
        %v3115 = vmul.f32 %v3114, 1.442695
        %v3116 = vpow.pop %v3115
        %v3117 = vadd.f32 %v3116, 1.0
        %v3118 = vrcp.pop %v3117
        %v3119 = vmul.f32 1.0, %v3118
        %v3120 = vlaneseq
        %v3121 = vshrl.u32 %v3120, 7
        %v3122 = vsub.s32 0, %v3121
        %v3123 = vrot.slane %v3009, %v3122
        %v3124 = vmul.f32 %v2820, %v3123
        %3125 = vset.pattern.permute.xlu0 0
        %3126 = vperm.xlu0 %3125, %v3111
        %v3127 = vpop.permute.xlu0 %3126
        %v3129 = vmul.f32 %v3124, %v3127
        %3131 = vset.pattern.permute.xlu0 2
        %3132 = vperm.xlu0 %3131, %v3119
        %v3133 = vpop.permute.xlu0 %3132
        %v3135 = vmul.f32 %v2820, %v3133
        %3136 = vset.pattern.permute.xlu0 1
        %3137 = vperm.xlu0 %3136, %v3111
        %v3138 = vpop.permute.xlu0 %3137
        %v3140 = vmul.f32 %v3135, %v3138
        %v3141 = vadd.f32 %v3129, %v3140
        %v3142 = vadd.f32 %v3141, %v2204
        %v3143 = vrot.slane %v3142, 4
        %v3144 = vadd.f32 %v3142, %v3143
        %v3145 = vrot.slane %v3144, 2
        %v3146 = vadd.f32 %v3144, %v3145
        %v3147 = vrot.slane %v3146, 1
        %v3148 = vadd.f32 %v3146, %v3147
        %v3149 = vmul.f32 %v3148, %v2827
        %v3150 = vld [vmem:[#allocation7] sm:$0xff]
        %v3151 = vld [vmem:[#allocation7 + $0x8] sm:$0xff]
        %v3152 = vld [vmem:[#allocation7 + $0x10] sm:$0xff]
        %v3153 = vld [vmem:[#allocation7 + $0x18] sm:$0xff]
        %v3154 = vld [vmem:[#allocation7 + $0x20] sm:$0xff]
        %v3155 = vld [vmem:[#allocation7 + $0x28] sm:$0xff]
        %v3156 = vld [vmem:[#allocation7 + $0x30] sm:$0xff]
        %v3157 = vld [vmem:[#allocation7 + $0x38] sm:$0xff]
        %v3158 = vld [vmem:[#allocation7 + $0x40] sm:$0xff]
        %v3159 = vld [vmem:[#allocation7 + $0x48] sm:$0xff]
        %v3160 = vld [vmem:[#allocation7 + $0x50] sm:$0xff]
        %v3161 = vld [vmem:[#allocation7 + $0x58] sm:$0xff]
        %v3162 = vld [vmem:[#allocation7 + $0x60] sm:$0xff]
        %v3163 = vld [vmem:[#allocation7 + $0x68] sm:$0xff]
        %v3164 = vld [vmem:[#allocation7 + $0x70] sm:$0xff]
        %v3165 = vld [vmem:[#allocation7 + $0x78] sm:$0xff]
        %v3166 = vld [vmem:[%s14] sm:$0x1]
        %3167 = vmatprep.subr.mxu0 0.0
        %3168 = vmatpush1.msra.mxu0 %v3150
        %3169 = vmatprep.subr.mxu0 0.0
        %3170 = vmatpush1.msra.mxu0 %v3151
        %3171 = vmatprep.subr.mxu0 0.0
        %3172 = vmatpush1.msra.mxu0 %v3152
        %3173 = vmatprep.subr.mxu0 0.0
        %3174 = vmatpush1.msra.mxu0 %v3153
        %3175 = vmatprep.subr.mxu0 0.0
        %3176 = vmatpush1.msra.mxu0 %v3154
        %3177 = vmatprep.subr.mxu0 0.0
        %3178 = vmatpush1.msra.mxu0 %v3155
        %3179 = vmatprep.subr.mxu0 0.0
        %3180 = vmatpush1.msra.mxu0 %v3156
        %3181 = vmatprep.subr.mxu0 0.0
        %3182 = vmatpush1.msra.mxu0 %v3157
        %3183 = vmatprep.subr.mxu0 0.0
        %3184 = vmatpush1.msra.mxu0 %v3158
        %3185 = vmatprep.subr.mxu0 0.0
        %3186 = vmatpush1.msra.mxu0 %v3159
        %3187 = vmatprep.subr.mxu0 0.0
        %3188 = vmatpush1.msra.mxu0 %v3160
        %3189 = vmatprep.subr.mxu0 0.0
        %3190 = vmatpush1.msra.mxu0 %v3161
        %3191 = vmatprep.subr.mxu0 0.0
        %3192 = vmatpush1.msra.mxu0 %v3162
        %3193 = vmatprep.subr.mxu0 0.0
        %3194 = vmatpush1.msra.mxu0 %v3163
        %3195 = vmatprep.subr.mxu0 0.0
        %3196 = vmatpush1.msra.mxu0 %v3164
        %3197 = vmatprep.subr.mxu0 0.0
        %3198 = vmatpush1.msra.mxu0 %v3165
        %3199 = vmatprep.subr.mxu0 0.0
        %3200 = vmatpush1.msra.mxu0 0.0
        %3201 = vmatprep.subr.mxu0 0.0
        %3202 = vmatpush1.msra.mxu0 0.0
        %3203 = vmatprep.subr.mxu0 0.0
        %3204 = vmatpush1.msra.mxu0 0.0
        %3205 = vmatprep.subr.mxu0 0.0
        %3206 = vmatpush1.msra.mxu0 0.0
        %3207 = vmatprep.subr.mxu0 0.0
        %3208 = vmatpush1.msra.mxu0 0.0
        %3209 = vmatprep.subr.mxu0 0.0
        %3210 = vmatpush1.msra.mxu0 0.0
        %3211 = vmatprep.subr.mxu0 0.0
        %3212 = vmatpush1.msra.mxu0 0.0
        %3213 = vmatprep.subr.mxu0 0.0
        %3214 = vmatpush1.msra.mxu0 0.0
        %3215 = vmatprep.subr.mxu0 0.0
        %3216 = vmatpush1.msra.mxu0 0.0
        %3217 = vmatprep.subr.mxu0 0.0
        %3218 = vmatpush1.msra.mxu0 0.0
        %3219 = vmatprep.subr.mxu0 0.0
        %3220 = vmatpush1.msra.mxu0 0.0
        %3221 = vmatprep.subr.mxu0 0.0
        %3222 = vmatpush1.msra.mxu0 0.0
        %3223 = vmatprep.subr.mxu0 0.0
        %3224 = vmatpush1.msra.mxu0 0.0
        %3225 = vmatprep.subr.mxu0 0.0
        %3226 = vmatpush1.msra.mxu0 0.0
        %3227 = vmatprep.subr.mxu0 0.0
        %3228 = vmatpush1.msra.mxu0 0.0
        %3229 = vmatprep.subr.mxu0 0.0
        %3230 = vmatpush1.msra.mxu0 0.0
        %3231 = vmatprep.mubr.f32.mxu0 0.0
        %3232 = vmatmul.mubr.f32.gmra.mrb[0].mxu0 %v3149
        %v3233 = vpop.f32.mrb[0].mxu0
        %v3234 = vadd.f32 %v3166, %v3233
        %v3235 = vpop.f32.mrb[0].mxu0
        %3236 = vdwg.mxu0
        %3237 = vst [vmem:[%s553] sm:$0x1] %v3234
        %s3238 = sand.u32 %s381, 1
        %s3239 = scalar_lea.sflag [#allocation4], %s3238
        %s3240 = sand.u32 %s381, 1
        %s3241 = scalar_lea.vmem [#allocation8], %s3240
        // Predicated region
        $region97: #{tcsn_forward.1} parent=83 // pred_check
          %p3242 = pneg %p391
        $region98: #{tcsn_forward.1} parent=83 // pred_check_branch
          %3244 = sbr.rel (%p3242) target = $region100
        $region99: #{tcsn_forward.1} parent=83 // pred_region
          %s3246 = ssub.s32 16, 16
          %3247 = vsyncadd %s3239, %s3246
          %s3248 = smul.addr %s32, 16
          %s3249 = scalar_lea.hbm %s16, %s3248
          %s3251 = sshll.u32 %s3241, 4
          %s3252 = int_to_ptr.vmem [resolvable:$true] %s3251
          %3254 = dma.vmem_to_hbm [thread:$0]  %s3252, 16, %s3249, %s3239
        $region100: #{tcsn_forward.1} parent=83 // pred_fallthru
          _
      $region84: #{tcsn_forward.1} parent=5 // pred_fallthru
        _
      %p3255 = scmp.le.s32.totalorder 2, %s27
      // Predicated region
      $region101: #{tcsn_forward.1} parent=5 // pred_check
        %p3256 = pneg %p3255
      $region102: #{tcsn_forward.1} parent=5 // pred_check_branch
        %3258 = sbr.rel (%p3256) target = $region104
      $region103: #{tcsn_forward.1} parent=5 // pred_region
        %s3259 = ssub.s32 %s27, 2
        // Predicated region
        $region105: #{tcsn_forward.1} parent=103 // pred_check
          %p3260 = pneg %p397
        $region106: #{tcsn_forward.1} parent=103 // pred_check_branch
          %3262 = sbr.rel (%p3260) target = $region108
        $region107: #{tcsn_forward.1} parent=103 // pred_region
          %s3263 = sand.u32 %s382, 1
          %s3264 = scalar_lea.sflag [#allocation4], %s3263
          %s3265 = sand.u32 %s382, 1
          %s3266 = scalar_lea.vmem [#allocation8], %s3265
          %3267 = dma.done %s3264, 16
        $region108: #{tcsn_forward.1} parent=103 // pred_fallthru
          _
      $region104: #{tcsn_forward.1} parent=5 // pred_fallthru
        _
    $region6: #{tcsn_forward.1} parent=1 // loop_footer
      %s31 = sadd.s32 1, %s27
    $region7: #{tcsn_forward.1} parent=1 // loop_footer_branch
      %26 = sbr.rel target = $region3
    $region8: #{tcsn_forward.1} parent=1 // loop_exit
      _
    %3268 = vsyncpa [#allocation3], 1
    %s3269 = scalar_lea.sflag [#allocation3], 1
    %3270 = vsyncpa %s3269, 1
    %3271 = vsyncpa [#allocation6], 1
    %3272 = vsyncpa [#allocation4], 1
    %s3273 = scalar_lea.sflag [#allocation4], 1
    %3274 = vsyncpa %s3273, 1

</llo_original>
